<compile_context>
chip_gen: v7x
topology: tpu7x:2x2x1
jax: 0.10.0
libtpu: 0.0.40
codegen_flags: <defaults>
</compile_context>

<pallas_src>
import functools

import jax
import jax.numpy as jnp
import numpy as np
from jax.experimental import pallas as pl
from jax.experimental.pallas import tpu as pltpu

TEMPERATURE = 0.07
T_SCALE = 1.0
EPS = 0.5  # defined in SupConLoss2.__init__ but never used in forward()


def _safe_recip(x):
    """f32-accurate reciprocal (EUP approx seed + one Newton step).

    Rows with an empty subset (x == 0) map to 1.0 so their (all-zero)
    numerators stay zero, matching the PyTorch loop's no-op on empty index
    sets instead of producing NaN."""
    x = jnp.where(x > 0.0, x, 1.0)
    r = pl.reciprocal(x, approx=True)
    return r * (2.0 - x * r)


def _supcon2_kernel(fa_ref, fct_ref, lrow_ref, lcol_ref, out_ref, sim_sc, *,
                    b_real, tn):
    """One grid step: TM anchor rows vs all Bp contrast columns, processed in
    TN-wide column tiles so temporaries are (TM, TN)."""
    tm, _ = fa_ref.shape
    b_pad = fct_ref.shape[1]
    nc = b_pad // tn

    lrow = lrow_ref[...]                                              # (tm, 1) int32
    row_id = (pl.program_id(0) * tm
              + jax.lax.broadcasted_iota(jnp.int32, (tm, 1), 0))      # (tm, 1)
    neg_inf = jnp.float32(-jnp.inf)

    def col_masks(col0):
        # One lane iota per tile; diagonal from col_id == row_id; padded
        # columns excluded through the static valid-column bound b_real.
        col_id = col0 + jax.lax.broadcasted_iota(jnp.int32, (1, tn), 1)  # (1, tn)
        valid = col_id < b_real                                          # (1, tn)
        off = jnp.logical_and(valid, col_id != row_id)                   # (tm, tn)
        same = jnp.logical_and(lrow == lcol_ref[:, pl.ds(col0, tn)], off)
        return valid, off, same.astype(jnp.float32)

    # ---- pass 1: per-tile MXU matmul into the sim slab + online row stats ----
    def p1_body(j, carry):
        m_full, m_off, s_same, s_off, cnt = carry
        col0 = pl.multiple_of(j * tn, tn)
        sim = jnp.dot(fa_ref[...], fct_ref[:, pl.ds(col0, tn)],
                      preferred_element_type=jnp.float32)             # (tm, tn) f32
        sim_sc[:, pl.ds(col0, tn)] = sim
        valid, off, same_f = col_masks(col0)
        m_full = jnp.maximum(
            m_full,
            jnp.max(jnp.where(valid, sim, neg_inf), axis=1, keepdims=True))
        sim_off = jnp.where(off, sim, neg_inf)
        m_new = jnp.maximum(m_off, jnp.max(sim_off, axis=1, keepdims=True))
        scale = jnp.exp(m_off - m_new)
        e = jnp.exp(sim_off - m_new)            # exp(-inf) = 0 on masked entries
        s_same = s_same * scale + jnp.sum(e * same_f, axis=1, keepdims=True)
        s_off = s_off * scale + jnp.sum(e, axis=1, keepdims=True)
        cnt = cnt + jnp.sum(same_f, axis=1, keepdims=True)
        return m_full, m_new, s_same, s_off, cnt

    zeros = jnp.zeros((tm, 1), jnp.float32)
    ninfs = jnp.full((tm, 1), neg_inf, jnp.float32)
    m_full, m_off, s_same, s_off, pos_cnt = jax.lax.fori_loop(
        0, nc, p1_body, (ninfs, ninfs, zeros, zeros, zeros))

    inv_s_same = _safe_recip(s_same)
    inv_s_diff = _safe_recip(s_off - s_same)    # mask_same + mask_diff == 1 - eye
    inv_temp = jnp.float32(1.0 / TEMPERATURE)

    # ---- pass 2: re-read the sim slab, accumulate the three row reductions ----
    def p2_body(j, carry):
        z, s1, s2 = carry
        col0 = pl.multiple_of(j * tn, tn)
        sim = sim_sc[:, pl.ds(col0, tn)]
        _, off, same_f = col_masks(col0)
        e = jnp.where(off, jnp.exp(sim - m_off), 0.0)
        e_same = e * same_f
        # sim_mod: 1 - softmax_same on same-label entries, 1 + softmax_diff on
        # different-label entries, 0 on diag & padded columns (disjoint sets).
        sim_mod = (off.astype(jnp.float32)
                   + (e - e_same) * inv_s_diff - e_same * inv_s_same)
        if T_SCALE == 1.0:                       # trace-time skip of the /t multiplies
            logits_mask = sim_mod
        else:
            logits_mask = sim_mod * jnp.float32(1.0 / T_SCALE)
        w_same = logits_mask * same_f
        logits = (sim - m_full) * inv_temp       # detach() is a forward no-op
        z = z + jnp.sum(jnp.exp(logits) * logits_mask, axis=1, keepdims=True)
        s1 = s1 + jnp.sum(logits * w_same, axis=1, keepdims=True)
        s2 = s2 + jnp.sum(w_same, axis=1, keepdims=True)
        return z, s1, s2

    z, s1, s2 = jax.lax.fori_loop(0, nc, p2_body, (zeros, zeros, zeros))

    # -(sum(log_prob * w_same)) / pos_cnt  with  log_prob = logits - log(Z).
    # True divide by pos_cnt keeps PyTorch's x/0 semantics for unique labels.
    out_ref[...] = -(s1 - jnp.log(z) * s2) / pos_cnt


def _pick_tiles(b_pad, dp, budget_bytes):
    """Largest (row tile, column tile) fitting the VMEM budget.  Prefers a grid
    of >= 2 row blocks (2-TensorCore sharding on v7x), then larger TM."""
    def need(tm, tn):
        return (b_pad * dp * 2        # resident transposed contrast, single-buffered
                + 2 * tm * dp * 2     # double-buffered bf16 anchor blocks
                + tm * b_pad * 4      # f32 similarity slab (scratch)
                + 10 * tm * tn * 4    # live f32 (tm, tn) temporaries in the column loop
                + (1 << 20))          # labels, row stats, output, misc slack
    tms = [t for t in (512, 256, 128) if b_pad % t == 0]
    tns = [t for t in (512, 256, 128) if b_pad % t == 0]
    order = ([t for t in tms if b_pad // t >= 2]
             + [t for t in tms if b_pad // t < 2])
    for tm in order:
        for tn in tns:
            if need(tm, tn) <= budget_bytes:
                return tm, tn
    return 128, 128   # minimum legal tiling (only hit for enormous B*D)


def supcon_loss2(features, labels):
    """features: (B, D) float; labels: (B,) int.  Returns the scalar loss."""
    f = jnp.asarray(features, dtype=jnp.float32)
    b, d = f.shape
    lab = jnp.asarray(labels, dtype=jnp.int32).reshape(-1)

    # Pad the feature (lane) axis to a multiple of 128 (zero columns don't
    # change dot products) and the batch axis to a multiple of 128 so a TM in
    # {128, 256, 512} always exists.  Padded columns are masked out in-kernel
    # via the static b_real bound; padded rows are dropped before the mean.
    dp = ((d + 127) // 128) * 128
    bp = ((b + 127) // 128) * 128
    f_pad = jnp.pad(f, ((0, bp - b), (0, dp - d)))
    lab_pad = jnp.pad(lab, (0, bp - b), constant_values=-1)

    f_bf16 = f_pad.astype(jnp.bfloat16)   # (bp, dp) anchors (row-tiled)
    f_t = f_bf16.T                        # (dp, bp) contrast (resident)
    lab_row = lab_pad.reshape(bp, 1)
    lab_col = lab_pad.reshape(1, bp)

    # Per-generation VMEM budget: physical capacity minus a small margin,
    # clamped for the 128 MiB parts (v5e/v6e); v7x (64 MiB) -> ~56 MiB.
    try:
        vmem_cap = int(pltpu.get_tpu_info().vmem_capacity_bytes)
    except Exception:
        vmem_cap = 64 * 1024 * 1024
    vmem_limit = min(vmem_cap - (8 << 20), 110 << 20)
    tm, tn = _pick_tiles(bp, dp, vmem_limit - (4 << 20))
    grid = (bp // tm,)

    kernel = functools.partial(_supcon2_kernel, b_real=b, tn=tn)

    def _call(resident_pipeline_mode):
        kw = ({} if resident_pipeline_mode is None
              else {"pipeline_mode": resident_pipeline_mode})
        return pl.pallas_call(
            kernel,
            out_shape=jax.ShapeDtypeStruct((bp, 1), jnp.float32),
            grid=grid,
            in_specs=[
                pl.BlockSpec((tm, dp), lambda i: (i, 0)),   # anchor rows (tiled)
                pl.BlockSpec((dp, bp), lambda i: (0, 0), **kw),  # contrast (resident)
                pl.BlockSpec((tm, 1), lambda i: (i, 0)),    # row labels (tiled)
                pl.BlockSpec((1, bp), lambda i: (0, 0), **kw),   # col labels (resident)
            ],
            out_specs=pl.BlockSpec((tm, 1), lambda i: (i, 0)),
            scratch_shapes=[pltpu.VMEM((tm, bp), jnp.float32)],  # f32 sim slab
            compiler_params=pltpu.CompilerParams(
                dimension_semantics=("parallel",),   # row blocks shard across v7x TCs
                vmem_limit_bytes=vmem_limit,
            ),
        )(f_bf16, f_t, lab_row, lab_col)

    try:
        # Single-buffer the never-changing resident blocks (saves B*Dp*2 bytes).
        per_row = _call(pl.Buffered(1))
    except Exception:
        # Safety net for jax versions without single-buffer pipeline support.
        per_row = _call(None)

    # Final mean over the B real rows (padded rows excluded).
    return jnp.mean(per_row[:b, 0])


def _reference(features, labels, temperature=TEMPERATURE, t=T_SCALE):
    """Pure numpy mirror of the PyTorch forward (including the per-row loop)."""
    f = np.asarray(features, dtype=np.float64)
    lab = np.asarray(labels)
    B = f.shape[0]
    mask = (lab[:, None] == lab[None, :]).astype(np.float64)
    sim = f @ f.T
    adc = sim / temperature
    logits = adc - adc.max(axis=1, keepdims=True)
    mask_same = mask - np.eye(B)
    mask_diff = 1.0 - mask
    sim = sim.copy()
    for i in range(B):
        row = sim[i]
        idx1 = mask_same[i] != 0
        if idx1.any():
            v = row[idx1]
            e = np.exp(v - v.max())
            row[idx1] = 1.0 - e / e.sum()
        idx2 = mask_diff[i] != 0
        if idx2.any():
            v = row[idx2]
            e = np.exp(v - v.max())
            row[idx2] = 1.0 + e / e.sum()
        sim[i] = row
    w_same = sim * mask_same / t
    w_diff = sim * mask_diff / t
    logits_mask = w_same + w_diff
    exp_logits = np.exp(logits) * logits_mask
    log_prob = logits - np.log(exp_logits.sum(1, keepdims=True))
    mean_log_prob_pos = -(log_prob * w_same).sum(1) / mask_same.sum(1)
    return float(mean_log_prob_pos.mean())


if __name__ == "__main__":
    key = jax.random.PRNGKey(0)
    B, D = 8, 32
    features = jax.random.normal(key, (B, D), dtype=jnp.float32)
    # L2-normalize (typical SupCon input prep; keeps numerics tame)
    features = features / jnp.linalg.norm(features, axis=1, keepdims=True)
    # every label appears at least twice so mask_same.sum(1) > 0 for every row
    labels = jnp.array([0, 0, 1, 1, 0, 1, 2, 2], dtype=jnp.int32)

    loss = supcon_loss2(features, labels)
    loss = jax.block_until_ready(loss)

    # Validate against the numpy mirror on the same bf16-rounded features the
    # kernel's MXU sees (f32 accumulation makes the rest ~exact).
    f_seen = np.array(features.astype(jnp.bfloat16).astype(jnp.float32),
                      dtype=np.float64)
    ref = _reference(f_seen, np.array(labels))
    assert bool(jnp.isfinite(loss)), "loss is not finite"
    assert abs(float(loss) - ref) < 1e-3, (float(loss), ref)
    print("KERNEL_OK")
</pallas_src>

<mosaic_0001>
module attributes {stable_mosaic.version = 11 : i64} {
  func.func @_supcon2_kernel(%arg0: i32, %arg1: memref<128x128xbf16, #tpu.memory_space<vmem>>, %arg2: memref<128x128xbf16, #tpu.memory_space<vmem>>, %arg3: memref<128x1xi32, #tpu.memory_space<vmem>>, %arg4: memref<1x128xi32, #tpu.memory_space<vmem>>, %arg5: memref<128x1xf32, #tpu.memory_space<vmem>>, %arg6: memref<128x128xf32, #tpu.memory_space<vmem>>) attributes {dimension_semantics = [#tpu.dimension_semantics<parallel>], iteration_bounds = array<i64: 1>, scalar_prefetch = 0 : i64, scratch_operands = 1 : i64, tpu.core_type = #tpu.core_type<tc>, window_params = [{transform_indices = @transform_0, window_bounds = array<i64: 128, 128>}, {pipeline_mode = #tpu.pipeline_mode<synchronous>, transform_indices = @transform_1, window_bounds = array<i64: 128, 128>}, {transform_indices = @transform_2, window_bounds = array<i64: 128, 1>}, {pipeline_mode = #tpu.pipeline_mode<synchronous>, transform_indices = @transform_3, window_bounds = array<i64: 1, 128>}, {transform_indices = @transform_4, window_bounds = array<i64: 128, 1>}]} {
    %c0 = arith.constant 0 : index
    %c0_0 = arith.constant 0 : index
    %0 = vector.load %arg3[%c0, %c0_0] : memref<128x1xi32, #tpu.memory_space<vmem>>, vector<128x1xi32>
    %c128_i32 = arith.constant 128 : i32
    %1 = arith.muli %arg0, %c128_i32 : i32
    %2 = tpu.iota {dimensions = array<i32: 0>} : vector<128x1xi32>
    %3 = vector.broadcast %1 : i32 to vector<128x1xi32>
    %4 = arith.addi %3, %2 : vector<128x1xi32>
    %cst = arith.constant 0.000000e+00 : f32
    %5 = vector.broadcast %cst : f32 to vector<128x1xf32>
    %cst_1 = arith.constant 0xFF800000 : f32
    %6 = vector.broadcast %cst_1 : f32 to vector<128x1xf32>
    %cst_2 = arith.constant 0xFF800000 : f32
    %c0_i32 = arith.constant 0 : i32
    %c128_i32_3 = arith.constant 128 : i32
    %7 = arith.muli %c0_i32, %c128_i32_3 : i32
    %8 = tpu.assume_multiple %7, 128 : i32
    %c0_4 = arith.constant 0 : index
    %c0_5 = arith.constant 0 : index
    %9 = vector.load %arg1[%c0_4, %c0_5] : memref<128x128xbf16, #tpu.memory_space<vmem>>, vector<128x128xbf16>
    %c0_6 = arith.constant 0 : index
    %10 = arith.index_cast %8 : i32 to index
    %11 = vector.load %arg2[%c0_6, %10] : memref<128x128xbf16, #tpu.memory_space<vmem>>, vector<128x128xbf16>
    %cst_7 = arith.constant dense<0.000000e+00> : vector<128x128xf32>
    %12 = tpu.matmul %9, %11, %cst_7 {dimension_numbers = #tpu.dot_dimension_numbers<[1], [0], [0], [1], [0, 0, 1, 1], [], []>} : vector<128x128xbf16>, vector<128x128xbf16>, vector<128x128xf32> -> vector<128x128xf32>
    %c0_8 = arith.constant 0 : index
    %13 = arith.index_cast %8 : i32 to index
    %14 = vector.load %arg6[%c0_8, %13] : memref<128x128xf32, #tpu.memory_space<vmem>>, vector<128x128xf32>
    tpu.vector_store %arg6[%c0_8, %13], %12 {strides = array<i32>} : memref<128x128xf32, #tpu.memory_space<vmem>>, vector<128x128xf32>,
    %15 = tpu.iota {dimensions = array<i32: 1>} : vector<1x128xi32>
    %16 = vector.broadcast %8 : i32 to vector<1x128xi32>
    %17 = arith.addi %16, %15 : vector<1x128xi32>
    %c8_i32 = arith.constant 8 : i32
    %18 = vector.broadcast %c8_i32 : i32 to vector<1x128xi32>
    %19 = arith.cmpi slt, %17, %18 : vector<1x128xi32>
    %20 = vector.broadcast %17 : vector<1x128xi32> to vector<128x128xi32>
    %21 = vector.broadcast %4 : vector<128x1xi32> to vector<128x128xi32>
    %22 = arith.cmpi ne, %20, %21 : vector<128x128xi32>
    %23 = vector.broadcast %19 : vector<1x128xi1> to vector<128x128xi1>
    %24 = arith.andi %23, %22 : vector<128x128xi1>
    %c0_9 = arith.constant 0 : index
    %25 = arith.index_cast %8 : i32 to index
    %26 = vector.load %arg4[%c0_9, %25] : memref<1x128xi32, #tpu.memory_space<vmem>>, vector<1x128xi32>
    %27 = vector.broadcast %0 : vector<128x1xi32> to vector<128x128xi32>
    %28 = vector.broadcast %26 : vector<1x128xi32> to vector<128x128xi32>
    %29 = arith.cmpi eq, %27, %28 : vector<128x128xi32>
    %30 = arith.andi %29, %24 : vector<128x128xi1>
    %31 = arith.extui %30 : vector<128x128xi1> to vector<128x128xi32>
    %32 = arith.sitofp %31 : vector<128x128xi32> to vector<128x128xf32>
    %33 = vector.shape_cast %19 : vector<1x128xi1> to vector<1x128xi1>
    %34 = vector.broadcast %33 : vector<1x128xi1> to vector<128x128xi1>
    %35 = vector.broadcast %cst_2 : f32 to vector<128x128xf32>
    %36 = arith.select %34, %12, %35 : vector<128x128xi1>, vector<128x128xf32>
    %cst_10 = arith.constant dense<0xFF800000> : vector<128xf32>
    %37 = vector.multi_reduction <maximumf>, %36, %cst_10 [1] : vector<128x128xf32> to vector<128xf32>
    %38 = vector.shape_cast %37 : vector<128xf32> to vector<128x1xf32>
    %39 = arith.maximumf %6, %38 : vector<128x1xf32>
    %40 = vector.broadcast %cst_2 : f32 to vector<128x128xf32>
    %41 = arith.select %24, %12, %40 : vector<128x128xi1>, vector<128x128xf32>
    %cst_11 = arith.constant dense<0xFF800000> : vector<128xf32>
    %42 = vector.multi_reduction <maximumf>, %41, %cst_11 [1] : vector<128x128xf32> to vector<128xf32>
    %43 = vector.shape_cast %42 : vector<128xf32> to vector<128x1xf32>
    %44 = arith.maximumf %6, %43 : vector<128x1xf32>
    %45 = arith.subf %6, %44 : vector<128x1xf32>
    %46 = math.exp %45 : vector<128x1xf32>
    %47 = vector.broadcast %44 : vector<128x1xf32> to vector<128x128xf32>
    %48 = arith.subf %41, %47 : vector<128x128xf32>
    %49 = math.exp %48 : vector<128x128xf32>
    %50 = arith.mulf %5, %46 : vector<128x1xf32>
    %51 = arith.mulf %49, %32 : vector<128x128xf32>
    %cst_12 = arith.constant dense<0.000000e+00> : vector<128xf32>
    %52 = vector.multi_reduction <add>, %51, %cst_12 [1] : vector<128x128xf32> to vector<128xf32>
    %53 = vector.shape_cast %52 : vector<128xf32> to vector<128x1xf32>
    %54 = arith.addf %50, %53 : vector<128x1xf32>
    %55 = arith.mulf %5, %46 : vector<128x1xf32>
    %cst_13 = arith.constant dense<0.000000e+00> : vector<128xf32>
    %56 = vector.multi_reduction <add>, %49, %cst_13 [1] : vector<128x128xf32> to vector<128xf32>
    %57 = vector.shape_cast %56 : vector<128xf32> to vector<128x1xf32>
    %58 = arith.addf %55, %57 : vector<128x1xf32>
    %cst_14 = arith.constant dense<0.000000e+00> : vector<128xf32>
    %59 = vector.multi_reduction <add>, %32, %cst_14 [1] : vector<128x128xf32> to vector<128xf32>
    %60 = vector.shape_cast %59 : vector<128xf32> to vector<128x1xf32>
    %61 = arith.addf %5, %60 : vector<128x1xf32>
    %c1_i32 = arith.constant 1 : i32
    %cst_15 = arith.constant 0.000000e+00 : f32
    %62 = vector.broadcast %cst_15 : f32 to vector<128x1xf32>
    %63 = arith.cmpf ogt, %54, %62 : vector<128x1xf32>
    %cst_16 = arith.constant 1.000000e+00 : f32
    %64 = vector.broadcast %cst_16 : f32 to vector<128x1xf32>
    %65 = arith.select %63, %54, %64 : vector<128x1xi1>, vector<128x1xf32>
    %66 = tpu.reciprocal %65 {approx = true} : vector<128x1xf32> -> vector<128x1xf32>
    %67 = arith.mulf %65, %66 : vector<128x1xf32>
    %cst_17 = arith.constant 2.000000e+00 : f32
    %68 = vector.broadcast %cst_17 : f32 to vector<128x1xf32>
    %69 = arith.subf %68, %67 : vector<128x1xf32>
    %70 = arith.mulf %66, %69 : vector<128x1xf32>
    %71 = arith.subf %58, %54 : vector<128x1xf32>
    %cst_18 = arith.constant 0.000000e+00 : f32
    %72 = vector.broadcast %cst_18 : f32 to vector<128x1xf32>
    %73 = arith.cmpf ogt, %71, %72 : vector<128x1xf32>
    %cst_19 = arith.constant 1.000000e+00 : f32
    %74 = vector.broadcast %cst_19 : f32 to vector<128x1xf32>
    %75 = arith.select %73, %71, %74 : vector<128x1xi1>, vector<128x1xf32>
    %76 = tpu.reciprocal %75 {approx = true} : vector<128x1xf32> -> vector<128x1xf32>
    %77 = arith.mulf %75, %76 : vector<128x1xf32>
    %cst_20 = arith.constant 2.000000e+00 : f32
    %78 = vector.broadcast %cst_20 : f32 to vector<128x1xf32>
    %79 = arith.subf %78, %77 : vector<128x1xf32>
    %80 = arith.mulf %76, %79 : vector<128x1xf32>
    %cst_21 = arith.constant 14.2857141 : f32
    %c0_i32_22 = arith.constant 0 : i32
    %c128_i32_23 = arith.constant 128 : i32
    %81 = arith.muli %c0_i32_22, %c128_i32_23 : i32
    %82 = tpu.assume_multiple %81, 128 : i32
    %c0_24 = arith.constant 0 : index
    %83 = arith.index_cast %82 : i32 to index
    %84 = vector.load %arg6[%c0_24, %83] : memref<128x128xf32, #tpu.memory_space<vmem>>, vector<128x128xf32>
    %85 = tpu.iota {dimensions = array<i32: 1>} : vector<1x128xi32>
    %86 = vector.broadcast %82 : i32 to vector<1x128xi32>
    %87 = arith.addi %86, %85 : vector<1x128xi32>
    %c8_i32_25 = arith.constant 8 : i32
    %88 = vector.broadcast %c8_i32_25 : i32 to vector<1x128xi32>
    %89 = arith.cmpi slt, %87, %88 : vector<1x128xi32>
    %90 = vector.broadcast %87 : vector<1x128xi32> to vector<128x128xi32>
    %91 = vector.broadcast %4 : vector<128x1xi32> to vector<128x128xi32>
    %92 = arith.cmpi ne, %90, %91 : vector<128x128xi32>
    %93 = vector.broadcast %89 : vector<1x128xi1> to vector<128x128xi1>
    %94 = arith.andi %93, %92 : vector<128x128xi1>
    %c0_26 = arith.constant 0 : index
    %95 = arith.index_cast %82 : i32 to index
    %96 = vector.load %arg4[%c0_26, %95] : memref<1x128xi32, #tpu.memory_space<vmem>>, vector<1x128xi32>
    %97 = vector.broadcast %0 : vector<128x1xi32> to vector<128x128xi32>
    %98 = vector.broadcast %96 : vector<1x128xi32> to vector<128x128xi32>
    %99 = arith.cmpi eq, %97, %98 : vector<128x128xi32>
    %100 = arith.andi %99, %94 : vector<128x128xi1>
    %101 = arith.extui %100 : vector<128x128xi1> to vector<128x128xi32>
    %102 = arith.sitofp %101 : vector<128x128xi32> to vector<128x128xf32>
    %103 = vector.broadcast %44 : vector<128x1xf32> to vector<128x128xf32>
    %104 = arith.subf %84, %103 : vector<128x128xf32>
    %105 = math.exp %104 : vector<128x128xf32>
    %cst_27 = arith.constant 0.000000e+00 : f32
    %106 = vector.broadcast %cst_27 : f32 to vector<128x128xf32>
    %107 = arith.select %94, %105, %106 : vector<128x128xi1>, vector<128x128xf32>
    %108 = arith.mulf %107, %102 : vector<128x128xf32>
    %109 = arith.extui %94 : vector<128x128xi1> to vector<128x128xi32>
    %110 = arith.sitofp %109 : vector<128x128xi32> to vector<128x128xf32>
    %111 = arith.subf %107, %108 : vector<128x128xf32>
    %112 = vector.broadcast %80 : vector<128x1xf32> to vector<128x128xf32>
    %113 = arith.mulf %111, %112 : vector<128x128xf32>
    %114 = arith.addf %110, %113 : vector<128x128xf32>
    %115 = vector.broadcast %70 : vector<128x1xf32> to vector<128x128xf32>
    %116 = arith.mulf %108, %115 : vector<128x128xf32>
    %117 = arith.subf %114, %116 : vector<128x128xf32>
    %118 = arith.mulf %117, %102 : vector<128x128xf32>
    %119 = vector.broadcast %39 : vector<128x1xf32> to vector<128x128xf32>
    %120 = arith.subf %84, %119 : vector<128x128xf32>
    %121 = vector.broadcast %cst_21 : f32 to vector<128x128xf32>
    %122 = arith.mulf %120, %121 : vector<128x128xf32>
    %123 = math.exp %122 : vector<128x128xf32>
    %124 = arith.mulf %123, %117 : vector<128x128xf32>
    %cst_28 = arith.constant dense<0.000000e+00> : vector<128xf32>
    %125 = vector.multi_reduction <add>, %124, %cst_28 [1] : vector<128x128xf32> to vector<128xf32>
    %126 = vector.shape_cast %125 : vector<128xf32> to vector<128x1xf32>
    %127 = arith.addf %5, %126 : vector<128x1xf32>
    %128 = arith.mulf %122, %118 : vector<128x128xf32>
    %cst_29 = arith.constant dense<0.000000e+00> : vector<128xf32>
    %129 = vector.multi_reduction <add>, %128, %cst_29 [1] : vector<128x128xf32> to vector<128xf32>
    %130 = vector.shape_cast %129 : vector<128xf32> to vector<128x1xf32>
    %131 = arith.addf %5, %130 : vector<128x1xf32>
    %cst_30 = arith.constant dense<0.000000e+00> : vector<128xf32>
    %132 = vector.multi_reduction <add>, %118, %cst_30 [1] : vector<128x128xf32> to vector<128xf32>
    %133 = vector.shape_cast %132 : vector<128xf32> to vector<128x1xf32>
    %134 = arith.addf %5, %133 : vector<128x1xf32>
    %c1_i32_31 = arith.constant 1 : i32
    %135 = math.log %127 : vector<128x1xf32>
    %136 = arith.mulf %135, %134 : vector<128x1xf32>
    %137 = arith.subf %131, %136 : vector<128x1xf32>
    %cst_32 = arith.constant 0.000000e+00 : f32
    %138 = vector.broadcast %cst_32 : f32 to vector<128x1xf32>
    %139 = arith.subf %138, %137 : vector<128x1xf32>
    %140 = arith.divf %139, %61 : vector<128x1xf32>
    %c0_33 = arith.constant 0 : index
    %c0_34 = arith.constant 0 : index
    %141 = vector.load %arg5[%c0_33, %c0_34] : memref<128x1xf32, #tpu.memory_space<vmem>>, vector<128x1xf32>
    tpu.vector_store %arg5[%c0_33, %c0_34], %140 {strides = array<i32>} : memref<128x1xf32, #tpu.memory_space<vmem>>, vector<128x1xf32>,
    return
  }
  func.func @transform_0(%arg0: i32) -> (i32, i32) {
    %c0_i32 = arith.constant 0 : i32
    %c0_i32_0 = arith.constant 0 : i32
    return %arg0, %c0_i32 : i32, i32
  }
  func.func @transform_1(%arg0: i32) -> (i32, i32) {
    %c0_i32 = arith.constant 0 : i32
    %c0_i32_0 = arith.constant 0 : i32
    %c0_i32_1 = arith.constant 0 : i32
    return %c0_i32, %c0_i32_0 : i32, i32
  }
  func.func @transform_2(%arg0: i32) -> (i32, i32) {
    %c0_i32 = arith.constant 0 : i32
    %c0_i32_0 = arith.constant 0 : i32
    return %arg0, %c0_i32 : i32, i32
  }
  func.func @transform_3(%arg0: i32) -> (i32, i32) {
    %c0_i32 = arith.constant 0 : i32
    %c0_i32_0 = arith.constant 0 : i32
    %c0_i32_1 = arith.constant 0 : i32
    return %c0_i32, %c0_i32_0 : i32, i32
  }
  func.func @transform_4(%arg0: i32) -> (i32, i32) {
    %c0_i32 = arith.constant 0 : i32
    %c0_i32_0 = arith.constant 0 : i32
    return %arg0, %c0_i32 : i32, i32
  }
}

module attributes {stable_mosaic.version = 11 : i64} {
  func.func @_supcon2_kernel(%arg0: i32, %arg1: memref<128x128xbf16, #tpu.memory_space<vmem>>, %arg2: memref<128x128xbf16, #tpu.memory_space<vmem>>, %arg3: memref<128x1xi32, #tpu.memory_space<vmem>>, %arg4: memref<1x128xi32, #tpu.memory_space<vmem>>, %arg5: memref<128x1xf32, #tpu.memory_space<vmem>>, %arg6: memref<128x128xf32, #tpu.memory_space<vmem>>) attributes {dimension_semantics = [#tpu.dimension_semantics<parallel>], iteration_bounds = array<i64: 1>, scalar_prefetch = 0 : i64, scratch_operands = 1 : i64, tpu.core_type = #tpu.core_type<tc>, window_params = [{transform_indices = @transform_0, window_bounds = array<i64: 128, 128>}, {pipeline_mode = #tpu.pipeline_mode<synchronous>, transform_indices = @transform_1, window_bounds = array<i64: 128, 128>}, {transform_indices = @transform_2, window_bounds = array<i64: 128, 1>}, {pipeline_mode = #tpu.pipeline_mode<synchronous>, transform_indices = @transform_3, window_bounds = array<i64: 1, 128>}, {transform_indices = @transform_4, window_bounds = array<i64: 128, 1>}]} {
    %c0 = arith.constant 0 : index
    %c0_0 = arith.constant 0 : index
    %0 = vector.load %arg3[%c0, %c0_0] : memref<128x1xi32, #tpu.memory_space<vmem>>, vector<128x1xi32>
    %c128_i32 = arith.constant 128 : i32
    %1 = arith.muli %arg0, %c128_i32 : i32
    %2 = tpu.iota {dimensions = array<i32: 0>} : vector<128x1xi32>
    %3 = vector.broadcast %1 : i32 to vector<128x1xi32>
    %4 = arith.addi %3, %2 : vector<128x1xi32>
    %cst = arith.constant 0.000000e+00 : f32
    %5 = vector.broadcast %cst : f32 to vector<128x1xf32>
    %cst_1 = arith.constant 0xFF800000 : f32
    %6 = vector.broadcast %cst_1 : f32 to vector<128x1xf32>
    %cst_2 = arith.constant 0xFF800000 : f32
    %c0_i32 = arith.constant 0 : i32
    %c128_i32_3 = arith.constant 128 : i32
    %7 = arith.muli %c0_i32, %c128_i32_3 : i32
    %8 = tpu.assume_multiple %7, 128 : i32
    %c0_4 = arith.constant 0 : index
    %c0_5 = arith.constant 0 : index
    %9 = vector.load %arg1[%c0_4, %c0_5] : memref<128x128xbf16, #tpu.memory_space<vmem>>, vector<128x128xbf16>
    %c0_6 = arith.constant 0 : index
    %10 = arith.index_cast %8 : i32 to index
    %11 = vector.load %arg2[%c0_6, %10] : memref<128x128xbf16, #tpu.memory_space<vmem>>, vector<128x128xbf16>
    %cst_7 = arith.constant dense<0.000000e+00> : vector<128x128xf32>
    %12 = tpu.matmul %9, %11, %cst_7 {dimension_numbers = #tpu.dot_dimension_numbers<[1], [0], [0], [1], [0, 0, 1, 1], [], []>} : vector<128x128xbf16>, vector<128x128xbf16>, vector<128x128xf32> -> vector<128x128xf32>
    %c0_8 = arith.constant 0 : index
    %13 = arith.index_cast %8 : i32 to index
    %14 = vector.load %arg6[%c0_8, %13] : memref<128x128xf32, #tpu.memory_space<vmem>>, vector<128x128xf32>
    tpu.vector_store %arg6[%c0_8, %13], %12 {strides = array<i32>} : memref<128x128xf32, #tpu.memory_space<vmem>>, vector<128x128xf32>,
    %15 = tpu.iota {dimensions = array<i32: 1>} : vector<1x128xi32>
    %16 = vector.broadcast %8 : i32 to vector<1x128xi32>
    %17 = arith.addi %16, %15 : vector<1x128xi32>
    %c8_i32 = arith.constant 8 : i32
    %18 = vector.broadcast %c8_i32 : i32 to vector<1x128xi32>
    %19 = arith.cmpi slt, %17, %18 : vector<1x128xi32>
    %20 = vector.broadcast %17 : vector<1x128xi32> to vector<128x128xi32>
    %21 = vector.broadcast %4 : vector<128x1xi32> to vector<128x128xi32>
    %22 = arith.cmpi ne, %20, %21 : vector<128x128xi32>
    %23 = vector.broadcast %19 : vector<1x128xi1> to vector<128x128xi1>
    %24 = arith.andi %23, %22 : vector<128x128xi1>
    %c0_9 = arith.constant 0 : index
    %25 = arith.index_cast %8 : i32 to index
    %26 = vector.load %arg4[%c0_9, %25] : memref<1x128xi32, #tpu.memory_space<vmem>>, vector<1x128xi32>
    %27 = vector.broadcast %0 : vector<128x1xi32> to vector<128x128xi32>
    %28 = vector.broadcast %26 : vector<1x128xi32> to vector<128x128xi32>
    %29 = arith.cmpi eq, %27, %28 : vector<128x128xi32>
    %30 = arith.andi %29, %24 : vector<128x128xi1>
    %31 = arith.extui %30 : vector<128x128xi1> to vector<128x128xi32>
    %32 = arith.sitofp %31 : vector<128x128xi32> to vector<128x128xf32>
    %33 = vector.shape_cast %19 : vector<1x128xi1> to vector<1x128xi1>
    %34 = vector.broadcast %33 : vector<1x128xi1> to vector<128x128xi1>
    %35 = vector.broadcast %cst_2 : f32 to vector<128x128xf32>
    %36 = arith.select %34, %12, %35 : vector<128x128xi1>, vector<128x128xf32>
    %cst_10 = arith.constant dense<0xFF800000> : vector<128xf32>
    %37 = vector.multi_reduction <maximumf>, %36, %cst_10 [1] : vector<128x128xf32> to vector<128xf32>
    %38 = vector.shape_cast %37 : vector<128xf32> to vector<128x1xf32>
    %39 = arith.maximumf %6, %38 : vector<128x1xf32>
    %40 = vector.broadcast %cst_2 : f32 to vector<128x128xf32>
    %41 = arith.select %24, %12, %40 : vector<128x128xi1>, vector<128x128xf32>
    %cst_11 = arith.constant dense<0xFF800000> : vector<128xf32>
    %42 = vector.multi_reduction <maximumf>, %41, %cst_11 [1] : vector<128x128xf32> to vector<128xf32>
    %43 = vector.shape_cast %42 : vector<128xf32> to vector<128x1xf32>
    %44 = arith.maximumf %6, %43 : vector<128x1xf32>
    %45 = arith.subf %6, %44 : vector<128x1xf32>
    %46 = math.exp %45 : vector<128x1xf32>
    %47 = vector.broadcast %44 : vector<128x1xf32> to vector<128x128xf32>
    %48 = arith.subf %41, %47 : vector<128x128xf32>
    %49 = math.exp %48 : vector<128x128xf32>
    %50 = arith.mulf %5, %46 : vector<128x1xf32>
    %51 = arith.mulf %49, %32 : vector<128x128xf32>
    %cst_12 = arith.constant dense<0.000000e+00> : vector<128xf32>
    %52 = vector.multi_reduction <add>, %51, %cst_12 [1] : vector<128x128xf32> to vector<128xf32>
    %53 = vector.shape_cast %52 : vector<128xf32> to vector<128x1xf32>
    %54 = arith.addf %50, %53 : vector<128x1xf32>
    %55 = arith.mulf %5, %46 : vector<128x1xf32>
    %cst_13 = arith.constant dense<0.000000e+00> : vector<128xf32>
    %56 = vector.multi_reduction <add>, %49, %cst_13 [1] : vector<128x128xf32> to vector<128xf32>
    %57 = vector.shape_cast %56 : vector<128xf32> to vector<128x1xf32>
    %58 = arith.addf %55, %57 : vector<128x1xf32>
    %cst_14 = arith.constant dense<0.000000e+00> : vector<128xf32>
    %59 = vector.multi_reduction <add>, %32, %cst_14 [1] : vector<128x128xf32> to vector<128xf32>
    %60 = vector.shape_cast %59 : vector<128xf32> to vector<128x1xf32>
    %61 = arith.addf %5, %60 : vector<128x1xf32>
    %c1_i32 = arith.constant 1 : i32
    %cst_15 = arith.constant 0.000000e+00 : f32
    %62 = vector.broadcast %cst_15 : f32 to vector<128x1xf32>
    %63 = arith.cmpf ogt, %54, %62 : vector<128x1xf32>
    %cst_16 = arith.constant 1.000000e+00 : f32
    %64 = vector.broadcast %cst_16 : f32 to vector<128x1xf32>
    %65 = arith.select %63, %54, %64 : vector<128x1xi1>, vector<128x1xf32>
    %66 = tpu.reciprocal %65 {approx = true} : vector<128x1xf32> -> vector<128x1xf32>
    %67 = arith.mulf %65, %66 : vector<128x1xf32>
    %cst_17 = arith.constant 2.000000e+00 : f32
    %68 = vector.broadcast %cst_17 : f32 to vector<128x1xf32>
    %69 = arith.subf %68, %67 : vector<128x1xf32>
    %70 = arith.mulf %66, %69 : vector<128x1xf32>
    %71 = arith.subf %58, %54 : vector<128x1xf32>
    %cst_18 = arith.constant 0.000000e+00 : f32
    %72 = vector.broadcast %cst_18 : f32 to vector<128x1xf32>
    %73 = arith.cmpf ogt, %71, %72 : vector<128x1xf32>
    %cst_19 = arith.constant 1.000000e+00 : f32
    %74 = vector.broadcast %cst_19 : f32 to vector<128x1xf32>
    %75 = arith.select %73, %71, %74 : vector<128x1xi1>, vector<128x1xf32>
    %76 = tpu.reciprocal %75 {approx = true} : vector<128x1xf32> -> vector<128x1xf32>
    %77 = arith.mulf %75, %76 : vector<128x1xf32>
    %cst_20 = arith.constant 2.000000e+00 : f32
    %78 = vector.broadcast %cst_20 : f32 to vector<128x1xf32>
    %79 = arith.subf %78, %77 : vector<128x1xf32>
    %80 = arith.mulf %76, %79 : vector<128x1xf32>
    %cst_21 = arith.constant 14.2857141 : f32
    %c0_i32_22 = arith.constant 0 : i32
    %c128_i32_23 = arith.constant 128 : i32
    %81 = arith.muli %c0_i32_22, %c128_i32_23 : i32
    %82 = tpu.assume_multiple %81, 128 : i32
    %c0_24 = arith.constant 0 : index
    %83 = arith.index_cast %82 : i32 to index
    %84 = vector.load %arg6[%c0_24, %83] : memref<128x128xf32, #tpu.memory_space<vmem>>, vector<128x128xf32>
    %85 = tpu.iota {dimensions = array<i32: 1>} : vector<1x128xi32>
    %86 = vector.broadcast %82 : i32 to vector<1x128xi32>
    %87 = arith.addi %86, %85 : vector<1x128xi32>
    %c8_i32_25 = arith.constant 8 : i32
    %88 = vector.broadcast %c8_i32_25 : i32 to vector<1x128xi32>
    %89 = arith.cmpi slt, %87, %88 : vector<1x128xi32>
    %90 = vector.broadcast %87 : vector<1x128xi32> to vector<128x128xi32>
    %91 = vector.broadcast %4 : vector<128x1xi32> to vector<128x128xi32>
    %92 = arith.cmpi ne, %90, %91 : vector<128x128xi32>
    %93 = vector.broadcast %89 : vector<1x128xi1> to vector<128x128xi1>
    %94 = arith.andi %93, %92 : vector<128x128xi1>
    %c0_26 = arith.constant 0 : index
    %95 = arith.index_cast %82 : i32 to index
    %96 = vector.load %arg4[%c0_26, %95] : memref<1x128xi32, #tpu.memory_space<vmem>>, vector<1x128xi32>
    %97 = vector.broadcast %0 : vector<128x1xi32> to vector<128x128xi32>
    %98 = vector.broadcast %96 : vector<1x128xi32> to vector<128x128xi32>
    %99 = arith.cmpi eq, %97, %98 : vector<128x128xi32>
    %100 = arith.andi %99, %94 : vector<128x128xi1>
    %101 = arith.extui %100 : vector<128x128xi1> to vector<128x128xi32>
    %102 = arith.sitofp %101 : vector<128x128xi32> to vector<128x128xf32>
    %103 = vector.broadcast %44 : vector<128x1xf32> to vector<128x128xf32>
    %104 = arith.subf %84, %103 : vector<128x128xf32>
    %105 = math.exp %104 : vector<128x128xf32>
    %cst_27 = arith.constant 0.000000e+00 : f32
    %106 = vector.broadcast %cst_27 : f32 to vector<128x128xf32>
    %107 = arith.select %94, %105, %106 : vector<128x128xi1>, vector<128x128xf32>
    %108 = arith.mulf %107, %102 : vector<128x128xf32>
    %109 = arith.extui %94 : vector<128x128xi1> to vector<128x128xi32>
    %110 = arith.sitofp %109 : vector<128x128xi32> to vector<128x128xf32>
    %111 = arith.subf %107, %108 : vector<128x128xf32>
    %112 = vector.broadcast %80 : vector<128x1xf32> to vector<128x128xf32>
    %113 = arith.mulf %111, %112 : vector<128x128xf32>
    %114 = arith.addf %110, %113 : vector<128x128xf32>
    %115 = vector.broadcast %70 : vector<128x1xf32> to vector<128x128xf32>
    %116 = arith.mulf %108, %115 : vector<128x128xf32>
    %117 = arith.subf %114, %116 : vector<128x128xf32>
    %118 = arith.mulf %117, %102 : vector<128x128xf32>
    %119 = vector.broadcast %39 : vector<128x1xf32> to vector<128x128xf32>
    %120 = arith.subf %84, %119 : vector<128x128xf32>
    %121 = vector.broadcast %cst_21 : f32 to vector<128x128xf32>
    %122 = arith.mulf %120, %121 : vector<128x128xf32>
    %123 = math.exp %122 : vector<128x128xf32>
    %124 = arith.mulf %123, %117 : vector<128x128xf32>
    %cst_28 = arith.constant dense<0.000000e+00> : vector<128xf32>
    %125 = vector.multi_reduction <add>, %124, %cst_28 [1] : vector<128x128xf32> to vector<128xf32>
    %126 = vector.shape_cast %125 : vector<128xf32> to vector<128x1xf32>
    %127 = arith.addf %5, %126 : vector<128x1xf32>
    %128 = arith.mulf %122, %118 : vector<128x128xf32>
    %cst_29 = arith.constant dense<0.000000e+00> : vector<128xf32>
    %129 = vector.multi_reduction <add>, %128, %cst_29 [1] : vector<128x128xf32> to vector<128xf32>
    %130 = vector.shape_cast %129 : vector<128xf32> to vector<128x1xf32>
    %131 = arith.addf %5, %130 : vector<128x1xf32>
    %cst_30 = arith.constant dense<0.000000e+00> : vector<128xf32>
    %132 = vector.multi_reduction <add>, %118, %cst_30 [1] : vector<128x128xf32> to vector<128xf32>
    %133 = vector.shape_cast %132 : vector<128xf32> to vector<128x1xf32>
    %134 = arith.addf %5, %133 : vector<128x1xf32>
    %c1_i32_31 = arith.constant 1 : i32
    %135 = math.log %127 : vector<128x1xf32>
    %136 = arith.mulf %135, %134 : vector<128x1xf32>
    %137 = arith.subf %131, %136 : vector<128x1xf32>
    %cst_32 = arith.constant 0.000000e+00 : f32
    %138 = vector.broadcast %cst_32 : f32 to vector<128x1xf32>
    %139 = arith.subf %138, %137 : vector<128x1xf32>
    %140 = arith.divf %139, %61 : vector<128x1xf32>
    %c0_33 = arith.constant 0 : index
    %c0_34 = arith.constant 0 : index
    %141 = vector.load %arg5[%c0_33, %c0_34] : memref<128x1xf32, #tpu.memory_space<vmem>>, vector<128x1xf32>
    tpu.vector_store %arg5[%c0_33, %c0_34], %140 {strides = array<i32>} : memref<128x1xf32, #tpu.memory_space<vmem>>, vector<128x1xf32>,
    return
  }
  func.func @transform_0(%arg0: i32) -> (i32, i32) {
    %c0_i32 = arith.constant 0 : i32
    %c0_i32_0 = arith.constant 0 : i32
    return %arg0, %c0_i32 : i32, i32
  }
  func.func @transform_1(%arg0: i32) -> (i32, i32) {
    %c0_i32 = arith.constant 0 : i32
    %c0_i32_0 = arith.constant 0 : i32
    %c0_i32_1 = arith.constant 0 : i32
    return %c0_i32, %c0_i32_0 : i32, i32
  }
  func.func @transform_2(%arg0: i32) -> (i32, i32) {
    %c0_i32 = arith.constant 0 : i32
    %c0_i32_0 = arith.constant 0 : i32
    return %arg0, %c0_i32 : i32, i32
  }
  func.func @transform_3(%arg0: i32) -> (i32, i32) {
    %c0_i32 = arith.constant 0 : i32
    %c0_i32_0 = arith.constant 0 : i32
    %c0_i32_1 = arith.constant 0 : i32
    return %c0_i32, %c0_i32_0 : i32, i32
  }
  func.func @transform_4(%arg0: i32) -> (i32, i32) {
    %c0_i32 = arith.constant 0 : i32
    %c0_i32_0 = arith.constant 0 : i32
    return %arg0, %c0_i32 : i32, i32
  }
}

</mosaic_0001>

<llo_original>
// kernel: tpu_custom_call.1
$region0: #{tpu_custom_call.1}
  #allocation0 [shape = 'u32[]', space=smem, size = 0x4, offset = 0x4, fixed_abs, tag = 'smem constant byte address 0x4 - core index']
  #allocation1 [shape = 'u32[144,128]{1,0:T(1,128)}', space=vmem, size = 0x12000, scoped, tag = 'internal scratch']
  #allocation2 [shape = 'f32[128,128]{1,0:T(8,128)}', space=vmem, size = 0x10000, scoped, tag = 'scratch operand']
  %s0 = inlined_call_operand.vmem [shape: bf16[128,128], index: 0, kind: input, shape index: {}]
  %s1 = inlined_call_operand.vmem [shape: bf16[128,128], index: 1, kind: input, shape index: {}]
  %s2 = inlined_call_operand.vmem [shape: s32[128,1], index: 2, kind: input, shape index: {}]
  %s3 = inlined_call_operand.vmem [shape: s32[1,128], index: 3, kind: input, shape index: {}]
  %s4 = inlined_call_operand.vmem [shape: f32[128,1], index: 4, kind: output, shape index: {}]
  %s5 = sld [smem:[#allocation0]]
  $region26: #{tpu_custom_call.1} parent=0
    _
  %s7 = ssub.s32 1, %s5
  %s8 = scalar_select 0, %s7, %s5
  // Predicated region
  $region2: #{tpu_custom_call.1} parent=0 // pred_check
    _
  $region3: #{tpu_custom_call.1} parent=0 // pred_check_branch
    %10 = sbr.rel (0) target = $region5
  $region4: #{tpu_custom_call.1} parent=0 // pred_region
    _
  $region5: #{tpu_custom_call.1} parent=0 // pred_fallthru
    _
  // Predicated region
  $region6: #{tpu_custom_call.1} parent=0 // pred_check
    _
  $region7: #{tpu_custom_call.1} parent=0 // pred_check_branch
    %12 = sbr.rel (0) target = $region9
  $region8: #{tpu_custom_call.1} parent=0 // pred_region
    _
  $region9: #{tpu_custom_call.1} parent=0 // pred_fallthru
    _
  // Predicated region
  $region10: #{tpu_custom_call.1} parent=0 // pred_check
    _
  $region11: #{tpu_custom_call.1} parent=0 // pred_check_branch
    %14 = sbr.rel (0) target = $region13
  $region12: #{tpu_custom_call.1} parent=0 // pred_region
    _
  $region13: #{tpu_custom_call.1} parent=0 // pred_fallthru
    _
  // Predicated region
  $region14: #{tpu_custom_call.1} parent=0 // pred_check
    _
  $region15: #{tpu_custom_call.1} parent=0 // pred_check_branch
    %16 = sbr.rel (0) target = $region17
  $region16: #{tpu_custom_call.1} parent=0 // pred_region
    _
  $region17: #{tpu_custom_call.1} parent=0 // pred_fallthru
    _
  %v18 = vld [vmem:[%s2] sm:$0xff]
  %v19 = vld [vmem:[%s2 + $0x8] sm:$0xff]
  %v20 = vld [vmem:[%s2 + $0x10] sm:$0xff]
  %v21 = vld [vmem:[%s2 + $0x18] sm:$0xff]
  %v22 = vld [vmem:[%s2 + $0x20] sm:$0xff]
  %v23 = vld [vmem:[%s2 + $0x28] sm:$0xff]
  %v24 = vld [vmem:[%s2 + $0x30] sm:$0xff]
  %v25 = vld [vmem:[%s2 + $0x38] sm:$0xff]
  %v26 = vld [vmem:[%s2 + $0x40] sm:$0xff]
  %v27 = vld [vmem:[%s2 + $0x48] sm:$0xff]
  %v28 = vld [vmem:[%s2 + $0x50] sm:$0xff]
  %v29 = vld [vmem:[%s2 + $0x58] sm:$0xff]
  %v30 = vld [vmem:[%s2 + $0x60] sm:$0xff]
  %v31 = vld [vmem:[%s2 + $0x68] sm:$0xff]
  %v32 = vld [vmem:[%s2 + $0x70] sm:$0xff]
  %v33 = vld [vmem:[%s2 + $0x78] sm:$0xff]
  %s34 = smul.u32 0, 128
  %v35 = vlaneseq
  %v36 = vshrl.u32 %v35, 7
  %v37 = vadd.s32 %v36, 8
  %v38 = vadd.s32 %v36, 16
  %v39 = vadd.s32 %v36, 24
  %v40 = vadd.s32 %v36, 32
  %v41 = vadd.s32 %v36, 40
  %v42 = vadd.s32 %v36, 48
  %v43 = vadd.s32 %v36, 56
  %v44 = vadd.s32 %v36, 64
  %v45 = vadd.s32 %v36, 72
  %v46 = vadd.s32 %v36, 80
  %v47 = vadd.s32 %v36, 88
  %v48 = vadd.s32 %v36, 96
  %v49 = vadd.s32 %v36, 104
  %v50 = vadd.s32 %v36, 112
  %v51 = vadd.s32 %v36, 120
  %v52 = vstv %s34
  %v53 = vadd.s32 %v52, %v36
  %v54 = vadd.s32 %v52, %v37
  %v55 = vadd.s32 %v52, %v38
  %v56 = vadd.s32 %v52, %v39
  %v57 = vadd.s32 %v52, %v40
  %v58 = vadd.s32 %v52, %v41
  %v59 = vadd.s32 %v52, %v42
  %v60 = vadd.s32 %v52, %v43
  %v61 = vadd.s32 %v52, %v44
  %v62 = vadd.s32 %v52, %v45
  %v63 = vadd.s32 %v52, %v46
  %v64 = vadd.s32 %v52, %v47
  %v65 = vadd.s32 %v52, %v48
  %v66 = vadd.s32 %v52, %v49
  %v67 = vadd.s32 %v52, %v50
  %v68 = vadd.s32 %v52, %v51
  %v69 = vld [vmem:[%s0] sm:$0xf]
  %v70 = vld [vmem:[%s0 + $0x4] sm:$0xf]
  %v71 = vld [vmem:[%s0 + $0x8] sm:$0xf]
  %v72 = vld [vmem:[%s0 + $0xc] sm:$0xf]
  %v73 = vld [vmem:[%s0 + $0x10] sm:$0xf]
  %v74 = vld [vmem:[%s0 + $0x14] sm:$0xf]
  %v75 = vld [vmem:[%s0 + $0x18] sm:$0xf]
  %v76 = vld [vmem:[%s0 + $0x1c] sm:$0xf]
  %v77 = vld [vmem:[%s0 + $0x20] sm:$0xf]
  %v78 = vld [vmem:[%s0 + $0x24] sm:$0xf]
  %v79 = vld [vmem:[%s0 + $0x28] sm:$0xf]
  %v80 = vld [vmem:[%s0 + $0x2c] sm:$0xf]
  %v81 = vld [vmem:[%s0 + $0x30] sm:$0xf]
  %v82 = vld [vmem:[%s0 + $0x34] sm:$0xf]
  %v83 = vld [vmem:[%s0 + $0x38] sm:$0xf]
  %v84 = vld [vmem:[%s0 + $0x3c] sm:$0xf]
  %v85 = vld [vmem:[%s1] sm:$0xf]
  %v86 = vld [vmem:[%s1 + $0x4] sm:$0xf]
  %v87 = vld [vmem:[%s1 + $0x8] sm:$0xf]
  %v88 = vld [vmem:[%s1 + $0xc] sm:$0xf]
  %v89 = vld [vmem:[%s1 + $0x10] sm:$0xf]
  %v90 = vld [vmem:[%s1 + $0x14] sm:$0xf]
  %v91 = vld [vmem:[%s1 + $0x18] sm:$0xf]
  %v92 = vld [vmem:[%s1 + $0x1c] sm:$0xf]
  %v93 = vld [vmem:[%s1 + $0x20] sm:$0xf]
  %v94 = vld [vmem:[%s1 + $0x24] sm:$0xf]
  %v95 = vld [vmem:[%s1 + $0x28] sm:$0xf]
  %v96 = vld [vmem:[%s1 + $0x2c] sm:$0xf]
  %v97 = vld [vmem:[%s1 + $0x30] sm:$0xf]
  %v98 = vld [vmem:[%s1 + $0x34] sm:$0xf]
  %v99 = vld [vmem:[%s1 + $0x38] sm:$0xf]
  %v100 = vld [vmem:[%s1 + $0x3c] sm:$0xf]
  %v117 = vunpack.c.l.b16 %v69
  %v118 = vunpack.c.l.b16 %v70
  %v119 = vunpack.c.l.b16 %v71
  %v120 = vunpack.c.l.b16 %v72
  %v121 = vunpack.c.l.b16 %v73
  %v122 = vunpack.c.l.b16 %v74
  %v123 = vunpack.c.l.b16 %v75
  %v124 = vunpack.c.l.b16 %v76
  %v125 = vunpack.c.l.b16 %v77
  %v126 = vunpack.c.l.b16 %v78
  %v127 = vunpack.c.l.b16 %v79
  %v128 = vunpack.c.l.b16 %v80
  %v129 = vunpack.c.l.b16 %v81
  %v130 = vunpack.c.l.b16 %v82
  %v131 = vunpack.c.l.b16 %v83
  %v132 = vunpack.c.l.b16 %v84
  %v133 = vpack.c.b16 %v118, %v117
  %v134 = vpack.c.b16 %v120, %v119
  %v135 = vpack.c.b16 %v122, %v121
  %v136 = vpack.c.b16 %v124, %v123
  %v137 = vpack.c.b16 %v126, %v125
  %v138 = vpack.c.b16 %v128, %v127
  %v139 = vpack.c.b16 %v130, %v129
  %v140 = vpack.c.b16 %v132, %v131
  %v165 = vunpack.c.l.b16 %v85
  %v166 = vunpack.c.l.b16 %v86
  %v167 = vunpack.c.l.b16 %v87
  %v168 = vunpack.c.l.b16 %v88
  %v169 = vunpack.c.l.b16 %v89
  %v170 = vunpack.c.l.b16 %v90
  %v171 = vunpack.c.l.b16 %v91
  %v172 = vunpack.c.l.b16 %v92
  %v173 = vunpack.c.l.b16 %v93
  %v174 = vunpack.c.l.b16 %v94
  %v175 = vunpack.c.l.b16 %v95
  %v176 = vunpack.c.l.b16 %v96
  %v177 = vunpack.c.l.b16 %v97
  %v178 = vunpack.c.l.b16 %v98
  %v179 = vunpack.c.l.b16 %v99
  %v180 = vunpack.c.l.b16 %v100
  %v181 = vpack.c.b16 %v166, %v165
  %v182 = vpack.c.b16 %v168, %v167
  %v183 = vpack.c.b16 %v170, %v169
  %v184 = vpack.c.b16 %v172, %v171
  %v185 = vpack.c.b16 %v174, %v173
  %v186 = vpack.c.b16 %v176, %v175
  %v187 = vpack.c.b16 %v178, %v177
  %v188 = vpack.c.b16 %v180, %v179
  %197 = vmatprep.subr.bf16.mxu0 0
  %198 = vmatpush1.bf16.msra.mxu0 %v181
  %199 = vmatprep.subr.bf16.mxu0 0
  %200 = vmatpush1.bf16.msra.mxu0 %v182
  %201 = vmatprep.subr.bf16.mxu0 0
  %202 = vmatpush1.bf16.msra.mxu0 %v183
  %203 = vmatprep.subr.bf16.mxu0 0
  %204 = vmatpush1.bf16.msra.mxu0 %v184
  %205 = vmatprep.subr.bf16.mxu0 0
  %206 = vmatpush1.bf16.msra.mxu0 %v185
  %207 = vmatprep.subr.bf16.mxu0 0
  %208 = vmatpush1.bf16.msra.mxu0 %v186
  %209 = vmatprep.subr.bf16.mxu0 0
  %210 = vmatpush1.bf16.msra.mxu0 %v187
  %211 = vmatprep.subr.bf16.mxu0 0
  %212 = vmatpush1.bf16.msra.mxu0 %v188
  %213 = vmatprep.subr.bf16.mxu0 0
  %214 = vmatpush1.bf16.msra.mxu0 0
  %215 = vmatprep.subr.bf16.mxu0 0
  %216 = vmatpush1.bf16.msra.mxu0 0
  %217 = vmatprep.subr.bf16.mxu0 0
  %218 = vmatpush1.bf16.msra.mxu0 0
  %219 = vmatprep.subr.bf16.mxu0 0
  %220 = vmatpush1.bf16.msra.mxu0 0
  %221 = vmatprep.subr.bf16.mxu0 0
  %222 = vmatpush1.bf16.msra.mxu0 0
  %223 = vmatprep.subr.bf16.mxu0 0
  %224 = vmatpush1.bf16.msra.mxu0 0
  %225 = vmatprep.subr.bf16.mxu0 0
  %226 = vmatpush1.bf16.msra.mxu0 0
  %227 = vmatprep.subr.bf16.mxu0 0
  %228 = vmatpush1.bf16.msra.mxu0 0
  %229 = vmatprep.mubr.bf16.mxu0 0
  %230 = vmatmul.mubr.bf16.gmra.mrb[0].mxu0 %v133
  %v231 = vpop.f32.mrb[0].mxu0
  %v232 = vadd.f32 0.0, %v231
  %v233 = vpop.f32.mrb[0].mxu0
  %v234 = vpop.f32.mrb[0].mxu0
  %v235 = vadd.f32 0.0, %v234
  %v236 = vpop.f32.mrb[0].mxu0
  %237 = vmatprep.mubr.bf16.mxu0 0
  %238 = vmatmul.mubr.bf16.gmra.mrb[0].mxu0 %v134
  %v239 = vpop.f32.mrb[0].mxu0
  %v240 = vadd.f32 0.0, %v239
  %v241 = vpop.f32.mrb[0].mxu0
  %v242 = vpop.f32.mrb[0].mxu0
  %v243 = vadd.f32 0.0, %v242
  %v244 = vpop.f32.mrb[0].mxu0
  %245 = vmatprep.mubr.bf16.mxu0 0
  %246 = vmatmul.mubr.bf16.gmra.mrb[0].mxu0 %v135
  %v247 = vpop.f32.mrb[0].mxu0
  %v248 = vadd.f32 0.0, %v247
  %v249 = vpop.f32.mrb[0].mxu0
  %v250 = vpop.f32.mrb[0].mxu0
  %v251 = vadd.f32 0.0, %v250
  %v252 = vpop.f32.mrb[0].mxu0
  %253 = vmatprep.mubr.bf16.mxu0 0
  %254 = vmatmul.mubr.bf16.gmra.mrb[0].mxu0 %v136
  %v255 = vpop.f32.mrb[0].mxu0
  %v256 = vadd.f32 0.0, %v255
  %v257 = vpop.f32.mrb[0].mxu0
  %v258 = vpop.f32.mrb[0].mxu0
  %v259 = vadd.f32 0.0, %v258
  %v260 = vpop.f32.mrb[0].mxu0
  %261 = vmatprep.mubr.bf16.mxu0 0
  %262 = vmatmul.mubr.bf16.gmra.mrb[0].mxu0 %v137
  %v263 = vpop.f32.mrb[0].mxu0
  %v264 = vadd.f32 0.0, %v263
  %v265 = vpop.f32.mrb[0].mxu0
  %v266 = vpop.f32.mrb[0].mxu0
  %v267 = vadd.f32 0.0, %v266
  %v268 = vpop.f32.mrb[0].mxu0
  %269 = vmatprep.mubr.bf16.mxu0 0
  %270 = vmatmul.mubr.bf16.gmra.mrb[0].mxu0 %v138
  %v271 = vpop.f32.mrb[0].mxu0
  %v272 = vadd.f32 0.0, %v271
  %v273 = vpop.f32.mrb[0].mxu0
  %v274 = vpop.f32.mrb[0].mxu0
  %v275 = vadd.f32 0.0, %v274
  %v276 = vpop.f32.mrb[0].mxu0
  %277 = vmatprep.mubr.bf16.mxu0 0
  %278 = vmatmul.mubr.bf16.gmra.mrb[0].mxu0 %v139
  %v279 = vpop.f32.mrb[0].mxu0
  %v280 = vadd.f32 0.0, %v279
  %v281 = vpop.f32.mrb[0].mxu0
  %v282 = vpop.f32.mrb[0].mxu0
  %v283 = vadd.f32 0.0, %v282
  %v284 = vpop.f32.mrb[0].mxu0
  %285 = vmatprep.mubr.bf16.mxu0 0
  %286 = vmatmul.mubr.bf16.gmra.mrb[0].mxu0 %v140
  %v287 = vpop.f32.mrb[0].mxu0
  %v288 = vadd.f32 0.0, %v287
  %v289 = vpop.f32.mrb[0].mxu0
  %v290 = vpop.f32.mrb[0].mxu0
  %v291 = vadd.f32 0.0, %v290
  %v292 = vpop.f32.mrb[0].mxu0
  %293 = vdwg.mxu0
  %294 = vst [vmem:[#allocation2] sm:$0xff] %v232
  %295 = vst [vmem:[#allocation2 + $0x8] sm:$0xff] %v235
  %296 = vst [vmem:[#allocation2 + $0x10] sm:$0xff] %v240
  %297 = vst [vmem:[#allocation2 + $0x18] sm:$0xff] %v243
  %298 = vst [vmem:[#allocation2 + $0x20] sm:$0xff] %v248
  %299 = vst [vmem:[#allocation2 + $0x28] sm:$0xff] %v251
  %300 = vst [vmem:[#allocation2 + $0x30] sm:$0xff] %v256
  %301 = vst [vmem:[#allocation2 + $0x38] sm:$0xff] %v259
  %302 = vst [vmem:[#allocation2 + $0x40] sm:$0xff] %v264
  %303 = vst [vmem:[#allocation2 + $0x48] sm:$0xff] %v267
  %304 = vst [vmem:[#allocation2 + $0x50] sm:$0xff] %v272
  %305 = vst [vmem:[#allocation2 + $0x58] sm:$0xff] %v275
  %306 = vst [vmem:[#allocation2 + $0x60] sm:$0xff] %v280
  %307 = vst [vmem:[#allocation2 + $0x68] sm:$0xff] %v283
  %308 = vst [vmem:[#allocation2 + $0x70] sm:$0xff] %v288
  %309 = vst [vmem:[#allocation2 + $0x78] sm:$0xff] %v291
  %v310 = vlaneseq
  %v311 = vand.u32 %v310, 127
  %v312 = vstv 0
  %v313 = vadd.s32 %v312, %v311
  %vm314 = vcmp.lt.s32.totalorder %v313, 8
  %vm315 = vcmp.ne.s32.totalorder %v313, %v53
  %vm316 = vcmp.ne.s32.totalorder %v313, %v54
  %vm317 = vcmp.ne.s32.totalorder %v313, %v55
  %vm318 = vcmp.ne.s32.totalorder %v313, %v56
  %vm319 = vcmp.ne.s32.totalorder %v313, %v57
  %vm320 = vcmp.ne.s32.totalorder %v313, %v58
  %vm321 = vcmp.ne.s32.totalorder %v313, %v59
  %vm322 = vcmp.ne.s32.totalorder %v313, %v60
  %vm323 = vcmp.ne.s32.totalorder %v313, %v61
  %vm324 = vcmp.ne.s32.totalorder %v313, %v62
  %vm325 = vcmp.ne.s32.totalorder %v313, %v63
  %vm326 = vcmp.ne.s32.totalorder %v313, %v64
  %vm327 = vcmp.ne.s32.totalorder %v313, %v65
  %vm328 = vcmp.ne.s32.totalorder %v313, %v66
  %vm329 = vcmp.ne.s32.totalorder %v313, %v67
  %vm330 = vcmp.ne.s32.totalorder %v313, %v68
  %v331 = vsel %vm314, 1, 0
  %vm332 = vcmp.eq.s32.totalorder %v331, 1
  %vm333 = vmand %vm332, %vm315
  %vm334 = vmand %vm332, %vm316
  %vm335 = vmand %vm332, %vm317
  %vm336 = vmand %vm332, %vm318
  %vm337 = vmand %vm332, %vm319
  %vm338 = vmand %vm332, %vm320
  %vm339 = vmand %vm332, %vm321
  %vm340 = vmand %vm332, %vm322
  %vm341 = vmand %vm332, %vm323
  %vm342 = vmand %vm332, %vm324
  %vm343 = vmand %vm332, %vm325
  %vm344 = vmand %vm332, %vm326
  %vm345 = vmand %vm332, %vm327
  %vm346 = vmand %vm332, %vm328
  %vm347 = vmand %vm332, %vm329
  %vm348 = vmand %vm332, %vm330
  %v349 = vld [vmem:[%s3] sm:$0x1]
  %350 = vset.pattern.permute.xlu0 0
  %351 = vperm.xlu0 %350, %v18
  %v352 = vpop.permute.xlu0 %351
  %353 = vset.pattern.permute.xlu0 0
  %354 = vperm.xlu0 %353, %v19
  %v355 = vpop.permute.xlu0 %354
  %356 = vset.pattern.permute.xlu0 0
  %357 = vperm.xlu0 %356, %v20
  %v358 = vpop.permute.xlu0 %357
  %359 = vset.pattern.permute.xlu0 0
  %360 = vperm.xlu0 %359, %v21
  %v361 = vpop.permute.xlu0 %360
  %362 = vset.pattern.permute.xlu0 0
  %363 = vperm.xlu0 %362, %v22
  %v364 = vpop.permute.xlu0 %363
  %365 = vset.pattern.permute.xlu0 0
  %366 = vperm.xlu0 %365, %v23
  %v367 = vpop.permute.xlu0 %366
  %368 = vset.pattern.permute.xlu0 0
  %369 = vperm.xlu0 %368, %v24
  %v370 = vpop.permute.xlu0 %369
  %371 = vset.pattern.permute.xlu0 0
  %372 = vperm.xlu0 %371, %v25
  %v373 = vpop.permute.xlu0 %372
  %374 = vset.pattern.permute.xlu0 0
  %375 = vperm.xlu0 %374, %v26
  %v376 = vpop.permute.xlu0 %375
  %377 = vset.pattern.permute.xlu0 0
  %378 = vperm.xlu0 %377, %v27
  %v379 = vpop.permute.xlu0 %378
  %380 = vset.pattern.permute.xlu0 0
  %381 = vperm.xlu0 %380, %v28
  %v382 = vpop.permute.xlu0 %381
  %383 = vset.pattern.permute.xlu0 0
  %384 = vperm.xlu0 %383, %v29
  %v385 = vpop.permute.xlu0 %384
  %386 = vset.pattern.permute.xlu0 0
  %387 = vperm.xlu0 %386, %v30
  %v388 = vpop.permute.xlu0 %387
  %389 = vset.pattern.permute.xlu0 0
  %390 = vperm.xlu0 %389, %v31
  %v391 = vpop.permute.xlu0 %390
  %392 = vset.pattern.permute.xlu0 0
  %393 = vperm.xlu0 %392, %v32
  %v394 = vpop.permute.xlu0 %393
  %395 = vset.pattern.permute.xlu0 0
  %396 = vperm.xlu0 %395, %v33
  %v397 = vpop.permute.xlu0 %396
  %v398 = vlaneseq
  %v399 = vshrl.u32 %v398, 7
  %v400 = vsub.s32 0, %v399
  %v401 = vrot.slane %v349, %v400
  %vm402 = vcmp.eq.s32.totalorder %v352, %v401
  %vm403 = vcmp.eq.s32.totalorder %v355, %v401
  %vm404 = vcmp.eq.s32.totalorder %v358, %v401
  %vm405 = vcmp.eq.s32.totalorder %v361, %v401
  %vm406 = vcmp.eq.s32.totalorder %v364, %v401
  %vm407 = vcmp.eq.s32.totalorder %v367, %v401
  %vm408 = vcmp.eq.s32.totalorder %v370, %v401
  %vm409 = vcmp.eq.s32.totalorder %v373, %v401
  %vm410 = vcmp.eq.s32.totalorder %v376, %v401
  %vm411 = vcmp.eq.s32.totalorder %v379, %v401
  %vm412 = vcmp.eq.s32.totalorder %v382, %v401
  %vm413 = vcmp.eq.s32.totalorder %v385, %v401
  %vm414 = vcmp.eq.s32.totalorder %v388, %v401
  %vm415 = vcmp.eq.s32.totalorder %v391, %v401
  %vm416 = vcmp.eq.s32.totalorder %v394, %v401
  %vm417 = vcmp.eq.s32.totalorder %v397, %v401
  %vm418 = vmand %vm402, %vm333
  %vm419 = vmand %vm403, %vm334
  %vm420 = vmand %vm404, %vm335
  %vm421 = vmand %vm405, %vm336
  %vm422 = vmand %vm406, %vm337
  %vm423 = vmand %vm407, %vm338
  %vm424 = vmand %vm408, %vm339
  %vm425 = vmand %vm409, %vm340
  %vm426 = vmand %vm410, %vm341
  %vm427 = vmand %vm411, %vm342
  %vm428 = vmand %vm412, %vm343
  %vm429 = vmand %vm413, %vm344
  %vm430 = vmand %vm414, %vm345
  %vm431 = vmand %vm415, %vm346
  %vm432 = vmand %vm416, %vm347
  %vm433 = vmand %vm417, %vm348
  %v434 = vsel %vm418, 1, 0
  %v435 = vsel %vm419, 1, 0
  %v436 = vsel %vm420, 1, 0
  %v437 = vsel %vm421, 1, 0
  %v438 = vsel %vm422, 1, 0
  %v439 = vsel %vm423, 1, 0
  %v440 = vsel %vm424, 1, 0
  %v441 = vsel %vm425, 1, 0
  %v442 = vsel %vm426, 1, 0
  %v443 = vsel %vm427, 1, 0
  %v444 = vsel %vm428, 1, 0
  %v445 = vsel %vm429, 1, 0
  %v446 = vsel %vm430, 1, 0
  %v447 = vsel %vm431, 1, 0
  %v448 = vsel %vm432, 1, 0
  %v449 = vsel %vm433, 1, 0
  %v450 = vcvt.s32.f32 %v434
  %v451 = vcvt.s32.f32 %v435
  %v452 = vcvt.s32.f32 %v436
  %v453 = vcvt.s32.f32 %v437
  %v454 = vcvt.s32.f32 %v438
  %v455 = vcvt.s32.f32 %v439
  %v456 = vcvt.s32.f32 %v440
  %v457 = vcvt.s32.f32 %v441
  %v458 = vcvt.s32.f32 %v442
  %v459 = vcvt.s32.f32 %v443
  %v460 = vcvt.s32.f32 %v444
  %v461 = vcvt.s32.f32 %v445
  %v462 = vcvt.s32.f32 %v446
  %v463 = vcvt.s32.f32 %v447
  %v464 = vcvt.s32.f32 %v448
  %v465 = vcvt.s32.f32 %v449
  %v466 = vsel %vm332, %v232, -inf
  %v467 = vsel %vm332, %v235, -inf
  %v468 = vsel %vm332, %v240, -inf
  %v469 = vsel %vm332, %v243, -inf
  %v470 = vsel %vm332, %v248, -inf
  %v471 = vsel %vm332, %v251, -inf
  %v472 = vsel %vm332, %v256, -inf
  %v473 = vsel %vm332, %v259, -inf
  %v474 = vsel %vm332, %v264, -inf
  %v475 = vsel %vm332, %v267, -inf
  %v476 = vsel %vm332, %v272, -inf
  %v477 = vsel %vm332, %v275, -inf
  %v478 = vsel %vm332, %v280, -inf
  %v479 = vsel %vm332, %v283, -inf
  %v480 = vsel %vm332, %v288, -inf
  %v481 = vsel %vm332, %v291, -inf
  %482 = vmax.xlane.f32.xlu0 %v466
  %v483 = vpop.xlane.xlu0 %482
  %484 = vmax.xlane.f32.xlu0 %v467
  %v485 = vpop.xlane.xlu0 %484
  %486 = vmax.xlane.f32.xlu0 %v468
  %v487 = vpop.xlane.xlu0 %486
  %488 = vmax.xlane.f32.xlu0 %v469
  %v489 = vpop.xlane.xlu0 %488
  %490 = vmax.xlane.f32.xlu0 %v470
  %v491 = vpop.xlane.xlu0 %490
  %492 = vmax.xlane.f32.xlu0 %v471
  %v493 = vpop.xlane.xlu0 %492
  %494 = vmax.xlane.f32.xlu0 %v472
  %v495 = vpop.xlane.xlu0 %494
  %496 = vmax.xlane.f32.xlu0 %v473
  %v497 = vpop.xlane.xlu0 %496
  %498 = vmax.xlane.f32.xlu0 %v474
  %v499 = vpop.xlane.xlu0 %498
  %500 = vmax.xlane.f32.xlu0 %v475
  %v501 = vpop.xlane.xlu0 %500
  %502 = vmax.xlane.f32.xlu0 %v476
  %v503 = vpop.xlane.xlu0 %502
  %504 = vmax.xlane.f32.xlu0 %v477
  %v505 = vpop.xlane.xlu0 %504
  %506 = vmax.xlane.f32.xlu0 %v478
  %v507 = vpop.xlane.xlu0 %506
  %508 = vmax.xlane.f32.xlu0 %v479
  %v509 = vpop.xlane.xlu0 %508
  %510 = vmax.xlane.f32.xlu0 %v480
  %v511 = vpop.xlane.xlu0 %510
  %512 = vmax.xlane.f32.xlu0 %v481
  %v513 = vpop.xlane.xlu0 %512
  %v514 = vsel %vm333, %v232, -inf
  %v515 = vsel %vm334, %v235, -inf
  %v516 = vsel %vm335, %v240, -inf
  %v517 = vsel %vm336, %v243, -inf
  %v518 = vsel %vm337, %v248, -inf
  %v519 = vsel %vm338, %v251, -inf
  %v520 = vsel %vm339, %v256, -inf
  %v521 = vsel %vm340, %v259, -inf
  %v522 = vsel %vm341, %v264, -inf
  %v523 = vsel %vm342, %v267, -inf
  %v524 = vsel %vm343, %v272, -inf
  %v525 = vsel %vm344, %v275, -inf
  %v526 = vsel %vm345, %v280, -inf
  %v527 = vsel %vm346, %v283, -inf
  %v528 = vsel %vm347, %v288, -inf
  %v529 = vsel %vm348, %v291, -inf
  %530 = vmax.xlane.f32.xlu0 %v514
  %v531 = vpop.xlane.xlu0 %530
  %532 = vmax.xlane.f32.xlu0 %v515
  %v533 = vpop.xlane.xlu0 %532
  %534 = vmax.xlane.f32.xlu0 %v516
  %v535 = vpop.xlane.xlu0 %534
  %536 = vmax.xlane.f32.xlu0 %v517
  %v537 = vpop.xlane.xlu0 %536
  %538 = vmax.xlane.f32.xlu0 %v518
  %v539 = vpop.xlane.xlu0 %538
  %540 = vmax.xlane.f32.xlu0 %v519
  %v541 = vpop.xlane.xlu0 %540
  %542 = vmax.xlane.f32.xlu0 %v520
  %v543 = vpop.xlane.xlu0 %542
  %544 = vmax.xlane.f32.xlu0 %v521
  %v545 = vpop.xlane.xlu0 %544
  %546 = vmax.xlane.f32.xlu0 %v522
  %v547 = vpop.xlane.xlu0 %546
  %548 = vmax.xlane.f32.xlu0 %v523
  %v549 = vpop.xlane.xlu0 %548
  %550 = vmax.xlane.f32.xlu0 %v524
  %v551 = vpop.xlane.xlu0 %550
  %552 = vmax.xlane.f32.xlu0 %v525
  %v553 = vpop.xlane.xlu0 %552
  %554 = vmax.xlane.f32.xlu0 %v526
  %v555 = vpop.xlane.xlu0 %554
  %556 = vmax.xlane.f32.xlu0 %v527
  %v557 = vpop.xlane.xlu0 %556
  %558 = vmax.xlane.f32.xlu0 %v528
  %v559 = vpop.xlane.xlu0 %558
  %560 = vmax.xlane.f32.xlu0 %v529
  %v561 = vpop.xlane.xlu0 %560
  %v562 = vsub.f32 -inf, %v531
  %v563 = vsub.f32 -inf, %v533
  %v564 = vsub.f32 -inf, %v535
  %v565 = vsub.f32 -inf, %v537
  %v566 = vsub.f32 -inf, %v539
  %v567 = vsub.f32 -inf, %v541
  %v568 = vsub.f32 -inf, %v543
  %v569 = vsub.f32 -inf, %v545
  %v570 = vsub.f32 -inf, %v547
  %v571 = vsub.f32 -inf, %v549
  %v572 = vsub.f32 -inf, %v551
  %v573 = vsub.f32 -inf, %v553
  %v574 = vsub.f32 -inf, %v555
  %v575 = vsub.f32 -inf, %v557
  %v576 = vsub.f32 -inf, %v559
  %v577 = vsub.f32 -inf, %v561
  %v578 = vmul.f32 %v562, 1.442695
  %v579 = vpow.pop %v578
  %v580 = vmul.f32 %v563, 1.442695
  %v581 = vpow.pop %v580
  %v582 = vmul.f32 %v564, 1.442695
  %v583 = vpow.pop %v582
  %v584 = vmul.f32 %v565, 1.442695
  %v585 = vpow.pop %v584
  %v586 = vmul.f32 %v566, 1.442695
  %v587 = vpow.pop %v586
  %v588 = vmul.f32 %v567, 1.442695
  %v589 = vpow.pop %v588
  %v590 = vmul.f32 %v568, 1.442695
  %v591 = vpow.pop %v590
  %v592 = vmul.f32 %v569, 1.442695
  %v593 = vpow.pop %v592
  %v594 = vmul.f32 %v570, 1.442695
  %v595 = vpow.pop %v594
  %v596 = vmul.f32 %v571, 1.442695
  %v597 = vpow.pop %v596
  %v598 = vmul.f32 %v572, 1.442695
  %v599 = vpow.pop %v598
  %v600 = vmul.f32 %v573, 1.442695
  %v601 = vpow.pop %v600
  %v602 = vmul.f32 %v574, 1.442695
  %v603 = vpow.pop %v602
  %v604 = vmul.f32 %v575, 1.442695
  %v605 = vpow.pop %v604
  %v606 = vmul.f32 %v576, 1.442695
  %v607 = vpow.pop %v606
  %v608 = vmul.f32 %v577, 1.442695
  %v609 = vpow.pop %v608
  %v610 = vsub.f32 %v514, %v531
  %v611 = vsub.f32 %v515, %v533
  %v612 = vsub.f32 %v516, %v535
  %v613 = vsub.f32 %v517, %v537
  %v614 = vsub.f32 %v518, %v539
  %v615 = vsub.f32 %v519, %v541
  %v616 = vsub.f32 %v520, %v543
  %v617 = vsub.f32 %v521, %v545
  %v618 = vsub.f32 %v522, %v547
  %v619 = vsub.f32 %v523, %v549
  %v620 = vsub.f32 %v524, %v551
  %v621 = vsub.f32 %v525, %v553
  %v622 = vsub.f32 %v526, %v555
  %v623 = vsub.f32 %v527, %v557
  %v624 = vsub.f32 %v528, %v559
  %v625 = vsub.f32 %v529, %v561
  %v626 = vmul.f32 %v610, 1.442695
  %v627 = vpow.pop %v626
  %v628 = vmul.f32 %v611, 1.442695
  %v629 = vpow.pop %v628
  %v630 = vmul.f32 %v612, 1.442695
  %v631 = vpow.pop %v630
  %v632 = vmul.f32 %v613, 1.442695
  %v633 = vpow.pop %v632
  %v634 = vmul.f32 %v614, 1.442695
  %v635 = vpow.pop %v634
  %v636 = vmul.f32 %v615, 1.442695
  %v637 = vpow.pop %v636
  %v638 = vmul.f32 %v616, 1.442695
  %v639 = vpow.pop %v638
  %v640 = vmul.f32 %v617, 1.442695
  %v641 = vpow.pop %v640
  %v642 = vmul.f32 %v618, 1.442695
  %v643 = vpow.pop %v642
  %v644 = vmul.f32 %v619, 1.442695
  %v645 = vpow.pop %v644
  %v646 = vmul.f32 %v620, 1.442695
  %v647 = vpow.pop %v646
  %v648 = vmul.f32 %v621, 1.442695
  %v649 = vpow.pop %v648
  %v650 = vmul.f32 %v622, 1.442695
  %v651 = vpow.pop %v650
  %v652 = vmul.f32 %v623, 1.442695
  %v653 = vpow.pop %v652
  %v654 = vmul.f32 %v624, 1.442695
  %v655 = vpow.pop %v654
  %v656 = vmul.f32 %v625, 1.442695
  %v657 = vpow.pop %v656
  %v658 = vmul.f32 %v579, 0.0
  %v659 = vmul.f32 %v581, 0.0
  %v660 = vmul.f32 %v583, 0.0
  %v661 = vmul.f32 %v585, 0.0
  %v662 = vmul.f32 %v587, 0.0
  %v663 = vmul.f32 %v589, 0.0
  %v664 = vmul.f32 %v591, 0.0
  %v665 = vmul.f32 %v593, 0.0
  %v666 = vmul.f32 %v595, 0.0
  %v667 = vmul.f32 %v597, 0.0
  %v668 = vmul.f32 %v599, 0.0
  %v669 = vmul.f32 %v601, 0.0
  %v670 = vmul.f32 %v603, 0.0
  %v671 = vmul.f32 %v605, 0.0
  %v672 = vmul.f32 %v607, 0.0
  %v673 = vmul.f32 %v609, 0.0
  %v674 = vmul.f32 %v627, %v450
  %v675 = vmul.f32 %v629, %v451
  %v676 = vmul.f32 %v631, %v452
  %v677 = vmul.f32 %v633, %v453
  %v678 = vmul.f32 %v635, %v454
  %v679 = vmul.f32 %v637, %v455
  %v680 = vmul.f32 %v639, %v456
  %v681 = vmul.f32 %v641, %v457
  %v682 = vmul.f32 %v643, %v458
  %v683 = vmul.f32 %v645, %v459
  %v684 = vmul.f32 %v647, %v460
  %v685 = vmul.f32 %v649, %v461
  %v686 = vmul.f32 %v651, %v462
  %v687 = vmul.f32 %v653, %v463
  %v688 = vmul.f32 %v655, %v464
  %v689 = vmul.f32 %v657, %v465
  %690 = vadd.xlane.f32.xlu0 %v674
  %v691 = vpop.xlane.xlu0 %690
  %692 = vadd.xlane.f32.xlu0 %v675
  %v693 = vpop.xlane.xlu0 %692
  %694 = vadd.xlane.f32.xlu0 %v676
  %v695 = vpop.xlane.xlu0 %694
  %696 = vadd.xlane.f32.xlu0 %v677
  %v697 = vpop.xlane.xlu0 %696
  %698 = vadd.xlane.f32.xlu0 %v678
  %v699 = vpop.xlane.xlu0 %698
  %700 = vadd.xlane.f32.xlu0 %v679
  %v701 = vpop.xlane.xlu0 %700
  %702 = vadd.xlane.f32.xlu0 %v680
  %v703 = vpop.xlane.xlu0 %702
  %704 = vadd.xlane.f32.xlu0 %v681
  %v705 = vpop.xlane.xlu0 %704
  %706 = vadd.xlane.f32.xlu0 %v682
  %v707 = vpop.xlane.xlu0 %706
  %708 = vadd.xlane.f32.xlu0 %v683
  %v709 = vpop.xlane.xlu0 %708
  %710 = vadd.xlane.f32.xlu0 %v684
  %v711 = vpop.xlane.xlu0 %710
  %712 = vadd.xlane.f32.xlu0 %v685
  %v713 = vpop.xlane.xlu0 %712
  %714 = vadd.xlane.f32.xlu0 %v686
  %v715 = vpop.xlane.xlu0 %714
  %716 = vadd.xlane.f32.xlu0 %v687
  %v717 = vpop.xlane.xlu0 %716
  %718 = vadd.xlane.f32.xlu0 %v688
  %v719 = vpop.xlane.xlu0 %718
  %720 = vadd.xlane.f32.xlu0 %v689
  %v721 = vpop.xlane.xlu0 %720
  %v722 = vadd.f32 %v658, %v691
  %v723 = vadd.f32 %v659, %v693
  %v724 = vadd.f32 %v660, %v695
  %v725 = vadd.f32 %v661, %v697
  %v726 = vadd.f32 %v662, %v699
  %v727 = vadd.f32 %v663, %v701
  %v728 = vadd.f32 %v664, %v703
  %v729 = vadd.f32 %v665, %v705
  %v730 = vadd.f32 %v666, %v707
  %v731 = vadd.f32 %v667, %v709
  %v732 = vadd.f32 %v668, %v711
  %v733 = vadd.f32 %v669, %v713
  %v734 = vadd.f32 %v670, %v715
  %v735 = vadd.f32 %v671, %v717
  %v736 = vadd.f32 %v672, %v719
  %v737 = vadd.f32 %v673, %v721
  %738 = vadd.xlane.f32.xlu0 %v627
  %v739 = vpop.xlane.xlu0 %738
  %740 = vadd.xlane.f32.xlu0 %v629
  %v741 = vpop.xlane.xlu0 %740
  %742 = vadd.xlane.f32.xlu0 %v631
  %v743 = vpop.xlane.xlu0 %742
  %744 = vadd.xlane.f32.xlu0 %v633
  %v745 = vpop.xlane.xlu0 %744
  %746 = vadd.xlane.f32.xlu0 %v635
  %v747 = vpop.xlane.xlu0 %746
  %748 = vadd.xlane.f32.xlu0 %v637
  %v749 = vpop.xlane.xlu0 %748
  %750 = vadd.xlane.f32.xlu0 %v639
  %v751 = vpop.xlane.xlu0 %750
  %752 = vadd.xlane.f32.xlu0 %v641
  %v753 = vpop.xlane.xlu0 %752
  %754 = vadd.xlane.f32.xlu0 %v643
  %v755 = vpop.xlane.xlu0 %754
  %756 = vadd.xlane.f32.xlu0 %v645
  %v757 = vpop.xlane.xlu0 %756
  %758 = vadd.xlane.f32.xlu0 %v647
  %v759 = vpop.xlane.xlu0 %758
  %760 = vadd.xlane.f32.xlu0 %v649
  %v761 = vpop.xlane.xlu0 %760
  %762 = vadd.xlane.f32.xlu0 %v651
  %v763 = vpop.xlane.xlu0 %762
  %764 = vadd.xlane.f32.xlu0 %v653
  %v765 = vpop.xlane.xlu0 %764
  %766 = vadd.xlane.f32.xlu0 %v655
  %v767 = vpop.xlane.xlu0 %766
  %768 = vadd.xlane.f32.xlu0 %v657
  %v769 = vpop.xlane.xlu0 %768
  %v770 = vadd.f32 %v658, %v739
  %v771 = vadd.f32 %v659, %v741
  %v772 = vadd.f32 %v660, %v743
  %v773 = vadd.f32 %v661, %v745
  %v774 = vadd.f32 %v662, %v747
  %v775 = vadd.f32 %v663, %v749
  %v776 = vadd.f32 %v664, %v751
  %v777 = vadd.f32 %v665, %v753
  %v778 = vadd.f32 %v666, %v755
  %v779 = vadd.f32 %v667, %v757
  %v780 = vadd.f32 %v668, %v759
  %v781 = vadd.f32 %v669, %v761
  %v782 = vadd.f32 %v670, %v763
  %v783 = vadd.f32 %v671, %v765
  %v784 = vadd.f32 %v672, %v767
  %v785 = vadd.f32 %v673, %v769
  %786 = vadd.xlane.f32.xlu0 %v450
  %v787 = vpop.xlane.xlu0 %786
  %788 = vadd.xlane.f32.xlu0 %v451
  %v789 = vpop.xlane.xlu0 %788
  %790 = vadd.xlane.f32.xlu0 %v452
  %v791 = vpop.xlane.xlu0 %790
  %792 = vadd.xlane.f32.xlu0 %v453
  %v793 = vpop.xlane.xlu0 %792
  %794 = vadd.xlane.f32.xlu0 %v454
  %v795 = vpop.xlane.xlu0 %794
  %796 = vadd.xlane.f32.xlu0 %v455
  %v797 = vpop.xlane.xlu0 %796
  %798 = vadd.xlane.f32.xlu0 %v456
  %v799 = vpop.xlane.xlu0 %798
  %800 = vadd.xlane.f32.xlu0 %v457
  %v801 = vpop.xlane.xlu0 %800
  %802 = vadd.xlane.f32.xlu0 %v458
  %v803 = vpop.xlane.xlu0 %802
  %804 = vadd.xlane.f32.xlu0 %v459
  %v805 = vpop.xlane.xlu0 %804
  %806 = vadd.xlane.f32.xlu0 %v460
  %v807 = vpop.xlane.xlu0 %806
  %808 = vadd.xlane.f32.xlu0 %v461
  %v809 = vpop.xlane.xlu0 %808
  %810 = vadd.xlane.f32.xlu0 %v462
  %v811 = vpop.xlane.xlu0 %810
  %812 = vadd.xlane.f32.xlu0 %v463
  %v813 = vpop.xlane.xlu0 %812
  %814 = vadd.xlane.f32.xlu0 %v464
  %v815 = vpop.xlane.xlu0 %814
  %816 = vadd.xlane.f32.xlu0 %v465
  %v817 = vpop.xlane.xlu0 %816
  %v818 = vadd.f32 %v787, 0.0
  %v819 = vadd.f32 %v789, 0.0
  %v820 = vadd.f32 %v791, 0.0
  %v821 = vadd.f32 %v793, 0.0
  %v822 = vadd.f32 %v795, 0.0
  %v823 = vadd.f32 %v797, 0.0
  %v824 = vadd.f32 %v799, 0.0
  %v825 = vadd.f32 %v801, 0.0
  %v826 = vadd.f32 %v803, 0.0
  %v827 = vadd.f32 %v805, 0.0
  %v828 = vadd.f32 %v807, 0.0
  %v829 = vadd.f32 %v809, 0.0
  %v830 = vadd.f32 %v811, 0.0
  %v831 = vadd.f32 %v813, 0.0
  %v832 = vadd.f32 %v815, 0.0
  %v833 = vadd.f32 %v817, 0.0
  %vm834 = vcmp.gt.f32.partialorder %v722, 0.0
  %vm835 = vcmp.gt.f32.partialorder %v723, 0.0
  %vm836 = vcmp.gt.f32.partialorder %v724, 0.0
  %vm837 = vcmp.gt.f32.partialorder %v725, 0.0
  %vm838 = vcmp.gt.f32.partialorder %v726, 0.0
  %vm839 = vcmp.gt.f32.partialorder %v727, 0.0
  %vm840 = vcmp.gt.f32.partialorder %v728, 0.0
  %vm841 = vcmp.gt.f32.partialorder %v729, 0.0
  %vm842 = vcmp.gt.f32.partialorder %v730, 0.0
  %vm843 = vcmp.gt.f32.partialorder %v731, 0.0
  %vm844 = vcmp.gt.f32.partialorder %v732, 0.0
  %vm845 = vcmp.gt.f32.partialorder %v733, 0.0
  %vm846 = vcmp.gt.f32.partialorder %v734, 0.0
  %vm847 = vcmp.gt.f32.partialorder %v735, 0.0
  %vm848 = vcmp.gt.f32.partialorder %v736, 0.0
  %vm849 = vcmp.gt.f32.partialorder %v737, 0.0
  %v850 = vsel %vm834, %v722, 1.0
  %v851 = vsel %vm835, %v723, 1.0
  %v852 = vsel %vm836, %v724, 1.0
  %v853 = vsel %vm837, %v725, 1.0
  %v854 = vsel %vm838, %v726, 1.0
  %v855 = vsel %vm839, %v727, 1.0
  %v856 = vsel %vm840, %v728, 1.0
  %v857 = vsel %vm841, %v729, 1.0
  %v858 = vsel %vm842, %v730, 1.0
  %v859 = vsel %vm843, %v731, 1.0
  %v860 = vsel %vm844, %v732, 1.0
  %v861 = vsel %vm845, %v733, 1.0
  %v862 = vsel %vm846, %v734, 1.0
  %v863 = vsel %vm847, %v735, 1.0
  %v864 = vsel %vm848, %v736, 1.0
  %v865 = vsel %vm849, %v737, 1.0
  %v866 = vrcp.pop %v850
  %v867 = vrcp.pop %v851
  %v868 = vrcp.pop %v852
  %v869 = vrcp.pop %v853
  %v870 = vrcp.pop %v854
  %v871 = vrcp.pop %v855
  %v872 = vrcp.pop %v856
  %v873 = vrcp.pop %v857
  %v874 = vrcp.pop %v858
  %v875 = vrcp.pop %v859
  %v876 = vrcp.pop %v860
  %v877 = vrcp.pop %v861
  %v878 = vrcp.pop %v862
  %v879 = vrcp.pop %v863
  %v880 = vrcp.pop %v864
  %v881 = vrcp.pop %v865
  %v882 = vmul.f32 %v850, %v866
  %v883 = vmul.f32 %v851, %v867
  %v884 = vmul.f32 %v852, %v868
  %v885 = vmul.f32 %v853, %v869
  %v886 = vmul.f32 %v854, %v870
  %v887 = vmul.f32 %v855, %v871
  %v888 = vmul.f32 %v856, %v872
  %v889 = vmul.f32 %v857, %v873
  %v890 = vmul.f32 %v858, %v874
  %v891 = vmul.f32 %v859, %v875
  %v892 = vmul.f32 %v860, %v876
  %v893 = vmul.f32 %v861, %v877
  %v894 = vmul.f32 %v862, %v878
  %v895 = vmul.f32 %v863, %v879
  %v896 = vmul.f32 %v864, %v880
  %v897 = vmul.f32 %v865, %v881
  %v898 = vsub.f32 2.0, %v882
  %v899 = vsub.f32 2.0, %v883
  %v900 = vsub.f32 2.0, %v884
  %v901 = vsub.f32 2.0, %v885
  %v902 = vsub.f32 2.0, %v886
  %v903 = vsub.f32 2.0, %v887
  %v904 = vsub.f32 2.0, %v888
  %v905 = vsub.f32 2.0, %v889
  %v906 = vsub.f32 2.0, %v890
  %v907 = vsub.f32 2.0, %v891
  %v908 = vsub.f32 2.0, %v892
  %v909 = vsub.f32 2.0, %v893
  %v910 = vsub.f32 2.0, %v894
  %v911 = vsub.f32 2.0, %v895
  %v912 = vsub.f32 2.0, %v896
  %v913 = vsub.f32 2.0, %v897
  %v914 = vmul.f32 %v866, %v898
  %v915 = vmul.f32 %v867, %v899
  %v916 = vmul.f32 %v868, %v900
  %v917 = vmul.f32 %v869, %v901
  %v918 = vmul.f32 %v870, %v902
  %v919 = vmul.f32 %v871, %v903
  %v920 = vmul.f32 %v872, %v904
  %v921 = vmul.f32 %v873, %v905
  %v922 = vmul.f32 %v874, %v906
  %v923 = vmul.f32 %v875, %v907
  %v924 = vmul.f32 %v876, %v908
  %v925 = vmul.f32 %v877, %v909
  %v926 = vmul.f32 %v878, %v910
  %v927 = vmul.f32 %v879, %v911
  %v928 = vmul.f32 %v880, %v912
  %v929 = vmul.f32 %v881, %v913
  %v930 = vsub.f32 %v770, %v722
  %v931 = vsub.f32 %v771, %v723
  %v932 = vsub.f32 %v772, %v724
  %v933 = vsub.f32 %v773, %v725
  %v934 = vsub.f32 %v774, %v726
  %v935 = vsub.f32 %v775, %v727
  %v936 = vsub.f32 %v776, %v728
  %v937 = vsub.f32 %v777, %v729
  %v938 = vsub.f32 %v778, %v730
  %v939 = vsub.f32 %v779, %v731
  %v940 = vsub.f32 %v780, %v732
  %v941 = vsub.f32 %v781, %v733
  %v942 = vsub.f32 %v782, %v734
  %v943 = vsub.f32 %v783, %v735
  %v944 = vsub.f32 %v784, %v736
  %v945 = vsub.f32 %v785, %v737
  %vm946 = vcmp.gt.f32.partialorder %v930, 0.0
  %vm947 = vcmp.gt.f32.partialorder %v931, 0.0
  %vm948 = vcmp.gt.f32.partialorder %v932, 0.0
  %vm949 = vcmp.gt.f32.partialorder %v933, 0.0
  %vm950 = vcmp.gt.f32.partialorder %v934, 0.0
  %vm951 = vcmp.gt.f32.partialorder %v935, 0.0
  %vm952 = vcmp.gt.f32.partialorder %v936, 0.0
  %vm953 = vcmp.gt.f32.partialorder %v937, 0.0
  %vm954 = vcmp.gt.f32.partialorder %v938, 0.0
  %vm955 = vcmp.gt.f32.partialorder %v939, 0.0
  %vm956 = vcmp.gt.f32.partialorder %v940, 0.0
  %vm957 = vcmp.gt.f32.partialorder %v941, 0.0
  %vm958 = vcmp.gt.f32.partialorder %v942, 0.0
  %vm959 = vcmp.gt.f32.partialorder %v943, 0.0
  %vm960 = vcmp.gt.f32.partialorder %v944, 0.0
  %vm961 = vcmp.gt.f32.partialorder %v945, 0.0
  %v962 = vsel %vm946, %v930, 1.0
  %v963 = vsel %vm947, %v931, 1.0
  %v964 = vsel %vm948, %v932, 1.0
  %v965 = vsel %vm949, %v933, 1.0
  %v966 = vsel %vm950, %v934, 1.0
  %v967 = vsel %vm951, %v935, 1.0
  %v968 = vsel %vm952, %v936, 1.0
  %v969 = vsel %vm953, %v937, 1.0
  %v970 = vsel %vm954, %v938, 1.0
  %v971 = vsel %vm955, %v939, 1.0
  %v972 = vsel %vm956, %v940, 1.0
  %v973 = vsel %vm957, %v941, 1.0
  %v974 = vsel %vm958, %v942, 1.0
  %v975 = vsel %vm959, %v943, 1.0
  %v976 = vsel %vm960, %v944, 1.0
  %v977 = vsel %vm961, %v945, 1.0
  %v978 = vrcp.pop %v962
  %v979 = vrcp.pop %v963
  %v980 = vrcp.pop %v964
  %v981 = vrcp.pop %v965
  %v982 = vrcp.pop %v966
  %v983 = vrcp.pop %v967
  %v984 = vrcp.pop %v968
  %v985 = vrcp.pop %v969
  %v986 = vrcp.pop %v970
  %v987 = vrcp.pop %v971
  %v988 = vrcp.pop %v972
  %v989 = vrcp.pop %v973
  %v990 = vrcp.pop %v974
  %v991 = vrcp.pop %v975
  %v992 = vrcp.pop %v976
  %v993 = vrcp.pop %v977
  %v994 = vmul.f32 %v962, %v978
  %v995 = vmul.f32 %v963, %v979
  %v996 = vmul.f32 %v964, %v980
  %v997 = vmul.f32 %v965, %v981
  %v998 = vmul.f32 %v966, %v982
  %v999 = vmul.f32 %v967, %v983
  %v1000 = vmul.f32 %v968, %v984
  %v1001 = vmul.f32 %v969, %v985
  %v1002 = vmul.f32 %v970, %v986
  %v1003 = vmul.f32 %v971, %v987
  %v1004 = vmul.f32 %v972, %v988
  %v1005 = vmul.f32 %v973, %v989
  %v1006 = vmul.f32 %v974, %v990
  %v1007 = vmul.f32 %v975, %v991
  %v1008 = vmul.f32 %v976, %v992
  %v1009 = vmul.f32 %v977, %v993
  %v1010 = vsub.f32 2.0, %v994
  %v1011 = vsub.f32 2.0, %v995
  %v1012 = vsub.f32 2.0, %v996
  %v1013 = vsub.f32 2.0, %v997
  %v1014 = vsub.f32 2.0, %v998
  %v1015 = vsub.f32 2.0, %v999
  %v1016 = vsub.f32 2.0, %v1000
  %v1017 = vsub.f32 2.0, %v1001
  %v1018 = vsub.f32 2.0, %v1002
  %v1019 = vsub.f32 2.0, %v1003
  %v1020 = vsub.f32 2.0, %v1004
  %v1021 = vsub.f32 2.0, %v1005
  %v1022 = vsub.f32 2.0, %v1006
  %v1023 = vsub.f32 2.0, %v1007
  %v1024 = vsub.f32 2.0, %v1008
  %v1025 = vsub.f32 2.0, %v1009
  %v1026 = vmul.f32 %v978, %v1010
  %v1027 = vmul.f32 %v979, %v1011
  %v1028 = vmul.f32 %v980, %v1012
  %v1029 = vmul.f32 %v981, %v1013
  %v1030 = vmul.f32 %v982, %v1014
  %v1031 = vmul.f32 %v983, %v1015
  %v1032 = vmul.f32 %v984, %v1016
  %v1033 = vmul.f32 %v985, %v1017
  %v1034 = vmul.f32 %v986, %v1018
  %v1035 = vmul.f32 %v987, %v1019
  %v1036 = vmul.f32 %v988, %v1020
  %v1037 = vmul.f32 %v989, %v1021
  %v1038 = vmul.f32 %v990, %v1022
  %v1039 = vmul.f32 %v991, %v1023
  %v1040 = vmul.f32 %v992, %v1024
  %v1041 = vmul.f32 %v993, %v1025
  %v1042 = vld [vmem:[#allocation2] sm:$0xff]
  %v1043 = vld [vmem:[#allocation2 + $0x8] sm:$0xff]
  %v1044 = vld [vmem:[#allocation2 + $0x10] sm:$0xff]
  %v1045 = vld [vmem:[#allocation2 + $0x18] sm:$0xff]
  %v1046 = vld [vmem:[#allocation2 + $0x20] sm:$0xff]
  %v1047 = vld [vmem:[#allocation2 + $0x28] sm:$0xff]
  %v1048 = vld [vmem:[#allocation2 + $0x30] sm:$0xff]
  %v1049 = vld [vmem:[#allocation2 + $0x38] sm:$0xff]
  %v1050 = vld [vmem:[#allocation2 + $0x40] sm:$0xff]
  %v1051 = vld [vmem:[#allocation2 + $0x48] sm:$0xff]
  %v1052 = vld [vmem:[#allocation2 + $0x50] sm:$0xff]
  %v1053 = vld [vmem:[#allocation2 + $0x58] sm:$0xff]
  %v1054 = vld [vmem:[#allocation2 + $0x60] sm:$0xff]
  %v1055 = vld [vmem:[#allocation2 + $0x68] sm:$0xff]
  %v1056 = vld [vmem:[#allocation2 + $0x70] sm:$0xff]
  %v1057 = vld [vmem:[#allocation2 + $0x78] sm:$0xff]
  %v1058 = vsub.f32 %v1042, %v531
  %v1059 = vsub.f32 %v1043, %v533
  %v1060 = vsub.f32 %v1044, %v535
  %v1061 = vsub.f32 %v1045, %v537
  %v1062 = vsub.f32 %v1046, %v539
  %v1063 = vsub.f32 %v1047, %v541
  %v1064 = vsub.f32 %v1048, %v543
  %v1065 = vsub.f32 %v1049, %v545
  %v1066 = vsub.f32 %v1050, %v547
  %v1067 = vsub.f32 %v1051, %v549
  %v1068 = vsub.f32 %v1052, %v551
  %v1069 = vsub.f32 %v1053, %v553
  %v1070 = vsub.f32 %v1054, %v555
  %v1071 = vsub.f32 %v1055, %v557
  %v1072 = vsub.f32 %v1056, %v559
  %v1073 = vsub.f32 %v1057, %v561
  %v1074 = vmul.f32 %v1058, 1.442695
  %v1075 = vpow.pop %v1074
  %v1076 = vmul.f32 %v1059, 1.442695
  %v1077 = vpow.pop %v1076
  %v1078 = vmul.f32 %v1060, 1.442695
  %v1079 = vpow.pop %v1078
  %v1080 = vmul.f32 %v1061, 1.442695
  %v1081 = vpow.pop %v1080
  %v1082 = vmul.f32 %v1062, 1.442695
  %v1083 = vpow.pop %v1082
  %v1084 = vmul.f32 %v1063, 1.442695
  %v1085 = vpow.pop %v1084
  %v1086 = vmul.f32 %v1064, 1.442695
  %v1087 = vpow.pop %v1086
  %v1088 = vmul.f32 %v1065, 1.442695
  %v1089 = vpow.pop %v1088
  %v1090 = vmul.f32 %v1066, 1.442695
  %v1091 = vpow.pop %v1090
  %v1092 = vmul.f32 %v1067, 1.442695
  %v1093 = vpow.pop %v1092
  %v1094 = vmul.f32 %v1068, 1.442695
  %v1095 = vpow.pop %v1094
  %v1096 = vmul.f32 %v1069, 1.442695
  %v1097 = vpow.pop %v1096
  %v1098 = vmul.f32 %v1070, 1.442695
  %v1099 = vpow.pop %v1098
  %v1100 = vmul.f32 %v1071, 1.442695
  %v1101 = vpow.pop %v1100
  %v1102 = vmul.f32 %v1072, 1.442695
  %v1103 = vpow.pop %v1102
  %v1104 = vmul.f32 %v1073, 1.442695
  %v1105 = vpow.pop %v1104
  %v1106 = vsel %vm333, %v1075, 0.0
  %v1107 = vsel %vm334, %v1077, 0.0
  %v1108 = vsel %vm335, %v1079, 0.0
  %v1109 = vsel %vm336, %v1081, 0.0
  %v1110 = vsel %vm337, %v1083, 0.0
  %v1111 = vsel %vm338, %v1085, 0.0
  %v1112 = vsel %vm339, %v1087, 0.0
  %v1113 = vsel %vm340, %v1089, 0.0
  %v1114 = vsel %vm341, %v1091, 0.0
  %v1115 = vsel %vm342, %v1093, 0.0
  %v1116 = vsel %vm343, %v1095, 0.0
  %v1117 = vsel %vm344, %v1097, 0.0
  %v1118 = vsel %vm345, %v1099, 0.0
  %v1119 = vsel %vm346, %v1101, 0.0
  %v1120 = vsel %vm347, %v1103, 0.0
  %v1121 = vsel %vm348, %v1105, 0.0
  %v1122 = vmul.f32 %v1106, %v450
  %v1123 = vmul.f32 %v1107, %v451
  %v1124 = vmul.f32 %v1108, %v452
  %v1125 = vmul.f32 %v1109, %v453
  %v1126 = vmul.f32 %v1110, %v454
  %v1127 = vmul.f32 %v1111, %v455
  %v1128 = vmul.f32 %v1112, %v456
  %v1129 = vmul.f32 %v1113, %v457
  %v1130 = vmul.f32 %v1114, %v458
  %v1131 = vmul.f32 %v1115, %v459
  %v1132 = vmul.f32 %v1116, %v460
  %v1133 = vmul.f32 %v1117, %v461
  %v1134 = vmul.f32 %v1118, %v462
  %v1135 = vmul.f32 %v1119, %v463
  %v1136 = vmul.f32 %v1120, %v464
  %v1137 = vmul.f32 %v1121, %v465
  %v1138 = vsel %vm333, 1, 0
  %v1139 = vsel %vm334, 1, 0
  %v1140 = vsel %vm335, 1, 0
  %v1141 = vsel %vm336, 1, 0
  %v1142 = vsel %vm337, 1, 0
  %v1143 = vsel %vm338, 1, 0
  %v1144 = vsel %vm339, 1, 0
  %v1145 = vsel %vm340, 1, 0
  %v1146 = vsel %vm341, 1, 0
  %v1147 = vsel %vm342, 1, 0
  %v1148 = vsel %vm343, 1, 0
  %v1149 = vsel %vm344, 1, 0
  %v1150 = vsel %vm345, 1, 0
  %v1151 = vsel %vm346, 1, 0
  %v1152 = vsel %vm347, 1, 0
  %v1153 = vsel %vm348, 1, 0
  %v1154 = vcvt.s32.f32 %v1138
  %v1155 = vcvt.s32.f32 %v1139
  %v1156 = vcvt.s32.f32 %v1140
  %v1157 = vcvt.s32.f32 %v1141
  %v1158 = vcvt.s32.f32 %v1142
  %v1159 = vcvt.s32.f32 %v1143
  %v1160 = vcvt.s32.f32 %v1144
  %v1161 = vcvt.s32.f32 %v1145
  %v1162 = vcvt.s32.f32 %v1146
  %v1163 = vcvt.s32.f32 %v1147
  %v1164 = vcvt.s32.f32 %v1148
  %v1165 = vcvt.s32.f32 %v1149
  %v1166 = vcvt.s32.f32 %v1150
  %v1167 = vcvt.s32.f32 %v1151
  %v1168 = vcvt.s32.f32 %v1152
  %v1169 = vcvt.s32.f32 %v1153
  %v1170 = vsub.f32 %v1106, %v1122
  %v1171 = vsub.f32 %v1107, %v1123
  %v1172 = vsub.f32 %v1108, %v1124
  %v1173 = vsub.f32 %v1109, %v1125
  %v1174 = vsub.f32 %v1110, %v1126
  %v1175 = vsub.f32 %v1111, %v1127
  %v1176 = vsub.f32 %v1112, %v1128
  %v1177 = vsub.f32 %v1113, %v1129
  %v1178 = vsub.f32 %v1114, %v1130
  %v1179 = vsub.f32 %v1115, %v1131
  %v1180 = vsub.f32 %v1116, %v1132
  %v1181 = vsub.f32 %v1117, %v1133
  %v1182 = vsub.f32 %v1118, %v1134
  %v1183 = vsub.f32 %v1119, %v1135
  %v1184 = vsub.f32 %v1120, %v1136
  %v1185 = vsub.f32 %v1121, %v1137
  %v1186 = vmul.f32 %v1170, %v1026
  %v1187 = vmul.f32 %v1171, %v1027
  %v1188 = vmul.f32 %v1172, %v1028
  %v1189 = vmul.f32 %v1173, %v1029
  %v1190 = vmul.f32 %v1174, %v1030
  %v1191 = vmul.f32 %v1175, %v1031
  %v1192 = vmul.f32 %v1176, %v1032
  %v1193 = vmul.f32 %v1177, %v1033
  %v1194 = vmul.f32 %v1178, %v1034
  %v1195 = vmul.f32 %v1179, %v1035
  %v1196 = vmul.f32 %v1180, %v1036
  %v1197 = vmul.f32 %v1181, %v1037
  %v1198 = vmul.f32 %v1182, %v1038
  %v1199 = vmul.f32 %v1183, %v1039
  %v1200 = vmul.f32 %v1184, %v1040
  %v1201 = vmul.f32 %v1185, %v1041
  %v1202 = vadd.f32 %v1154, %v1186
  %v1203 = vadd.f32 %v1155, %v1187
  %v1204 = vadd.f32 %v1156, %v1188
  %v1205 = vadd.f32 %v1157, %v1189
  %v1206 = vadd.f32 %v1158, %v1190
  %v1207 = vadd.f32 %v1159, %v1191
  %v1208 = vadd.f32 %v1160, %v1192
  %v1209 = vadd.f32 %v1161, %v1193
  %v1210 = vadd.f32 %v1162, %v1194
  %v1211 = vadd.f32 %v1163, %v1195
  %v1212 = vadd.f32 %v1164, %v1196
  %v1213 = vadd.f32 %v1165, %v1197
  %v1214 = vadd.f32 %v1166, %v1198
  %v1215 = vadd.f32 %v1167, %v1199
  %v1216 = vadd.f32 %v1168, %v1200
  %v1217 = vadd.f32 %v1169, %v1201
  %v1218 = vmul.f32 %v1122, %v914
  %v1219 = vmul.f32 %v1123, %v915
  %v1220 = vmul.f32 %v1124, %v916
  %v1221 = vmul.f32 %v1125, %v917
  %v1222 = vmul.f32 %v1126, %v918
  %v1223 = vmul.f32 %v1127, %v919
  %v1224 = vmul.f32 %v1128, %v920
  %v1225 = vmul.f32 %v1129, %v921
  %v1226 = vmul.f32 %v1130, %v922
  %v1227 = vmul.f32 %v1131, %v923
  %v1228 = vmul.f32 %v1132, %v924
  %v1229 = vmul.f32 %v1133, %v925
  %v1230 = vmul.f32 %v1134, %v926
  %v1231 = vmul.f32 %v1135, %v927
  %v1232 = vmul.f32 %v1136, %v928
  %v1233 = vmul.f32 %v1137, %v929
  %v1234 = vsub.f32 %v1202, %v1218
  %v1235 = vsub.f32 %v1203, %v1219
  %v1236 = vsub.f32 %v1204, %v1220
  %v1237 = vsub.f32 %v1205, %v1221
  %v1238 = vsub.f32 %v1206, %v1222
  %v1239 = vsub.f32 %v1207, %v1223
  %v1240 = vsub.f32 %v1208, %v1224
  %v1241 = vsub.f32 %v1209, %v1225
  %v1242 = vsub.f32 %v1210, %v1226
  %v1243 = vsub.f32 %v1211, %v1227
  %v1244 = vsub.f32 %v1212, %v1228
  %v1245 = vsub.f32 %v1213, %v1229
  %v1246 = vsub.f32 %v1214, %v1230
  %v1247 = vsub.f32 %v1215, %v1231
  %v1248 = vsub.f32 %v1216, %v1232
  %v1249 = vsub.f32 %v1217, %v1233
  %v1250 = vmul.f32 %v1234, %v450
  %v1251 = vmul.f32 %v1235, %v451
  %v1252 = vmul.f32 %v1236, %v452
  %v1253 = vmul.f32 %v1237, %v453
  %v1254 = vmul.f32 %v1238, %v454
  %v1255 = vmul.f32 %v1239, %v455
  %v1256 = vmul.f32 %v1240, %v456
  %v1257 = vmul.f32 %v1241, %v457
  %v1258 = vmul.f32 %v1242, %v458
  %v1259 = vmul.f32 %v1243, %v459
  %v1260 = vmul.f32 %v1244, %v460
  %v1261 = vmul.f32 %v1245, %v461
  %v1262 = vmul.f32 %v1246, %v462
  %v1263 = vmul.f32 %v1247, %v463
  %v1264 = vmul.f32 %v1248, %v464
  %v1265 = vmul.f32 %v1249, %v465
  %v1266 = vsub.f32 %v1042, %v483
  %v1267 = vsub.f32 %v1043, %v485
  %v1268 = vsub.f32 %v1044, %v487
  %v1269 = vsub.f32 %v1045, %v489
  %v1270 = vsub.f32 %v1046, %v491
  %v1271 = vsub.f32 %v1047, %v493
  %v1272 = vsub.f32 %v1048, %v495
  %v1273 = vsub.f32 %v1049, %v497
  %v1274 = vsub.f32 %v1050, %v499
  %v1275 = vsub.f32 %v1051, %v501
  %v1276 = vsub.f32 %v1052, %v503
  %v1277 = vsub.f32 %v1053, %v505
  %v1278 = vsub.f32 %v1054, %v507
  %v1279 = vsub.f32 %v1055, %v509
  %v1280 = vsub.f32 %v1056, %v511
  %v1281 = vsub.f32 %v1057, %v513
  %v1282 = vmul.f32 %v1266, 14.285714
  %v1283 = vmul.f32 %v1267, 14.285714
  %v1284 = vmul.f32 %v1268, 14.285714
  %v1285 = vmul.f32 %v1269, 14.285714
  %v1286 = vmul.f32 %v1270, 14.285714
  %v1287 = vmul.f32 %v1271, 14.285714
  %v1288 = vmul.f32 %v1272, 14.285714
  %v1289 = vmul.f32 %v1273, 14.285714
  %v1290 = vmul.f32 %v1274, 14.285714
  %v1291 = vmul.f32 %v1275, 14.285714
  %v1292 = vmul.f32 %v1276, 14.285714
  %v1293 = vmul.f32 %v1277, 14.285714
  %v1294 = vmul.f32 %v1278, 14.285714
  %v1295 = vmul.f32 %v1279, 14.285714
  %v1296 = vmul.f32 %v1280, 14.285714
  %v1297 = vmul.f32 %v1281, 14.285714
  %v1298 = vmul.f32 %v1282, 1.442695
  %v1299 = vpow.pop %v1298
  %v1300 = vmul.f32 %v1283, 1.442695
  %v1301 = vpow.pop %v1300
  %v1302 = vmul.f32 %v1284, 1.442695
  %v1303 = vpow.pop %v1302
  %v1304 = vmul.f32 %v1285, 1.442695
  %v1305 = vpow.pop %v1304
  %v1306 = vmul.f32 %v1286, 1.442695
  %v1307 = vpow.pop %v1306
  %v1308 = vmul.f32 %v1287, 1.442695
  %v1309 = vpow.pop %v1308
  %v1310 = vmul.f32 %v1288, 1.442695
  %v1311 = vpow.pop %v1310
  %v1312 = vmul.f32 %v1289, 1.442695
  %v1313 = vpow.pop %v1312
  %v1314 = vmul.f32 %v1290, 1.442695
  %v1315 = vpow.pop %v1314
  %v1316 = vmul.f32 %v1291, 1.442695
  %v1317 = vpow.pop %v1316
  %v1318 = vmul.f32 %v1292, 1.442695
  %v1319 = vpow.pop %v1318
  %v1320 = vmul.f32 %v1293, 1.442695
  %v1321 = vpow.pop %v1320
  %v1322 = vmul.f32 %v1294, 1.442695
  %v1323 = vpow.pop %v1322
  %v1324 = vmul.f32 %v1295, 1.442695
  %v1325 = vpow.pop %v1324
  %v1326 = vmul.f32 %v1296, 1.442695
  %v1327 = vpow.pop %v1326
  %v1328 = vmul.f32 %v1297, 1.442695
  %v1329 = vpow.pop %v1328
  %v1330 = vmul.f32 %v1299, %v1234
  %v1331 = vmul.f32 %v1301, %v1235
  %v1332 = vmul.f32 %v1303, %v1236
  %v1333 = vmul.f32 %v1305, %v1237
  %v1334 = vmul.f32 %v1307, %v1238
  %v1335 = vmul.f32 %v1309, %v1239
  %v1336 = vmul.f32 %v1311, %v1240
  %v1337 = vmul.f32 %v1313, %v1241
  %v1338 = vmul.f32 %v1315, %v1242
  %v1339 = vmul.f32 %v1317, %v1243
  %v1340 = vmul.f32 %v1319, %v1244
  %v1341 = vmul.f32 %v1321, %v1245
  %v1342 = vmul.f32 %v1323, %v1246
  %v1343 = vmul.f32 %v1325, %v1247
  %v1344 = vmul.f32 %v1327, %v1248
  %v1345 = vmul.f32 %v1329, %v1249
  %1346 = vadd.xlane.f32.xlu0 %v1330
  %v1347 = vpop.xlane.xlu0 %1346
  %1348 = vadd.xlane.f32.xlu0 %v1331
  %v1349 = vpop.xlane.xlu0 %1348
  %1350 = vadd.xlane.f32.xlu0 %v1332
  %v1351 = vpop.xlane.xlu0 %1350
  %1352 = vadd.xlane.f32.xlu0 %v1333
  %v1353 = vpop.xlane.xlu0 %1352
  %1354 = vadd.xlane.f32.xlu0 %v1334
  %v1355 = vpop.xlane.xlu0 %1354
  %1356 = vadd.xlane.f32.xlu0 %v1335
  %v1357 = vpop.xlane.xlu0 %1356
  %1358 = vadd.xlane.f32.xlu0 %v1336
  %v1359 = vpop.xlane.xlu0 %1358
  %1360 = vadd.xlane.f32.xlu0 %v1337
  %v1361 = vpop.xlane.xlu0 %1360
  %1362 = vadd.xlane.f32.xlu0 %v1338
  %v1363 = vpop.xlane.xlu0 %1362
  %1364 = vadd.xlane.f32.xlu0 %v1339
  %v1365 = vpop.xlane.xlu0 %1364
  %1366 = vadd.xlane.f32.xlu0 %v1340
  %v1367 = vpop.xlane.xlu0 %1366
  %1368 = vadd.xlane.f32.xlu0 %v1341
  %v1369 = vpop.xlane.xlu0 %1368
  %1370 = vadd.xlane.f32.xlu0 %v1342
  %v1371 = vpop.xlane.xlu0 %1370
  %1372 = vadd.xlane.f32.xlu0 %v1343
  %v1373 = vpop.xlane.xlu0 %1372
  %1374 = vadd.xlane.f32.xlu0 %v1344
  %v1375 = vpop.xlane.xlu0 %1374
  %1376 = vadd.xlane.f32.xlu0 %v1345
  %v1377 = vpop.xlane.xlu0 %1376
  %v1378 = vadd.f32 %v1347, 0.0
  %v1379 = vadd.f32 %v1349, 0.0
  %v1380 = vadd.f32 %v1351, 0.0
  %v1381 = vadd.f32 %v1353, 0.0
  %v1382 = vadd.f32 %v1355, 0.0
  %v1383 = vadd.f32 %v1357, 0.0
  %v1384 = vadd.f32 %v1359, 0.0
  %v1385 = vadd.f32 %v1361, 0.0
  %v1386 = vadd.f32 %v1363, 0.0
  %v1387 = vadd.f32 %v1365, 0.0
  %v1388 = vadd.f32 %v1367, 0.0
  %v1389 = vadd.f32 %v1369, 0.0
  %v1390 = vadd.f32 %v1371, 0.0
  %v1391 = vadd.f32 %v1373, 0.0
  %v1392 = vadd.f32 %v1375, 0.0
  %v1393 = vadd.f32 %v1377, 0.0
  %v1394 = vmul.f32 %v1282, %v1250
  %v1395 = vmul.f32 %v1283, %v1251
  %v1396 = vmul.f32 %v1284, %v1252
  %v1397 = vmul.f32 %v1285, %v1253
  %v1398 = vmul.f32 %v1286, %v1254
  %v1399 = vmul.f32 %v1287, %v1255
  %v1400 = vmul.f32 %v1288, %v1256
  %v1401 = vmul.f32 %v1289, %v1257
  %v1402 = vmul.f32 %v1290, %v1258
  %v1403 = vmul.f32 %v1291, %v1259
  %v1404 = vmul.f32 %v1292, %v1260
  %v1405 = vmul.f32 %v1293, %v1261
  %v1406 = vmul.f32 %v1294, %v1262
  %v1407 = vmul.f32 %v1295, %v1263
  %v1408 = vmul.f32 %v1296, %v1264
  %v1409 = vmul.f32 %v1297, %v1265
  %1410 = vadd.xlane.f32.xlu0 %v1394
  %v1411 = vpop.xlane.xlu0 %1410
  %1412 = vadd.xlane.f32.xlu0 %v1395
  %v1413 = vpop.xlane.xlu0 %1412
  %1414 = vadd.xlane.f32.xlu0 %v1396
  %v1415 = vpop.xlane.xlu0 %1414
  %1416 = vadd.xlane.f32.xlu0 %v1397
  %v1417 = vpop.xlane.xlu0 %1416
  %1418 = vadd.xlane.f32.xlu0 %v1398
  %v1419 = vpop.xlane.xlu0 %1418
  %1420 = vadd.xlane.f32.xlu0 %v1399
  %v1421 = vpop.xlane.xlu0 %1420
  %1422 = vadd.xlane.f32.xlu0 %v1400
  %v1423 = vpop.xlane.xlu0 %1422
  %1424 = vadd.xlane.f32.xlu0 %v1401
  %v1425 = vpop.xlane.xlu0 %1424
  %1426 = vadd.xlane.f32.xlu0 %v1402
  %v1427 = vpop.xlane.xlu0 %1426
  %1428 = vadd.xlane.f32.xlu0 %v1403
  %v1429 = vpop.xlane.xlu0 %1428
  %1430 = vadd.xlane.f32.xlu0 %v1404
  %v1431 = vpop.xlane.xlu0 %1430
  %1432 = vadd.xlane.f32.xlu0 %v1405
  %v1433 = vpop.xlane.xlu0 %1432
  %1434 = vadd.xlane.f32.xlu0 %v1406
  %v1435 = vpop.xlane.xlu0 %1434
  %1436 = vadd.xlane.f32.xlu0 %v1407
  %v1437 = vpop.xlane.xlu0 %1436
  %1438 = vadd.xlane.f32.xlu0 %v1408
  %v1439 = vpop.xlane.xlu0 %1438
  %1440 = vadd.xlane.f32.xlu0 %v1409
  %v1441 = vpop.xlane.xlu0 %1440
  %v1442 = vadd.f32 %v1411, 0.0
  %v1443 = vadd.f32 %v1413, 0.0
  %v1444 = vadd.f32 %v1415, 0.0
  %v1445 = vadd.f32 %v1417, 0.0
  %v1446 = vadd.f32 %v1419, 0.0
  %v1447 = vadd.f32 %v1421, 0.0
  %v1448 = vadd.f32 %v1423, 0.0
  %v1449 = vadd.f32 %v1425, 0.0
  %v1450 = vadd.f32 %v1427, 0.0
  %v1451 = vadd.f32 %v1429, 0.0
  %v1452 = vadd.f32 %v1431, 0.0
  %v1453 = vadd.f32 %v1433, 0.0
  %v1454 = vadd.f32 %v1435, 0.0
  %v1455 = vadd.f32 %v1437, 0.0
  %v1456 = vadd.f32 %v1439, 0.0
  %v1457 = vadd.f32 %v1441, 0.0
  %1458 = vadd.xlane.f32.xlu0 %v1250
  %v1459 = vpop.xlane.xlu0 %1458
  %1460 = vadd.xlane.f32.xlu0 %v1251
  %v1461 = vpop.xlane.xlu0 %1460
  %1462 = vadd.xlane.f32.xlu0 %v1252
  %v1463 = vpop.xlane.xlu0 %1462
  %1464 = vadd.xlane.f32.xlu0 %v1253
  %v1465 = vpop.xlane.xlu0 %1464
  %1466 = vadd.xlane.f32.xlu0 %v1254
  %v1467 = vpop.xlane.xlu0 %1466
  %1468 = vadd.xlane.f32.xlu0 %v1255
  %v1469 = vpop.xlane.xlu0 %1468
  %1470 = vadd.xlane.f32.xlu0 %v1256
  %v1471 = vpop.xlane.xlu0 %1470
  %1472 = vadd.xlane.f32.xlu0 %v1257
  %v1473 = vpop.xlane.xlu0 %1472
  %1474 = vadd.xlane.f32.xlu0 %v1258
  %v1475 = vpop.xlane.xlu0 %1474
  %1476 = vadd.xlane.f32.xlu0 %v1259
  %v1477 = vpop.xlane.xlu0 %1476
  %1478 = vadd.xlane.f32.xlu0 %v1260
  %v1479 = vpop.xlane.xlu0 %1478
  %1480 = vadd.xlane.f32.xlu0 %v1261
  %v1481 = vpop.xlane.xlu0 %1480
  %1482 = vadd.xlane.f32.xlu0 %v1262
  %v1483 = vpop.xlane.xlu0 %1482
  %1484 = vadd.xlane.f32.xlu0 %v1263
  %v1485 = vpop.xlane.xlu0 %1484
  %1486 = vadd.xlane.f32.xlu0 %v1264
  %v1487 = vpop.xlane.xlu0 %1486
  %1488 = vadd.xlane.f32.xlu0 %v1265
  %v1489 = vpop.xlane.xlu0 %1488
  %v1490 = vadd.f32 %v1459, 0.0
  %v1491 = vadd.f32 %v1461, 0.0
  %v1492 = vadd.f32 %v1463, 0.0
  %v1493 = vadd.f32 %v1465, 0.0
  %v1494 = vadd.f32 %v1467, 0.0
  %v1495 = vadd.f32 %v1469, 0.0
  %v1496 = vadd.f32 %v1471, 0.0
  %v1497 = vadd.f32 %v1473, 0.0
  %v1498 = vadd.f32 %v1475, 0.0
  %v1499 = vadd.f32 %v1477, 0.0
  %v1500 = vadd.f32 %v1479, 0.0
  %v1501 = vadd.f32 %v1481, 0.0
  %v1502 = vadd.f32 %v1483, 0.0
  %v1503 = vadd.f32 %v1485, 0.0
  %v1504 = vadd.f32 %v1487, 0.0
  %v1505 = vadd.f32 %v1489, 0.0
  %v1506 = vlog2.pop %v1378
  %v1507 = vmul.f32 %v1506, 0.6931472
  %v1508 = vlog2.pop %v1379
  %v1509 = vmul.f32 %v1508, 0.6931472
  %v1510 = vlog2.pop %v1380
  %v1511 = vmul.f32 %v1510, 0.6931472
  %v1512 = vlog2.pop %v1381
  %v1513 = vmul.f32 %v1512, 0.6931472
  %v1514 = vlog2.pop %v1382
  %v1515 = vmul.f32 %v1514, 0.6931472
  %v1516 = vlog2.pop %v1383
  %v1517 = vmul.f32 %v1516, 0.6931472
  %v1518 = vlog2.pop %v1384
  %v1519 = vmul.f32 %v1518, 0.6931472
  %v1520 = vlog2.pop %v1385
  %v1521 = vmul.f32 %v1520, 0.6931472
  %v1522 = vlog2.pop %v1386
  %v1523 = vmul.f32 %v1522, 0.6931472
  %v1524 = vlog2.pop %v1387
  %v1525 = vmul.f32 %v1524, 0.6931472
  %v1526 = vlog2.pop %v1388
  %v1527 = vmul.f32 %v1526, 0.6931472
  %v1528 = vlog2.pop %v1389
  %v1529 = vmul.f32 %v1528, 0.6931472
  %v1530 = vlog2.pop %v1390
  %v1531 = vmul.f32 %v1530, 0.6931472
  %v1532 = vlog2.pop %v1391
  %v1533 = vmul.f32 %v1532, 0.6931472
  %v1534 = vlog2.pop %v1392
  %v1535 = vmul.f32 %v1534, 0.6931472
  %v1536 = vlog2.pop %v1393
  %v1537 = vmul.f32 %v1536, 0.6931472
  %v1538 = vmul.f32 %v1507, %v1490
  %v1539 = vmul.f32 %v1509, %v1491
  %v1540 = vmul.f32 %v1511, %v1492
  %v1541 = vmul.f32 %v1513, %v1493
  %v1542 = vmul.f32 %v1515, %v1494
  %v1543 = vmul.f32 %v1517, %v1495
  %v1544 = vmul.f32 %v1519, %v1496
  %v1545 = vmul.f32 %v1521, %v1497
  %v1546 = vmul.f32 %v1523, %v1498
  %v1547 = vmul.f32 %v1525, %v1499
  %v1548 = vmul.f32 %v1527, %v1500
  %v1549 = vmul.f32 %v1529, %v1501
  %v1550 = vmul.f32 %v1531, %v1502
  %v1551 = vmul.f32 %v1533, %v1503
  %v1552 = vmul.f32 %v1535, %v1504
  %v1553 = vmul.f32 %v1537, %v1505
  %v1554 = vsub.f32 %v1442, %v1538
  %v1555 = vsub.f32 %v1443, %v1539
  %v1556 = vsub.f32 %v1444, %v1540
  %v1557 = vsub.f32 %v1445, %v1541
  %v1558 = vsub.f32 %v1446, %v1542
  %v1559 = vsub.f32 %v1447, %v1543
  %v1560 = vsub.f32 %v1448, %v1544
  %v1561 = vsub.f32 %v1449, %v1545
  %v1562 = vsub.f32 %v1450, %v1546
  %v1563 = vsub.f32 %v1451, %v1547
  %v1564 = vsub.f32 %v1452, %v1548
  %v1565 = vsub.f32 %v1453, %v1549
  %v1566 = vsub.f32 %v1454, %v1550
  %v1567 = vsub.f32 %v1455, %v1551
  %v1568 = vsub.f32 %v1456, %v1552
  %v1569 = vsub.f32 %v1457, %v1553
  %v1570 = vsub.f32 0.0, %v1554
  %v1571 = vsub.f32 0.0, %v1555
  %v1572 = vsub.f32 0.0, %v1556
  %v1573 = vsub.f32 0.0, %v1557
  %v1574 = vsub.f32 0.0, %v1558
  %v1575 = vsub.f32 0.0, %v1559
  %v1576 = vsub.f32 0.0, %v1560
  %v1577 = vsub.f32 0.0, %v1561
  %v1578 = vsub.f32 0.0, %v1562
  %v1579 = vsub.f32 0.0, %v1563
  %v1580 = vsub.f32 0.0, %v1564
  %v1581 = vsub.f32 0.0, %v1565
  %v1582 = vsub.f32 0.0, %v1566
  %v1583 = vsub.f32 0.0, %v1567
  %v1584 = vsub.f32 0.0, %v1568
  %v1585 = vsub.f32 0.0, %v1569
  %v1586 = vrcp.pop %v818
  %v1587 = vmul.f32 %v1570, %v1586
  %v1588 = vrcp.pop %v819
  %v1589 = vmul.f32 %v1571, %v1588
  %v1590 = vrcp.pop %v820
  %v1591 = vmul.f32 %v1572, %v1590
  %v1592 = vrcp.pop %v821
  %v1593 = vmul.f32 %v1573, %v1592
  %v1594 = vrcp.pop %v822
  %v1595 = vmul.f32 %v1574, %v1594
  %v1596 = vrcp.pop %v823
  %v1597 = vmul.f32 %v1575, %v1596
  %v1598 = vrcp.pop %v824
  %v1599 = vmul.f32 %v1576, %v1598
  %v1600 = vrcp.pop %v825
  %v1601 = vmul.f32 %v1577, %v1600
  %v1602 = vrcp.pop %v826
  %v1603 = vmul.f32 %v1578, %v1602
  %v1604 = vrcp.pop %v827
  %v1605 = vmul.f32 %v1579, %v1604
  %v1606 = vrcp.pop %v828
  %v1607 = vmul.f32 %v1580, %v1606
  %v1608 = vrcp.pop %v829
  %v1609 = vmul.f32 %v1581, %v1608
  %v1610 = vrcp.pop %v830
  %v1611 = vmul.f32 %v1582, %v1610
  %v1612 = vrcp.pop %v831
  %v1613 = vmul.f32 %v1583, %v1612
  %v1614 = vrcp.pop %v832
  %v1615 = vmul.f32 %v1584, %v1614
  %v1616 = vrcp.pop %v833
  %v1617 = vmul.f32 %v1585, %v1616
  %vm1618 = vcmask 7168
  %1619 = vst.msk [vmem:[%s4] sm:$0xff] %vm1618, %v1587
  %1620 = vst.msk [vmem:[%s4 + $0x8] sm:$0xff] %vm1618, %v1589
  %1621 = vst.msk [vmem:[%s4 + $0x10] sm:$0xff] %vm1618, %v1591
  %1622 = vst.msk [vmem:[%s4 + $0x18] sm:$0xff] %vm1618, %v1593
  %1623 = vst.msk [vmem:[%s4 + $0x20] sm:$0xff] %vm1618, %v1595
  %1624 = vst.msk [vmem:[%s4 + $0x28] sm:$0xff] %vm1618, %v1597
  %1625 = vst.msk [vmem:[%s4 + $0x30] sm:$0xff] %vm1618, %v1599
  %1626 = vst.msk [vmem:[%s4 + $0x38] sm:$0xff] %vm1618, %v1601
  %1627 = vst.msk [vmem:[%s4 + $0x40] sm:$0xff] %vm1618, %v1603
  %1628 = vst.msk [vmem:[%s4 + $0x48] sm:$0xff] %vm1618, %v1605
  %1629 = vst.msk [vmem:[%s4 + $0x50] sm:$0xff] %vm1618, %v1607
  %1630 = vst.msk [vmem:[%s4 + $0x58] sm:$0xff] %vm1618, %v1609
  %1631 = vst.msk [vmem:[%s4 + $0x60] sm:$0xff] %vm1618, %v1611
  %1632 = vst.msk [vmem:[%s4 + $0x68] sm:$0xff] %vm1618, %v1613
  %1633 = vst.msk [vmem:[%s4 + $0x70] sm:$0xff] %vm1618, %v1615
  %1634 = vst.msk [vmem:[%s4 + $0x78] sm:$0xff] %vm1618, %v1617
  // Predicated region
  $region18: #{tpu_custom_call.1} parent=0 // pred_check
    _
  $region19: #{tpu_custom_call.1} parent=0 // pred_check_branch
    %1636 = sbr.rel (0) target = $region21
  $region20: #{tpu_custom_call.1} parent=0 // pred_region
    _
  $region21: #{tpu_custom_call.1} parent=0 // pred_fallthru
    _
  // Predicated region
  $region22: #{tpu_custom_call.1} parent=0 // pred_check
    _
  $region23: #{tpu_custom_call.1} parent=0 // pred_check_branch
    %1638 = sbr.rel (0) target = $region25
  $region24: #{tpu_custom_call.1} parent=0 // pred_region
    _
  $region25: #{tpu_custom_call.1} parent=0 // pred_fallthru
    _

// kernel: tpu_custom_call.1
$region0: #{tpu_custom_call.1}
  #allocation0 [shape = 'u32[]', space=smem, size = 0x4, offset = 0x4, fixed_abs, tag = 'smem constant byte address 0x4 - core index']
  #allocation1 [shape = 'u32[144,128]{1,0:T(1,128)}', space=vmem, size = 0x12000, scoped, tag = 'internal scratch']
  #allocation2 [shape = 'f32[128,128]{1,0:T(8,128)}', space=vmem, size = 0x10000, scoped, tag = 'scratch operand']
  %s0 = inlined_call_operand.vmem [shape: bf16[128,128], index: 0, kind: input, shape index: {}]
  %s1 = inlined_call_operand.vmem [shape: bf16[128,128], index: 1, kind: input, shape index: {}]
  %s2 = inlined_call_operand.vmem [shape: s32[128,1], index: 2, kind: input, shape index: {}]
  %s3 = inlined_call_operand.vmem [shape: s32[1,128], index: 3, kind: input, shape index: {}]
  %s4 = inlined_call_operand.vmem [shape: f32[128,1], index: 4, kind: output, shape index: {}]
  %s5 = sld [smem:[#allocation0]]
  $region26: #{tpu_custom_call.1} parent=0
    _
  %s7 = ssub.s32 1, %s5
  %s8 = scalar_select 0, %s7, %s5
  // Predicated region
  $region2: #{tpu_custom_call.1} parent=0 // pred_check
    _
  $region3: #{tpu_custom_call.1} parent=0 // pred_check_branch
    %10 = sbr.rel (0) target = $region5
  $region4: #{tpu_custom_call.1} parent=0 // pred_region
    _
  $region5: #{tpu_custom_call.1} parent=0 // pred_fallthru
    _
  // Predicated region
  $region6: #{tpu_custom_call.1} parent=0 // pred_check
    _
  $region7: #{tpu_custom_call.1} parent=0 // pred_check_branch
    %12 = sbr.rel (0) target = $region9
  $region8: #{tpu_custom_call.1} parent=0 // pred_region
    _
  $region9: #{tpu_custom_call.1} parent=0 // pred_fallthru
    _
  // Predicated region
  $region10: #{tpu_custom_call.1} parent=0 // pred_check
    _
  $region11: #{tpu_custom_call.1} parent=0 // pred_check_branch
    %14 = sbr.rel (0) target = $region13
  $region12: #{tpu_custom_call.1} parent=0 // pred_region
    _
  $region13: #{tpu_custom_call.1} parent=0 // pred_fallthru
    _
  // Predicated region
  $region14: #{tpu_custom_call.1} parent=0 // pred_check
    _
  $region15: #{tpu_custom_call.1} parent=0 // pred_check_branch
    %16 = sbr.rel (0) target = $region17
  $region16: #{tpu_custom_call.1} parent=0 // pred_region
    _
  $region17: #{tpu_custom_call.1} parent=0 // pred_fallthru
    _
  %v18 = vld [vmem:[%s2] sm:$0xff]
  %v19 = vld [vmem:[%s2 + $0x8] sm:$0xff]
  %v20 = vld [vmem:[%s2 + $0x10] sm:$0xff]
  %v21 = vld [vmem:[%s2 + $0x18] sm:$0xff]
  %v22 = vld [vmem:[%s2 + $0x20] sm:$0xff]
  %v23 = vld [vmem:[%s2 + $0x28] sm:$0xff]
  %v24 = vld [vmem:[%s2 + $0x30] sm:$0xff]
  %v25 = vld [vmem:[%s2 + $0x38] sm:$0xff]
  %v26 = vld [vmem:[%s2 + $0x40] sm:$0xff]
  %v27 = vld [vmem:[%s2 + $0x48] sm:$0xff]
  %v28 = vld [vmem:[%s2 + $0x50] sm:$0xff]
  %v29 = vld [vmem:[%s2 + $0x58] sm:$0xff]
  %v30 = vld [vmem:[%s2 + $0x60] sm:$0xff]
  %v31 = vld [vmem:[%s2 + $0x68] sm:$0xff]
  %v32 = vld [vmem:[%s2 + $0x70] sm:$0xff]
  %v33 = vld [vmem:[%s2 + $0x78] sm:$0xff]
  %s34 = smul.u32 0, 128
  %v35 = vlaneseq
  %v36 = vshrl.u32 %v35, 7
  %v37 = vadd.s32 %v36, 8
  %v38 = vadd.s32 %v36, 16
  %v39 = vadd.s32 %v36, 24
  %v40 = vadd.s32 %v36, 32
  %v41 = vadd.s32 %v36, 40
  %v42 = vadd.s32 %v36, 48
  %v43 = vadd.s32 %v36, 56
  %v44 = vadd.s32 %v36, 64
  %v45 = vadd.s32 %v36, 72
  %v46 = vadd.s32 %v36, 80
  %v47 = vadd.s32 %v36, 88
  %v48 = vadd.s32 %v36, 96
  %v49 = vadd.s32 %v36, 104
  %v50 = vadd.s32 %v36, 112
  %v51 = vadd.s32 %v36, 120
  %v52 = vstv %s34
  %v53 = vadd.s32 %v52, %v36
  %v54 = vadd.s32 %v52, %v37
  %v55 = vadd.s32 %v52, %v38
  %v56 = vadd.s32 %v52, %v39
  %v57 = vadd.s32 %v52, %v40
  %v58 = vadd.s32 %v52, %v41
  %v59 = vadd.s32 %v52, %v42
  %v60 = vadd.s32 %v52, %v43
  %v61 = vadd.s32 %v52, %v44
  %v62 = vadd.s32 %v52, %v45
  %v63 = vadd.s32 %v52, %v46
  %v64 = vadd.s32 %v52, %v47
  %v65 = vadd.s32 %v52, %v48
  %v66 = vadd.s32 %v52, %v49
  %v67 = vadd.s32 %v52, %v50
  %v68 = vadd.s32 %v52, %v51
  %v69 = vld [vmem:[%s0] sm:$0xf]
  %v70 = vld [vmem:[%s0 + $0x4] sm:$0xf]
  %v71 = vld [vmem:[%s0 + $0x8] sm:$0xf]
  %v72 = vld [vmem:[%s0 + $0xc] sm:$0xf]
  %v73 = vld [vmem:[%s0 + $0x10] sm:$0xf]
  %v74 = vld [vmem:[%s0 + $0x14] sm:$0xf]
  %v75 = vld [vmem:[%s0 + $0x18] sm:$0xf]
  %v76 = vld [vmem:[%s0 + $0x1c] sm:$0xf]
  %v77 = vld [vmem:[%s0 + $0x20] sm:$0xf]
  %v78 = vld [vmem:[%s0 + $0x24] sm:$0xf]
  %v79 = vld [vmem:[%s0 + $0x28] sm:$0xf]
  %v80 = vld [vmem:[%s0 + $0x2c] sm:$0xf]
  %v81 = vld [vmem:[%s0 + $0x30] sm:$0xf]
  %v82 = vld [vmem:[%s0 + $0x34] sm:$0xf]
  %v83 = vld [vmem:[%s0 + $0x38] sm:$0xf]
  %v84 = vld [vmem:[%s0 + $0x3c] sm:$0xf]
  %v85 = vld [vmem:[%s1] sm:$0xf]
  %v86 = vld [vmem:[%s1 + $0x4] sm:$0xf]
  %v87 = vld [vmem:[%s1 + $0x8] sm:$0xf]
  %v88 = vld [vmem:[%s1 + $0xc] sm:$0xf]
  %v89 = vld [vmem:[%s1 + $0x10] sm:$0xf]
  %v90 = vld [vmem:[%s1 + $0x14] sm:$0xf]
  %v91 = vld [vmem:[%s1 + $0x18] sm:$0xf]
  %v92 = vld [vmem:[%s1 + $0x1c] sm:$0xf]
  %v93 = vld [vmem:[%s1 + $0x20] sm:$0xf]
  %v94 = vld [vmem:[%s1 + $0x24] sm:$0xf]
  %v95 = vld [vmem:[%s1 + $0x28] sm:$0xf]
  %v96 = vld [vmem:[%s1 + $0x2c] sm:$0xf]
  %v97 = vld [vmem:[%s1 + $0x30] sm:$0xf]
  %v98 = vld [vmem:[%s1 + $0x34] sm:$0xf]
  %v99 = vld [vmem:[%s1 + $0x38] sm:$0xf]
  %v100 = vld [vmem:[%s1 + $0x3c] sm:$0xf]
  %v117 = vunpack.c.l.b16 %v69
  %v118 = vunpack.c.l.b16 %v70
  %v119 = vunpack.c.l.b16 %v71
  %v120 = vunpack.c.l.b16 %v72
  %v121 = vunpack.c.l.b16 %v73
  %v122 = vunpack.c.l.b16 %v74
  %v123 = vunpack.c.l.b16 %v75
  %v124 = vunpack.c.l.b16 %v76
  %v125 = vunpack.c.l.b16 %v77
  %v126 = vunpack.c.l.b16 %v78
  %v127 = vunpack.c.l.b16 %v79
  %v128 = vunpack.c.l.b16 %v80
  %v129 = vunpack.c.l.b16 %v81
  %v130 = vunpack.c.l.b16 %v82
  %v131 = vunpack.c.l.b16 %v83
  %v132 = vunpack.c.l.b16 %v84
  %v133 = vpack.c.b16 %v118, %v117
  %v134 = vpack.c.b16 %v120, %v119
  %v135 = vpack.c.b16 %v122, %v121
  %v136 = vpack.c.b16 %v124, %v123
  %v137 = vpack.c.b16 %v126, %v125
  %v138 = vpack.c.b16 %v128, %v127
  %v139 = vpack.c.b16 %v130, %v129
  %v140 = vpack.c.b16 %v132, %v131
  %v165 = vunpack.c.l.b16 %v85
  %v166 = vunpack.c.l.b16 %v86
  %v167 = vunpack.c.l.b16 %v87
  %v168 = vunpack.c.l.b16 %v88
  %v169 = vunpack.c.l.b16 %v89
  %v170 = vunpack.c.l.b16 %v90
  %v171 = vunpack.c.l.b16 %v91
  %v172 = vunpack.c.l.b16 %v92
  %v173 = vunpack.c.l.b16 %v93
  %v174 = vunpack.c.l.b16 %v94
  %v175 = vunpack.c.l.b16 %v95
  %v176 = vunpack.c.l.b16 %v96
  %v177 = vunpack.c.l.b16 %v97
  %v178 = vunpack.c.l.b16 %v98
  %v179 = vunpack.c.l.b16 %v99
  %v180 = vunpack.c.l.b16 %v100
  %v181 = vpack.c.b16 %v166, %v165
  %v182 = vpack.c.b16 %v168, %v167
  %v183 = vpack.c.b16 %v170, %v169
  %v184 = vpack.c.b16 %v172, %v171
  %v185 = vpack.c.b16 %v174, %v173
  %v186 = vpack.c.b16 %v176, %v175
  %v187 = vpack.c.b16 %v178, %v177
  %v188 = vpack.c.b16 %v180, %v179
  %197 = vmatprep.subr.bf16.mxu0 0
  %198 = vmatpush1.bf16.msra.mxu0 %v181
  %199 = vmatprep.subr.bf16.mxu0 0
  %200 = vmatpush1.bf16.msra.mxu0 %v182
  %201 = vmatprep.subr.bf16.mxu0 0
  %202 = vmatpush1.bf16.msra.mxu0 %v183
  %203 = vmatprep.subr.bf16.mxu0 0
  %204 = vmatpush1.bf16.msra.mxu0 %v184
  %205 = vmatprep.subr.bf16.mxu0 0
  %206 = vmatpush1.bf16.msra.mxu0 %v185
  %207 = vmatprep.subr.bf16.mxu0 0
  %208 = vmatpush1.bf16.msra.mxu0 %v186
  %209 = vmatprep.subr.bf16.mxu0 0
  %210 = vmatpush1.bf16.msra.mxu0 %v187
  %211 = vmatprep.subr.bf16.mxu0 0
  %212 = vmatpush1.bf16.msra.mxu0 %v188
  %213 = vmatprep.subr.bf16.mxu0 0
  %214 = vmatpush1.bf16.msra.mxu0 0
  %215 = vmatprep.subr.bf16.mxu0 0
  %216 = vmatpush1.bf16.msra.mxu0 0
  %217 = vmatprep.subr.bf16.mxu0 0
  %218 = vmatpush1.bf16.msra.mxu0 0
  %219 = vmatprep.subr.bf16.mxu0 0
  %220 = vmatpush1.bf16.msra.mxu0 0
  %221 = vmatprep.subr.bf16.mxu0 0
  %222 = vmatpush1.bf16.msra.mxu0 0
  %223 = vmatprep.subr.bf16.mxu0 0
  %224 = vmatpush1.bf16.msra.mxu0 0
  %225 = vmatprep.subr.bf16.mxu0 0
  %226 = vmatpush1.bf16.msra.mxu0 0
  %227 = vmatprep.subr.bf16.mxu0 0
  %228 = vmatpush1.bf16.msra.mxu0 0
  %229 = vmatprep.mubr.bf16.mxu0 0
  %230 = vmatmul.mubr.bf16.gmra.mrb[0].mxu0 %v133
  %v231 = vpop.f32.mrb[0].mxu0
  %v232 = vadd.f32 0.0, %v231
  %v233 = vpop.f32.mrb[0].mxu0
  %v234 = vpop.f32.mrb[0].mxu0
  %v235 = vadd.f32 0.0, %v234
  %v236 = vpop.f32.mrb[0].mxu0
  %237 = vmatprep.mubr.bf16.mxu0 0
  %238 = vmatmul.mubr.bf16.gmra.mrb[0].mxu0 %v134
  %v239 = vpop.f32.mrb[0].mxu0
  %v240 = vadd.f32 0.0, %v239
  %v241 = vpop.f32.mrb[0].mxu0
  %v242 = vpop.f32.mrb[0].mxu0
  %v243 = vadd.f32 0.0, %v242
  %v244 = vpop.f32.mrb[0].mxu0
  %245 = vmatprep.mubr.bf16.mxu0 0
  %246 = vmatmul.mubr.bf16.gmra.mrb[0].mxu0 %v135
  %v247 = vpop.f32.mrb[0].mxu0
  %v248 = vadd.f32 0.0, %v247
  %v249 = vpop.f32.mrb[0].mxu0
  %v250 = vpop.f32.mrb[0].mxu0
  %v251 = vadd.f32 0.0, %v250
  %v252 = vpop.f32.mrb[0].mxu0
  %253 = vmatprep.mubr.bf16.mxu0 0
  %254 = vmatmul.mubr.bf16.gmra.mrb[0].mxu0 %v136
  %v255 = vpop.f32.mrb[0].mxu0
  %v256 = vadd.f32 0.0, %v255
  %v257 = vpop.f32.mrb[0].mxu0
  %v258 = vpop.f32.mrb[0].mxu0
  %v259 = vadd.f32 0.0, %v258
  %v260 = vpop.f32.mrb[0].mxu0
  %261 = vmatprep.mubr.bf16.mxu0 0
  %262 = vmatmul.mubr.bf16.gmra.mrb[0].mxu0 %v137
  %v263 = vpop.f32.mrb[0].mxu0
  %v264 = vadd.f32 0.0, %v263
  %v265 = vpop.f32.mrb[0].mxu0
  %v266 = vpop.f32.mrb[0].mxu0
  %v267 = vadd.f32 0.0, %v266
  %v268 = vpop.f32.mrb[0].mxu0
  %269 = vmatprep.mubr.bf16.mxu0 0
  %270 = vmatmul.mubr.bf16.gmra.mrb[0].mxu0 %v138
  %v271 = vpop.f32.mrb[0].mxu0
  %v272 = vadd.f32 0.0, %v271
  %v273 = vpop.f32.mrb[0].mxu0
  %v274 = vpop.f32.mrb[0].mxu0
  %v275 = vadd.f32 0.0, %v274
  %v276 = vpop.f32.mrb[0].mxu0
  %277 = vmatprep.mubr.bf16.mxu0 0
  %278 = vmatmul.mubr.bf16.gmra.mrb[0].mxu0 %v139
  %v279 = vpop.f32.mrb[0].mxu0
  %v280 = vadd.f32 0.0, %v279
  %v281 = vpop.f32.mrb[0].mxu0
  %v282 = vpop.f32.mrb[0].mxu0
  %v283 = vadd.f32 0.0, %v282
  %v284 = vpop.f32.mrb[0].mxu0
  %285 = vmatprep.mubr.bf16.mxu0 0
  %286 = vmatmul.mubr.bf16.gmra.mrb[0].mxu0 %v140
  %v287 = vpop.f32.mrb[0].mxu0
  %v288 = vadd.f32 0.0, %v287
  %v289 = vpop.f32.mrb[0].mxu0
  %v290 = vpop.f32.mrb[0].mxu0
  %v291 = vadd.f32 0.0, %v290
  %v292 = vpop.f32.mrb[0].mxu0
  %293 = vdwg.mxu0
  %294 = vst [vmem:[#allocation2] sm:$0xff] %v232
  %295 = vst [vmem:[#allocation2 + $0x8] sm:$0xff] %v235
  %296 = vst [vmem:[#allocation2 + $0x10] sm:$0xff] %v240
  %297 = vst [vmem:[#allocation2 + $0x18] sm:$0xff] %v243
  %298 = vst [vmem:[#allocation2 + $0x20] sm:$0xff] %v248
  %299 = vst [vmem:[#allocation2 + $0x28] sm:$0xff] %v251
  %300 = vst [vmem:[#allocation2 + $0x30] sm:$0xff] %v256
  %301 = vst [vmem:[#allocation2 + $0x38] sm:$0xff] %v259
  %302 = vst [vmem:[#allocation2 + $0x40] sm:$0xff] %v264
  %303 = vst [vmem:[#allocation2 + $0x48] sm:$0xff] %v267
  %304 = vst [vmem:[#allocation2 + $0x50] sm:$0xff] %v272
  %305 = vst [vmem:[#allocation2 + $0x58] sm:$0xff] %v275
  %306 = vst [vmem:[#allocation2 + $0x60] sm:$0xff] %v280
  %307 = vst [vmem:[#allocation2 + $0x68] sm:$0xff] %v283
  %308 = vst [vmem:[#allocation2 + $0x70] sm:$0xff] %v288
  %309 = vst [vmem:[#allocation2 + $0x78] sm:$0xff] %v291
  %v310 = vlaneseq
  %v311 = vand.u32 %v310, 127
  %v312 = vstv 0
  %v313 = vadd.s32 %v312, %v311
  %vm314 = vcmp.lt.s32.totalorder %v313, 8
  %vm315 = vcmp.ne.s32.totalorder %v313, %v53
  %vm316 = vcmp.ne.s32.totalorder %v313, %v54
  %vm317 = vcmp.ne.s32.totalorder %v313, %v55
  %vm318 = vcmp.ne.s32.totalorder %v313, %v56
  %vm319 = vcmp.ne.s32.totalorder %v313, %v57
  %vm320 = vcmp.ne.s32.totalorder %v313, %v58
  %vm321 = vcmp.ne.s32.totalorder %v313, %v59
  %vm322 = vcmp.ne.s32.totalorder %v313, %v60
  %vm323 = vcmp.ne.s32.totalorder %v313, %v61
  %vm324 = vcmp.ne.s32.totalorder %v313, %v62
  %vm325 = vcmp.ne.s32.totalorder %v313, %v63
  %vm326 = vcmp.ne.s32.totalorder %v313, %v64
  %vm327 = vcmp.ne.s32.totalorder %v313, %v65
  %vm328 = vcmp.ne.s32.totalorder %v313, %v66
  %vm329 = vcmp.ne.s32.totalorder %v313, %v67
  %vm330 = vcmp.ne.s32.totalorder %v313, %v68
  %v331 = vsel %vm314, 1, 0
  %vm332 = vcmp.eq.s32.totalorder %v331, 1
  %vm333 = vmand %vm332, %vm315
  %vm334 = vmand %vm332, %vm316
  %vm335 = vmand %vm332, %vm317
  %vm336 = vmand %vm332, %vm318
  %vm337 = vmand %vm332, %vm319
  %vm338 = vmand %vm332, %vm320
  %vm339 = vmand %vm332, %vm321
  %vm340 = vmand %vm332, %vm322
  %vm341 = vmand %vm332, %vm323
  %vm342 = vmand %vm332, %vm324
  %vm343 = vmand %vm332, %vm325
  %vm344 = vmand %vm332, %vm326
  %vm345 = vmand %vm332, %vm327
  %vm346 = vmand %vm332, %vm328
  %vm347 = vmand %vm332, %vm329
  %vm348 = vmand %vm332, %vm330
  %v349 = vld [vmem:[%s3] sm:$0x1]
  %350 = vset.pattern.permute.xlu0 0
  %351 = vperm.xlu0 %350, %v18
  %v352 = vpop.permute.xlu0 %351
  %353 = vset.pattern.permute.xlu0 0
  %354 = vperm.xlu0 %353, %v19
  %v355 = vpop.permute.xlu0 %354
  %356 = vset.pattern.permute.xlu0 0
  %357 = vperm.xlu0 %356, %v20
  %v358 = vpop.permute.xlu0 %357
  %359 = vset.pattern.permute.xlu0 0
  %360 = vperm.xlu0 %359, %v21
  %v361 = vpop.permute.xlu0 %360
  %362 = vset.pattern.permute.xlu0 0
  %363 = vperm.xlu0 %362, %v22
  %v364 = vpop.permute.xlu0 %363
  %365 = vset.pattern.permute.xlu0 0
  %366 = vperm.xlu0 %365, %v23
  %v367 = vpop.permute.xlu0 %366
  %368 = vset.pattern.permute.xlu0 0
  %369 = vperm.xlu0 %368, %v24
  %v370 = vpop.permute.xlu0 %369
  %371 = vset.pattern.permute.xlu0 0
  %372 = vperm.xlu0 %371, %v25
  %v373 = vpop.permute.xlu0 %372
  %374 = vset.pattern.permute.xlu0 0
  %375 = vperm.xlu0 %374, %v26
  %v376 = vpop.permute.xlu0 %375
  %377 = vset.pattern.permute.xlu0 0
  %378 = vperm.xlu0 %377, %v27
  %v379 = vpop.permute.xlu0 %378
  %380 = vset.pattern.permute.xlu0 0
  %381 = vperm.xlu0 %380, %v28
  %v382 = vpop.permute.xlu0 %381
  %383 = vset.pattern.permute.xlu0 0
  %384 = vperm.xlu0 %383, %v29
  %v385 = vpop.permute.xlu0 %384
  %386 = vset.pattern.permute.xlu0 0
  %387 = vperm.xlu0 %386, %v30
  %v388 = vpop.permute.xlu0 %387
  %389 = vset.pattern.permute.xlu0 0
  %390 = vperm.xlu0 %389, %v31
  %v391 = vpop.permute.xlu0 %390
  %392 = vset.pattern.permute.xlu0 0
  %393 = vperm.xlu0 %392, %v32
  %v394 = vpop.permute.xlu0 %393
  %395 = vset.pattern.permute.xlu0 0
  %396 = vperm.xlu0 %395, %v33
  %v397 = vpop.permute.xlu0 %396
  %v398 = vlaneseq
  %v399 = vshrl.u32 %v398, 7
  %v400 = vsub.s32 0, %v399
  %v401 = vrot.slane %v349, %v400
  %vm402 = vcmp.eq.s32.totalorder %v352, %v401
  %vm403 = vcmp.eq.s32.totalorder %v355, %v401
  %vm404 = vcmp.eq.s32.totalorder %v358, %v401
  %vm405 = vcmp.eq.s32.totalorder %v361, %v401
  %vm406 = vcmp.eq.s32.totalorder %v364, %v401
  %vm407 = vcmp.eq.s32.totalorder %v367, %v401
  %vm408 = vcmp.eq.s32.totalorder %v370, %v401
  %vm409 = vcmp.eq.s32.totalorder %v373, %v401
  %vm410 = vcmp.eq.s32.totalorder %v376, %v401
  %vm411 = vcmp.eq.s32.totalorder %v379, %v401
  %vm412 = vcmp.eq.s32.totalorder %v382, %v401
  %vm413 = vcmp.eq.s32.totalorder %v385, %v401
  %vm414 = vcmp.eq.s32.totalorder %v388, %v401
  %vm415 = vcmp.eq.s32.totalorder %v391, %v401
  %vm416 = vcmp.eq.s32.totalorder %v394, %v401
  %vm417 = vcmp.eq.s32.totalorder %v397, %v401
  %vm418 = vmand %vm402, %vm333
  %vm419 = vmand %vm403, %vm334
  %vm420 = vmand %vm404, %vm335
  %vm421 = vmand %vm405, %vm336
  %vm422 = vmand %vm406, %vm337
  %vm423 = vmand %vm407, %vm338
  %vm424 = vmand %vm408, %vm339
  %vm425 = vmand %vm409, %vm340
  %vm426 = vmand %vm410, %vm341
  %vm427 = vmand %vm411, %vm342
  %vm428 = vmand %vm412, %vm343
  %vm429 = vmand %vm413, %vm344
  %vm430 = vmand %vm414, %vm345
  %vm431 = vmand %vm415, %vm346
  %vm432 = vmand %vm416, %vm347
  %vm433 = vmand %vm417, %vm348
  %v434 = vsel %vm418, 1, 0
  %v435 = vsel %vm419, 1, 0
  %v436 = vsel %vm420, 1, 0
  %v437 = vsel %vm421, 1, 0
  %v438 = vsel %vm422, 1, 0
  %v439 = vsel %vm423, 1, 0
  %v440 = vsel %vm424, 1, 0
  %v441 = vsel %vm425, 1, 0
  %v442 = vsel %vm426, 1, 0
  %v443 = vsel %vm427, 1, 0
  %v444 = vsel %vm428, 1, 0
  %v445 = vsel %vm429, 1, 0
  %v446 = vsel %vm430, 1, 0
  %v447 = vsel %vm431, 1, 0
  %v448 = vsel %vm432, 1, 0
  %v449 = vsel %vm433, 1, 0
  %v450 = vcvt.s32.f32 %v434
  %v451 = vcvt.s32.f32 %v435
  %v452 = vcvt.s32.f32 %v436
  %v453 = vcvt.s32.f32 %v437
  %v454 = vcvt.s32.f32 %v438
  %v455 = vcvt.s32.f32 %v439
  %v456 = vcvt.s32.f32 %v440
  %v457 = vcvt.s32.f32 %v441
  %v458 = vcvt.s32.f32 %v442
  %v459 = vcvt.s32.f32 %v443
  %v460 = vcvt.s32.f32 %v444
  %v461 = vcvt.s32.f32 %v445
  %v462 = vcvt.s32.f32 %v446
  %v463 = vcvt.s32.f32 %v447
  %v464 = vcvt.s32.f32 %v448
  %v465 = vcvt.s32.f32 %v449
  %v466 = vsel %vm332, %v232, -inf
  %v467 = vsel %vm332, %v235, -inf
  %v468 = vsel %vm332, %v240, -inf
  %v469 = vsel %vm332, %v243, -inf
  %v470 = vsel %vm332, %v248, -inf
  %v471 = vsel %vm332, %v251, -inf
  %v472 = vsel %vm332, %v256, -inf
  %v473 = vsel %vm332, %v259, -inf
  %v474 = vsel %vm332, %v264, -inf
  %v475 = vsel %vm332, %v267, -inf
  %v476 = vsel %vm332, %v272, -inf
  %v477 = vsel %vm332, %v275, -inf
  %v478 = vsel %vm332, %v280, -inf
  %v479 = vsel %vm332, %v283, -inf
  %v480 = vsel %vm332, %v288, -inf
  %v481 = vsel %vm332, %v291, -inf
  %482 = vmax.xlane.f32.xlu0 %v466
  %v483 = vpop.xlane.xlu0 %482
  %484 = vmax.xlane.f32.xlu0 %v467
  %v485 = vpop.xlane.xlu0 %484
  %486 = vmax.xlane.f32.xlu0 %v468
  %v487 = vpop.xlane.xlu0 %486
  %488 = vmax.xlane.f32.xlu0 %v469
  %v489 = vpop.xlane.xlu0 %488
  %490 = vmax.xlane.f32.xlu0 %v470
  %v491 = vpop.xlane.xlu0 %490
  %492 = vmax.xlane.f32.xlu0 %v471
  %v493 = vpop.xlane.xlu0 %492
  %494 = vmax.xlane.f32.xlu0 %v472
  %v495 = vpop.xlane.xlu0 %494
  %496 = vmax.xlane.f32.xlu0 %v473
  %v497 = vpop.xlane.xlu0 %496
  %498 = vmax.xlane.f32.xlu0 %v474
  %v499 = vpop.xlane.xlu0 %498
  %500 = vmax.xlane.f32.xlu0 %v475
  %v501 = vpop.xlane.xlu0 %500
  %502 = vmax.xlane.f32.xlu0 %v476
  %v503 = vpop.xlane.xlu0 %502
  %504 = vmax.xlane.f32.xlu0 %v477
  %v505 = vpop.xlane.xlu0 %504
  %506 = vmax.xlane.f32.xlu0 %v478
  %v507 = vpop.xlane.xlu0 %506
  %508 = vmax.xlane.f32.xlu0 %v479
  %v509 = vpop.xlane.xlu0 %508
  %510 = vmax.xlane.f32.xlu0 %v480
  %v511 = vpop.xlane.xlu0 %510
  %512 = vmax.xlane.f32.xlu0 %v481
  %v513 = vpop.xlane.xlu0 %512
  %v514 = vsel %vm333, %v232, -inf
  %v515 = vsel %vm334, %v235, -inf
  %v516 = vsel %vm335, %v240, -inf
  %v517 = vsel %vm336, %v243, -inf
  %v518 = vsel %vm337, %v248, -inf
  %v519 = vsel %vm338, %v251, -inf
  %v520 = vsel %vm339, %v256, -inf
  %v521 = vsel %vm340, %v259, -inf
  %v522 = vsel %vm341, %v264, -inf
  %v523 = vsel %vm342, %v267, -inf
  %v524 = vsel %vm343, %v272, -inf
  %v525 = vsel %vm344, %v275, -inf
  %v526 = vsel %vm345, %v280, -inf
  %v527 = vsel %vm346, %v283, -inf
  %v528 = vsel %vm347, %v288, -inf
  %v529 = vsel %vm348, %v291, -inf
  %530 = vmax.xlane.f32.xlu0 %v514
  %v531 = vpop.xlane.xlu0 %530
  %532 = vmax.xlane.f32.xlu0 %v515
  %v533 = vpop.xlane.xlu0 %532
  %534 = vmax.xlane.f32.xlu0 %v516
  %v535 = vpop.xlane.xlu0 %534
  %536 = vmax.xlane.f32.xlu0 %v517
  %v537 = vpop.xlane.xlu0 %536
  %538 = vmax.xlane.f32.xlu0 %v518
  %v539 = vpop.xlane.xlu0 %538
  %540 = vmax.xlane.f32.xlu0 %v519
  %v541 = vpop.xlane.xlu0 %540
  %542 = vmax.xlane.f32.xlu0 %v520
  %v543 = vpop.xlane.xlu0 %542
  %544 = vmax.xlane.f32.xlu0 %v521
  %v545 = vpop.xlane.xlu0 %544
  %546 = vmax.xlane.f32.xlu0 %v522
  %v547 = vpop.xlane.xlu0 %546
  %548 = vmax.xlane.f32.xlu0 %v523
  %v549 = vpop.xlane.xlu0 %548
  %550 = vmax.xlane.f32.xlu0 %v524
  %v551 = vpop.xlane.xlu0 %550
  %552 = vmax.xlane.f32.xlu0 %v525
  %v553 = vpop.xlane.xlu0 %552
  %554 = vmax.xlane.f32.xlu0 %v526
  %v555 = vpop.xlane.xlu0 %554
  %556 = vmax.xlane.f32.xlu0 %v527
  %v557 = vpop.xlane.xlu0 %556
  %558 = vmax.xlane.f32.xlu0 %v528
  %v559 = vpop.xlane.xlu0 %558
  %560 = vmax.xlane.f32.xlu0 %v529
  %v561 = vpop.xlane.xlu0 %560
  %v562 = vsub.f32 -inf, %v531
  %v563 = vsub.f32 -inf, %v533
  %v564 = vsub.f32 -inf, %v535
  %v565 = vsub.f32 -inf, %v537
  %v566 = vsub.f32 -inf, %v539
  %v567 = vsub.f32 -inf, %v541
  %v568 = vsub.f32 -inf, %v543
  %v569 = vsub.f32 -inf, %v545
  %v570 = vsub.f32 -inf, %v547
  %v571 = vsub.f32 -inf, %v549
  %v572 = vsub.f32 -inf, %v551
  %v573 = vsub.f32 -inf, %v553
  %v574 = vsub.f32 -inf, %v555
  %v575 = vsub.f32 -inf, %v557
  %v576 = vsub.f32 -inf, %v559
  %v577 = vsub.f32 -inf, %v561
  %v578 = vmul.f32 %v562, 1.442695
  %v579 = vpow.pop %v578
  %v580 = vmul.f32 %v563, 1.442695
  %v581 = vpow.pop %v580
  %v582 = vmul.f32 %v564, 1.442695
  %v583 = vpow.pop %v582
  %v584 = vmul.f32 %v565, 1.442695
  %v585 = vpow.pop %v584
  %v586 = vmul.f32 %v566, 1.442695
  %v587 = vpow.pop %v586
  %v588 = vmul.f32 %v567, 1.442695
  %v589 = vpow.pop %v588
  %v590 = vmul.f32 %v568, 1.442695
  %v591 = vpow.pop %v590
  %v592 = vmul.f32 %v569, 1.442695
  %v593 = vpow.pop %v592
  %v594 = vmul.f32 %v570, 1.442695
  %v595 = vpow.pop %v594
  %v596 = vmul.f32 %v571, 1.442695
  %v597 = vpow.pop %v596
  %v598 = vmul.f32 %v572, 1.442695
  %v599 = vpow.pop %v598
  %v600 = vmul.f32 %v573, 1.442695
  %v601 = vpow.pop %v600
  %v602 = vmul.f32 %v574, 1.442695
  %v603 = vpow.pop %v602
  %v604 = vmul.f32 %v575, 1.442695
  %v605 = vpow.pop %v604
  %v606 = vmul.f32 %v576, 1.442695
  %v607 = vpow.pop %v606
  %v608 = vmul.f32 %v577, 1.442695
  %v609 = vpow.pop %v608
  %v610 = vsub.f32 %v514, %v531
  %v611 = vsub.f32 %v515, %v533
  %v612 = vsub.f32 %v516, %v535
  %v613 = vsub.f32 %v517, %v537
  %v614 = vsub.f32 %v518, %v539
  %v615 = vsub.f32 %v519, %v541
  %v616 = vsub.f32 %v520, %v543
  %v617 = vsub.f32 %v521, %v545
  %v618 = vsub.f32 %v522, %v547
  %v619 = vsub.f32 %v523, %v549
  %v620 = vsub.f32 %v524, %v551
  %v621 = vsub.f32 %v525, %v553
  %v622 = vsub.f32 %v526, %v555
  %v623 = vsub.f32 %v527, %v557
  %v624 = vsub.f32 %v528, %v559
  %v625 = vsub.f32 %v529, %v561
  %v626 = vmul.f32 %v610, 1.442695
  %v627 = vpow.pop %v626
  %v628 = vmul.f32 %v611, 1.442695
  %v629 = vpow.pop %v628
  %v630 = vmul.f32 %v612, 1.442695
  %v631 = vpow.pop %v630
  %v632 = vmul.f32 %v613, 1.442695
  %v633 = vpow.pop %v632
  %v634 = vmul.f32 %v614, 1.442695
  %v635 = vpow.pop %v634
  %v636 = vmul.f32 %v615, 1.442695
  %v637 = vpow.pop %v636
  %v638 = vmul.f32 %v616, 1.442695
  %v639 = vpow.pop %v638
  %v640 = vmul.f32 %v617, 1.442695
  %v641 = vpow.pop %v640
  %v642 = vmul.f32 %v618, 1.442695
  %v643 = vpow.pop %v642
  %v644 = vmul.f32 %v619, 1.442695
  %v645 = vpow.pop %v644
  %v646 = vmul.f32 %v620, 1.442695
  %v647 = vpow.pop %v646
  %v648 = vmul.f32 %v621, 1.442695
  %v649 = vpow.pop %v648
  %v650 = vmul.f32 %v622, 1.442695
  %v651 = vpow.pop %v650
  %v652 = vmul.f32 %v623, 1.442695
  %v653 = vpow.pop %v652
  %v654 = vmul.f32 %v624, 1.442695
  %v655 = vpow.pop %v654
  %v656 = vmul.f32 %v625, 1.442695
  %v657 = vpow.pop %v656
  %v658 = vmul.f32 %v579, 0.0
  %v659 = vmul.f32 %v581, 0.0
  %v660 = vmul.f32 %v583, 0.0
  %v661 = vmul.f32 %v585, 0.0
  %v662 = vmul.f32 %v587, 0.0
  %v663 = vmul.f32 %v589, 0.0
  %v664 = vmul.f32 %v591, 0.0
  %v665 = vmul.f32 %v593, 0.0
  %v666 = vmul.f32 %v595, 0.0
  %v667 = vmul.f32 %v597, 0.0
  %v668 = vmul.f32 %v599, 0.0
  %v669 = vmul.f32 %v601, 0.0
  %v670 = vmul.f32 %v603, 0.0
  %v671 = vmul.f32 %v605, 0.0
  %v672 = vmul.f32 %v607, 0.0
  %v673 = vmul.f32 %v609, 0.0
  %v674 = vmul.f32 %v627, %v450
  %v675 = vmul.f32 %v629, %v451
  %v676 = vmul.f32 %v631, %v452
  %v677 = vmul.f32 %v633, %v453
  %v678 = vmul.f32 %v635, %v454
  %v679 = vmul.f32 %v637, %v455
  %v680 = vmul.f32 %v639, %v456
  %v681 = vmul.f32 %v641, %v457
  %v682 = vmul.f32 %v643, %v458
  %v683 = vmul.f32 %v645, %v459
  %v684 = vmul.f32 %v647, %v460
  %v685 = vmul.f32 %v649, %v461
  %v686 = vmul.f32 %v651, %v462
  %v687 = vmul.f32 %v653, %v463
  %v688 = vmul.f32 %v655, %v464
  %v689 = vmul.f32 %v657, %v465
  %690 = vadd.xlane.f32.xlu0 %v674
  %v691 = vpop.xlane.xlu0 %690
  %692 = vadd.xlane.f32.xlu0 %v675
  %v693 = vpop.xlane.xlu0 %692
  %694 = vadd.xlane.f32.xlu0 %v676
  %v695 = vpop.xlane.xlu0 %694
  %696 = vadd.xlane.f32.xlu0 %v677
  %v697 = vpop.xlane.xlu0 %696
  %698 = vadd.xlane.f32.xlu0 %v678
  %v699 = vpop.xlane.xlu0 %698
  %700 = vadd.xlane.f32.xlu0 %v679
  %v701 = vpop.xlane.xlu0 %700
  %702 = vadd.xlane.f32.xlu0 %v680
  %v703 = vpop.xlane.xlu0 %702
  %704 = vadd.xlane.f32.xlu0 %v681
  %v705 = vpop.xlane.xlu0 %704
  %706 = vadd.xlane.f32.xlu0 %v682
  %v707 = vpop.xlane.xlu0 %706
  %708 = vadd.xlane.f32.xlu0 %v683
  %v709 = vpop.xlane.xlu0 %708
  %710 = vadd.xlane.f32.xlu0 %v684
  %v711 = vpop.xlane.xlu0 %710
  %712 = vadd.xlane.f32.xlu0 %v685
  %v713 = vpop.xlane.xlu0 %712
  %714 = vadd.xlane.f32.xlu0 %v686
  %v715 = vpop.xlane.xlu0 %714
  %716 = vadd.xlane.f32.xlu0 %v687
  %v717 = vpop.xlane.xlu0 %716
  %718 = vadd.xlane.f32.xlu0 %v688
  %v719 = vpop.xlane.xlu0 %718
  %720 = vadd.xlane.f32.xlu0 %v689
  %v721 = vpop.xlane.xlu0 %720
  %v722 = vadd.f32 %v658, %v691
  %v723 = vadd.f32 %v659, %v693
  %v724 = vadd.f32 %v660, %v695
  %v725 = vadd.f32 %v661, %v697
  %v726 = vadd.f32 %v662, %v699
  %v727 = vadd.f32 %v663, %v701
  %v728 = vadd.f32 %v664, %v703
  %v729 = vadd.f32 %v665, %v705
  %v730 = vadd.f32 %v666, %v707
  %v731 = vadd.f32 %v667, %v709
  %v732 = vadd.f32 %v668, %v711
  %v733 = vadd.f32 %v669, %v713
  %v734 = vadd.f32 %v670, %v715
  %v735 = vadd.f32 %v671, %v717
  %v736 = vadd.f32 %v672, %v719
  %v737 = vadd.f32 %v673, %v721
  %738 = vadd.xlane.f32.xlu0 %v627
  %v739 = vpop.xlane.xlu0 %738
  %740 = vadd.xlane.f32.xlu0 %v629
  %v741 = vpop.xlane.xlu0 %740
  %742 = vadd.xlane.f32.xlu0 %v631
  %v743 = vpop.xlane.xlu0 %742
  %744 = vadd.xlane.f32.xlu0 %v633
  %v745 = vpop.xlane.xlu0 %744
  %746 = vadd.xlane.f32.xlu0 %v635
  %v747 = vpop.xlane.xlu0 %746
  %748 = vadd.xlane.f32.xlu0 %v637
  %v749 = vpop.xlane.xlu0 %748
  %750 = vadd.xlane.f32.xlu0 %v639
  %v751 = vpop.xlane.xlu0 %750
  %752 = vadd.xlane.f32.xlu0 %v641
  %v753 = vpop.xlane.xlu0 %752
  %754 = vadd.xlane.f32.xlu0 %v643
  %v755 = vpop.xlane.xlu0 %754
  %756 = vadd.xlane.f32.xlu0 %v645
  %v757 = vpop.xlane.xlu0 %756
  %758 = vadd.xlane.f32.xlu0 %v647
  %v759 = vpop.xlane.xlu0 %758
  %760 = vadd.xlane.f32.xlu0 %v649
  %v761 = vpop.xlane.xlu0 %760
  %762 = vadd.xlane.f32.xlu0 %v651
  %v763 = vpop.xlane.xlu0 %762
  %764 = vadd.xlane.f32.xlu0 %v653
  %v765 = vpop.xlane.xlu0 %764
  %766 = vadd.xlane.f32.xlu0 %v655
  %v767 = vpop.xlane.xlu0 %766
  %768 = vadd.xlane.f32.xlu0 %v657
  %v769 = vpop.xlane.xlu0 %768
  %v770 = vadd.f32 %v658, %v739
  %v771 = vadd.f32 %v659, %v741
  %v772 = vadd.f32 %v660, %v743
  %v773 = vadd.f32 %v661, %v745
  %v774 = vadd.f32 %v662, %v747
  %v775 = vadd.f32 %v663, %v749
  %v776 = vadd.f32 %v664, %v751
  %v777 = vadd.f32 %v665, %v753
  %v778 = vadd.f32 %v666, %v755
  %v779 = vadd.f32 %v667, %v757
  %v780 = vadd.f32 %v668, %v759
  %v781 = vadd.f32 %v669, %v761
  %v782 = vadd.f32 %v670, %v763
  %v783 = vadd.f32 %v671, %v765
  %v784 = vadd.f32 %v672, %v767
  %v785 = vadd.f32 %v673, %v769
  %786 = vadd.xlane.f32.xlu0 %v450
  %v787 = vpop.xlane.xlu0 %786
  %788 = vadd.xlane.f32.xlu0 %v451
  %v789 = vpop.xlane.xlu0 %788
  %790 = vadd.xlane.f32.xlu0 %v452
  %v791 = vpop.xlane.xlu0 %790
  %792 = vadd.xlane.f32.xlu0 %v453
  %v793 = vpop.xlane.xlu0 %792
  %794 = vadd.xlane.f32.xlu0 %v454
  %v795 = vpop.xlane.xlu0 %794
  %796 = vadd.xlane.f32.xlu0 %v455
  %v797 = vpop.xlane.xlu0 %796
  %798 = vadd.xlane.f32.xlu0 %v456
  %v799 = vpop.xlane.xlu0 %798
  %800 = vadd.xlane.f32.xlu0 %v457
  %v801 = vpop.xlane.xlu0 %800
  %802 = vadd.xlane.f32.xlu0 %v458
  %v803 = vpop.xlane.xlu0 %802
  %804 = vadd.xlane.f32.xlu0 %v459
  %v805 = vpop.xlane.xlu0 %804
  %806 = vadd.xlane.f32.xlu0 %v460
  %v807 = vpop.xlane.xlu0 %806
  %808 = vadd.xlane.f32.xlu0 %v461
  %v809 = vpop.xlane.xlu0 %808
  %810 = vadd.xlane.f32.xlu0 %v462
  %v811 = vpop.xlane.xlu0 %810
  %812 = vadd.xlane.f32.xlu0 %v463
  %v813 = vpop.xlane.xlu0 %812
  %814 = vadd.xlane.f32.xlu0 %v464
  %v815 = vpop.xlane.xlu0 %814
  %816 = vadd.xlane.f32.xlu0 %v465
  %v817 = vpop.xlane.xlu0 %816
  %v818 = vadd.f32 %v787, 0.0
  %v819 = vadd.f32 %v789, 0.0
  %v820 = vadd.f32 %v791, 0.0
  %v821 = vadd.f32 %v793, 0.0
  %v822 = vadd.f32 %v795, 0.0
  %v823 = vadd.f32 %v797, 0.0
  %v824 = vadd.f32 %v799, 0.0
  %v825 = vadd.f32 %v801, 0.0
  %v826 = vadd.f32 %v803, 0.0
  %v827 = vadd.f32 %v805, 0.0
  %v828 = vadd.f32 %v807, 0.0
  %v829 = vadd.f32 %v809, 0.0
  %v830 = vadd.f32 %v811, 0.0
  %v831 = vadd.f32 %v813, 0.0
  %v832 = vadd.f32 %v815, 0.0
  %v833 = vadd.f32 %v817, 0.0
  %vm834 = vcmp.gt.f32.partialorder %v722, 0.0
  %vm835 = vcmp.gt.f32.partialorder %v723, 0.0
  %vm836 = vcmp.gt.f32.partialorder %v724, 0.0
  %vm837 = vcmp.gt.f32.partialorder %v725, 0.0
  %vm838 = vcmp.gt.f32.partialorder %v726, 0.0
  %vm839 = vcmp.gt.f32.partialorder %v727, 0.0
  %vm840 = vcmp.gt.f32.partialorder %v728, 0.0
  %vm841 = vcmp.gt.f32.partialorder %v729, 0.0
  %vm842 = vcmp.gt.f32.partialorder %v730, 0.0
  %vm843 = vcmp.gt.f32.partialorder %v731, 0.0
  %vm844 = vcmp.gt.f32.partialorder %v732, 0.0
  %vm845 = vcmp.gt.f32.partialorder %v733, 0.0
  %vm846 = vcmp.gt.f32.partialorder %v734, 0.0
  %vm847 = vcmp.gt.f32.partialorder %v735, 0.0
  %vm848 = vcmp.gt.f32.partialorder %v736, 0.0
  %vm849 = vcmp.gt.f32.partialorder %v737, 0.0
  %v850 = vsel %vm834, %v722, 1.0
  %v851 = vsel %vm835, %v723, 1.0
  %v852 = vsel %vm836, %v724, 1.0
  %v853 = vsel %vm837, %v725, 1.0
  %v854 = vsel %vm838, %v726, 1.0
  %v855 = vsel %vm839, %v727, 1.0
  %v856 = vsel %vm840, %v728, 1.0
  %v857 = vsel %vm841, %v729, 1.0
  %v858 = vsel %vm842, %v730, 1.0
  %v859 = vsel %vm843, %v731, 1.0
  %v860 = vsel %vm844, %v732, 1.0
  %v861 = vsel %vm845, %v733, 1.0
  %v862 = vsel %vm846, %v734, 1.0
  %v863 = vsel %vm847, %v735, 1.0
  %v864 = vsel %vm848, %v736, 1.0
  %v865 = vsel %vm849, %v737, 1.0
  %v866 = vrcp.pop %v850
  %v867 = vrcp.pop %v851
  %v868 = vrcp.pop %v852
  %v869 = vrcp.pop %v853
  %v870 = vrcp.pop %v854
  %v871 = vrcp.pop %v855
  %v872 = vrcp.pop %v856
  %v873 = vrcp.pop %v857
  %v874 = vrcp.pop %v858
  %v875 = vrcp.pop %v859
  %v876 = vrcp.pop %v860
  %v877 = vrcp.pop %v861
  %v878 = vrcp.pop %v862
  %v879 = vrcp.pop %v863
  %v880 = vrcp.pop %v864
  %v881 = vrcp.pop %v865
  %v882 = vmul.f32 %v850, %v866
  %v883 = vmul.f32 %v851, %v867
  %v884 = vmul.f32 %v852, %v868
  %v885 = vmul.f32 %v853, %v869
  %v886 = vmul.f32 %v854, %v870
  %v887 = vmul.f32 %v855, %v871
  %v888 = vmul.f32 %v856, %v872
  %v889 = vmul.f32 %v857, %v873
  %v890 = vmul.f32 %v858, %v874
  %v891 = vmul.f32 %v859, %v875
  %v892 = vmul.f32 %v860, %v876
  %v893 = vmul.f32 %v861, %v877
  %v894 = vmul.f32 %v862, %v878
  %v895 = vmul.f32 %v863, %v879
  %v896 = vmul.f32 %v864, %v880
  %v897 = vmul.f32 %v865, %v881
  %v898 = vsub.f32 2.0, %v882
  %v899 = vsub.f32 2.0, %v883
  %v900 = vsub.f32 2.0, %v884
  %v901 = vsub.f32 2.0, %v885
  %v902 = vsub.f32 2.0, %v886
  %v903 = vsub.f32 2.0, %v887
  %v904 = vsub.f32 2.0, %v888
  %v905 = vsub.f32 2.0, %v889
  %v906 = vsub.f32 2.0, %v890
  %v907 = vsub.f32 2.0, %v891
  %v908 = vsub.f32 2.0, %v892
  %v909 = vsub.f32 2.0, %v893
  %v910 = vsub.f32 2.0, %v894
  %v911 = vsub.f32 2.0, %v895
  %v912 = vsub.f32 2.0, %v896
  %v913 = vsub.f32 2.0, %v897
  %v914 = vmul.f32 %v866, %v898
  %v915 = vmul.f32 %v867, %v899
  %v916 = vmul.f32 %v868, %v900
  %v917 = vmul.f32 %v869, %v901
  %v918 = vmul.f32 %v870, %v902
  %v919 = vmul.f32 %v871, %v903
  %v920 = vmul.f32 %v872, %v904
  %v921 = vmul.f32 %v873, %v905
  %v922 = vmul.f32 %v874, %v906
  %v923 = vmul.f32 %v875, %v907
  %v924 = vmul.f32 %v876, %v908
  %v925 = vmul.f32 %v877, %v909
  %v926 = vmul.f32 %v878, %v910
  %v927 = vmul.f32 %v879, %v911
  %v928 = vmul.f32 %v880, %v912
  %v929 = vmul.f32 %v881, %v913
  %v930 = vsub.f32 %v770, %v722
  %v931 = vsub.f32 %v771, %v723
  %v932 = vsub.f32 %v772, %v724
  %v933 = vsub.f32 %v773, %v725
  %v934 = vsub.f32 %v774, %v726
  %v935 = vsub.f32 %v775, %v727
  %v936 = vsub.f32 %v776, %v728
  %v937 = vsub.f32 %v777, %v729
  %v938 = vsub.f32 %v778, %v730
  %v939 = vsub.f32 %v779, %v731
  %v940 = vsub.f32 %v780, %v732
  %v941 = vsub.f32 %v781, %v733
  %v942 = vsub.f32 %v782, %v734
  %v943 = vsub.f32 %v783, %v735
  %v944 = vsub.f32 %v784, %v736
  %v945 = vsub.f32 %v785, %v737
  %vm946 = vcmp.gt.f32.partialorder %v930, 0.0
  %vm947 = vcmp.gt.f32.partialorder %v931, 0.0
  %vm948 = vcmp.gt.f32.partialorder %v932, 0.0
  %vm949 = vcmp.gt.f32.partialorder %v933, 0.0
  %vm950 = vcmp.gt.f32.partialorder %v934, 0.0
  %vm951 = vcmp.gt.f32.partialorder %v935, 0.0
  %vm952 = vcmp.gt.f32.partialorder %v936, 0.0
  %vm953 = vcmp.gt.f32.partialorder %v937, 0.0
  %vm954 = vcmp.gt.f32.partialorder %v938, 0.0
  %vm955 = vcmp.gt.f32.partialorder %v939, 0.0
  %vm956 = vcmp.gt.f32.partialorder %v940, 0.0
  %vm957 = vcmp.gt.f32.partialorder %v941, 0.0
  %vm958 = vcmp.gt.f32.partialorder %v942, 0.0
  %vm959 = vcmp.gt.f32.partialorder %v943, 0.0
  %vm960 = vcmp.gt.f32.partialorder %v944, 0.0
  %vm961 = vcmp.gt.f32.partialorder %v945, 0.0
  %v962 = vsel %vm946, %v930, 1.0
  %v963 = vsel %vm947, %v931, 1.0
  %v964 = vsel %vm948, %v932, 1.0
  %v965 = vsel %vm949, %v933, 1.0
  %v966 = vsel %vm950, %v934, 1.0
  %v967 = vsel %vm951, %v935, 1.0
  %v968 = vsel %vm952, %v936, 1.0
  %v969 = vsel %vm953, %v937, 1.0
  %v970 = vsel %vm954, %v938, 1.0
  %v971 = vsel %vm955, %v939, 1.0
  %v972 = vsel %vm956, %v940, 1.0
  %v973 = vsel %vm957, %v941, 1.0
  %v974 = vsel %vm958, %v942, 1.0
  %v975 = vsel %vm959, %v943, 1.0
  %v976 = vsel %vm960, %v944, 1.0
  %v977 = vsel %vm961, %v945, 1.0
  %v978 = vrcp.pop %v962
  %v979 = vrcp.pop %v963
  %v980 = vrcp.pop %v964
  %v981 = vrcp.pop %v965
  %v982 = vrcp.pop %v966
  %v983 = vrcp.pop %v967
  %v984 = vrcp.pop %v968
  %v985 = vrcp.pop %v969
  %v986 = vrcp.pop %v970
  %v987 = vrcp.pop %v971
  %v988 = vrcp.pop %v972
  %v989 = vrcp.pop %v973
  %v990 = vrcp.pop %v974
  %v991 = vrcp.pop %v975
  %v992 = vrcp.pop %v976
  %v993 = vrcp.pop %v977
  %v994 = vmul.f32 %v962, %v978
  %v995 = vmul.f32 %v963, %v979
  %v996 = vmul.f32 %v964, %v980
  %v997 = vmul.f32 %v965, %v981
  %v998 = vmul.f32 %v966, %v982
  %v999 = vmul.f32 %v967, %v983
  %v1000 = vmul.f32 %v968, %v984
  %v1001 = vmul.f32 %v969, %v985
  %v1002 = vmul.f32 %v970, %v986
  %v1003 = vmul.f32 %v971, %v987
  %v1004 = vmul.f32 %v972, %v988
  %v1005 = vmul.f32 %v973, %v989
  %v1006 = vmul.f32 %v974, %v990
  %v1007 = vmul.f32 %v975, %v991
  %v1008 = vmul.f32 %v976, %v992
  %v1009 = vmul.f32 %v977, %v993
  %v1010 = vsub.f32 2.0, %v994
  %v1011 = vsub.f32 2.0, %v995
  %v1012 = vsub.f32 2.0, %v996
  %v1013 = vsub.f32 2.0, %v997
  %v1014 = vsub.f32 2.0, %v998
  %v1015 = vsub.f32 2.0, %v999
  %v1016 = vsub.f32 2.0, %v1000
  %v1017 = vsub.f32 2.0, %v1001
  %v1018 = vsub.f32 2.0, %v1002
  %v1019 = vsub.f32 2.0, %v1003
  %v1020 = vsub.f32 2.0, %v1004
  %v1021 = vsub.f32 2.0, %v1005
  %v1022 = vsub.f32 2.0, %v1006
  %v1023 = vsub.f32 2.0, %v1007
  %v1024 = vsub.f32 2.0, %v1008
  %v1025 = vsub.f32 2.0, %v1009
  %v1026 = vmul.f32 %v978, %v1010
  %v1027 = vmul.f32 %v979, %v1011
  %v1028 = vmul.f32 %v980, %v1012
  %v1029 = vmul.f32 %v981, %v1013
  %v1030 = vmul.f32 %v982, %v1014
  %v1031 = vmul.f32 %v983, %v1015
  %v1032 = vmul.f32 %v984, %v1016
  %v1033 = vmul.f32 %v985, %v1017
  %v1034 = vmul.f32 %v986, %v1018
  %v1035 = vmul.f32 %v987, %v1019
  %v1036 = vmul.f32 %v988, %v1020
  %v1037 = vmul.f32 %v989, %v1021
  %v1038 = vmul.f32 %v990, %v1022
  %v1039 = vmul.f32 %v991, %v1023
  %v1040 = vmul.f32 %v992, %v1024
  %v1041 = vmul.f32 %v993, %v1025
  %v1042 = vld [vmem:[#allocation2] sm:$0xff]
  %v1043 = vld [vmem:[#allocation2 + $0x8] sm:$0xff]
  %v1044 = vld [vmem:[#allocation2 + $0x10] sm:$0xff]
  %v1045 = vld [vmem:[#allocation2 + $0x18] sm:$0xff]
  %v1046 = vld [vmem:[#allocation2 + $0x20] sm:$0xff]
  %v1047 = vld [vmem:[#allocation2 + $0x28] sm:$0xff]
  %v1048 = vld [vmem:[#allocation2 + $0x30] sm:$0xff]
  %v1049 = vld [vmem:[#allocation2 + $0x38] sm:$0xff]
  %v1050 = vld [vmem:[#allocation2 + $0x40] sm:$0xff]
  %v1051 = vld [vmem:[#allocation2 + $0x48] sm:$0xff]
  %v1052 = vld [vmem:[#allocation2 + $0x50] sm:$0xff]
  %v1053 = vld [vmem:[#allocation2 + $0x58] sm:$0xff]
  %v1054 = vld [vmem:[#allocation2 + $0x60] sm:$0xff]
  %v1055 = vld [vmem:[#allocation2 + $0x68] sm:$0xff]
  %v1056 = vld [vmem:[#allocation2 + $0x70] sm:$0xff]
  %v1057 = vld [vmem:[#allocation2 + $0x78] sm:$0xff]
  %v1058 = vsub.f32 %v1042, %v531
  %v1059 = vsub.f32 %v1043, %v533
  %v1060 = vsub.f32 %v1044, %v535
  %v1061 = vsub.f32 %v1045, %v537
  %v1062 = vsub.f32 %v1046, %v539
  %v1063 = vsub.f32 %v1047, %v541
  %v1064 = vsub.f32 %v1048, %v543
  %v1065 = vsub.f32 %v1049, %v545
  %v1066 = vsub.f32 %v1050, %v547
  %v1067 = vsub.f32 %v1051, %v549
  %v1068 = vsub.f32 %v1052, %v551
  %v1069 = vsub.f32 %v1053, %v553
  %v1070 = vsub.f32 %v1054, %v555
  %v1071 = vsub.f32 %v1055, %v557
  %v1072 = vsub.f32 %v1056, %v559
  %v1073 = vsub.f32 %v1057, %v561
  %v1074 = vmul.f32 %v1058, 1.442695
  %v1075 = vpow.pop %v1074
  %v1076 = vmul.f32 %v1059, 1.442695
  %v1077 = vpow.pop %v1076
  %v1078 = vmul.f32 %v1060, 1.442695
  %v1079 = vpow.pop %v1078
  %v1080 = vmul.f32 %v1061, 1.442695
  %v1081 = vpow.pop %v1080
  %v1082 = vmul.f32 %v1062, 1.442695
  %v1083 = vpow.pop %v1082
  %v1084 = vmul.f32 %v1063, 1.442695
  %v1085 = vpow.pop %v1084
  %v1086 = vmul.f32 %v1064, 1.442695
  %v1087 = vpow.pop %v1086
  %v1088 = vmul.f32 %v1065, 1.442695
  %v1089 = vpow.pop %v1088
  %v1090 = vmul.f32 %v1066, 1.442695
  %v1091 = vpow.pop %v1090
  %v1092 = vmul.f32 %v1067, 1.442695
  %v1093 = vpow.pop %v1092
  %v1094 = vmul.f32 %v1068, 1.442695
  %v1095 = vpow.pop %v1094
  %v1096 = vmul.f32 %v1069, 1.442695
  %v1097 = vpow.pop %v1096
  %v1098 = vmul.f32 %v1070, 1.442695
  %v1099 = vpow.pop %v1098
  %v1100 = vmul.f32 %v1071, 1.442695
  %v1101 = vpow.pop %v1100
  %v1102 = vmul.f32 %v1072, 1.442695
  %v1103 = vpow.pop %v1102
  %v1104 = vmul.f32 %v1073, 1.442695
  %v1105 = vpow.pop %v1104
  %v1106 = vsel %vm333, %v1075, 0.0
  %v1107 = vsel %vm334, %v1077, 0.0
  %v1108 = vsel %vm335, %v1079, 0.0
  %v1109 = vsel %vm336, %v1081, 0.0
  %v1110 = vsel %vm337, %v1083, 0.0
  %v1111 = vsel %vm338, %v1085, 0.0
  %v1112 = vsel %vm339, %v1087, 0.0
  %v1113 = vsel %vm340, %v1089, 0.0
  %v1114 = vsel %vm341, %v1091, 0.0
  %v1115 = vsel %vm342, %v1093, 0.0
  %v1116 = vsel %vm343, %v1095, 0.0
  %v1117 = vsel %vm344, %v1097, 0.0
  %v1118 = vsel %vm345, %v1099, 0.0
  %v1119 = vsel %vm346, %v1101, 0.0
  %v1120 = vsel %vm347, %v1103, 0.0
  %v1121 = vsel %vm348, %v1105, 0.0
  %v1122 = vmul.f32 %v1106, %v450
  %v1123 = vmul.f32 %v1107, %v451
  %v1124 = vmul.f32 %v1108, %v452
  %v1125 = vmul.f32 %v1109, %v453
  %v1126 = vmul.f32 %v1110, %v454
  %v1127 = vmul.f32 %v1111, %v455
  %v1128 = vmul.f32 %v1112, %v456
  %v1129 = vmul.f32 %v1113, %v457
  %v1130 = vmul.f32 %v1114, %v458
  %v1131 = vmul.f32 %v1115, %v459
  %v1132 = vmul.f32 %v1116, %v460
  %v1133 = vmul.f32 %v1117, %v461
  %v1134 = vmul.f32 %v1118, %v462
  %v1135 = vmul.f32 %v1119, %v463
  %v1136 = vmul.f32 %v1120, %v464
  %v1137 = vmul.f32 %v1121, %v465
  %v1138 = vsel %vm333, 1, 0
  %v1139 = vsel %vm334, 1, 0
  %v1140 = vsel %vm335, 1, 0
  %v1141 = vsel %vm336, 1, 0
  %v1142 = vsel %vm337, 1, 0
  %v1143 = vsel %vm338, 1, 0
  %v1144 = vsel %vm339, 1, 0
  %v1145 = vsel %vm340, 1, 0
  %v1146 = vsel %vm341, 1, 0
  %v1147 = vsel %vm342, 1, 0
  %v1148 = vsel %vm343, 1, 0
  %v1149 = vsel %vm344, 1, 0
  %v1150 = vsel %vm345, 1, 0
  %v1151 = vsel %vm346, 1, 0
  %v1152 = vsel %vm347, 1, 0
  %v1153 = vsel %vm348, 1, 0
  %v1154 = vcvt.s32.f32 %v1138
  %v1155 = vcvt.s32.f32 %v1139
  %v1156 = vcvt.s32.f32 %v1140
  %v1157 = vcvt.s32.f32 %v1141
  %v1158 = vcvt.s32.f32 %v1142
  %v1159 = vcvt.s32.f32 %v1143
  %v1160 = vcvt.s32.f32 %v1144
  %v1161 = vcvt.s32.f32 %v1145
  %v1162 = vcvt.s32.f32 %v1146
  %v1163 = vcvt.s32.f32 %v1147
  %v1164 = vcvt.s32.f32 %v1148
  %v1165 = vcvt.s32.f32 %v1149
  %v1166 = vcvt.s32.f32 %v1150
  %v1167 = vcvt.s32.f32 %v1151
  %v1168 = vcvt.s32.f32 %v1152
  %v1169 = vcvt.s32.f32 %v1153
  %v1170 = vsub.f32 %v1106, %v1122
  %v1171 = vsub.f32 %v1107, %v1123
  %v1172 = vsub.f32 %v1108, %v1124
  %v1173 = vsub.f32 %v1109, %v1125
  %v1174 = vsub.f32 %v1110, %v1126
  %v1175 = vsub.f32 %v1111, %v1127
  %v1176 = vsub.f32 %v1112, %v1128
  %v1177 = vsub.f32 %v1113, %v1129
  %v1178 = vsub.f32 %v1114, %v1130
  %v1179 = vsub.f32 %v1115, %v1131
  %v1180 = vsub.f32 %v1116, %v1132
  %v1181 = vsub.f32 %v1117, %v1133
  %v1182 = vsub.f32 %v1118, %v1134
  %v1183 = vsub.f32 %v1119, %v1135
  %v1184 = vsub.f32 %v1120, %v1136
  %v1185 = vsub.f32 %v1121, %v1137
  %v1186 = vmul.f32 %v1170, %v1026
  %v1187 = vmul.f32 %v1171, %v1027
  %v1188 = vmul.f32 %v1172, %v1028
  %v1189 = vmul.f32 %v1173, %v1029
  %v1190 = vmul.f32 %v1174, %v1030
  %v1191 = vmul.f32 %v1175, %v1031
  %v1192 = vmul.f32 %v1176, %v1032
  %v1193 = vmul.f32 %v1177, %v1033
  %v1194 = vmul.f32 %v1178, %v1034
  %v1195 = vmul.f32 %v1179, %v1035
  %v1196 = vmul.f32 %v1180, %v1036
  %v1197 = vmul.f32 %v1181, %v1037
  %v1198 = vmul.f32 %v1182, %v1038
  %v1199 = vmul.f32 %v1183, %v1039
  %v1200 = vmul.f32 %v1184, %v1040
  %v1201 = vmul.f32 %v1185, %v1041
  %v1202 = vadd.f32 %v1154, %v1186
  %v1203 = vadd.f32 %v1155, %v1187
  %v1204 = vadd.f32 %v1156, %v1188
  %v1205 = vadd.f32 %v1157, %v1189
  %v1206 = vadd.f32 %v1158, %v1190
  %v1207 = vadd.f32 %v1159, %v1191
  %v1208 = vadd.f32 %v1160, %v1192
  %v1209 = vadd.f32 %v1161, %v1193
  %v1210 = vadd.f32 %v1162, %v1194
  %v1211 = vadd.f32 %v1163, %v1195
  %v1212 = vadd.f32 %v1164, %v1196
  %v1213 = vadd.f32 %v1165, %v1197
  %v1214 = vadd.f32 %v1166, %v1198
  %v1215 = vadd.f32 %v1167, %v1199
  %v1216 = vadd.f32 %v1168, %v1200
  %v1217 = vadd.f32 %v1169, %v1201
  %v1218 = vmul.f32 %v1122, %v914
  %v1219 = vmul.f32 %v1123, %v915
  %v1220 = vmul.f32 %v1124, %v916
  %v1221 = vmul.f32 %v1125, %v917
  %v1222 = vmul.f32 %v1126, %v918
  %v1223 = vmul.f32 %v1127, %v919
  %v1224 = vmul.f32 %v1128, %v920
  %v1225 = vmul.f32 %v1129, %v921
  %v1226 = vmul.f32 %v1130, %v922
  %v1227 = vmul.f32 %v1131, %v923
  %v1228 = vmul.f32 %v1132, %v924
  %v1229 = vmul.f32 %v1133, %v925
  %v1230 = vmul.f32 %v1134, %v926
  %v1231 = vmul.f32 %v1135, %v927
  %v1232 = vmul.f32 %v1136, %v928
  %v1233 = vmul.f32 %v1137, %v929
  %v1234 = vsub.f32 %v1202, %v1218
  %v1235 = vsub.f32 %v1203, %v1219
  %v1236 = vsub.f32 %v1204, %v1220
  %v1237 = vsub.f32 %v1205, %v1221
  %v1238 = vsub.f32 %v1206, %v1222
  %v1239 = vsub.f32 %v1207, %v1223
  %v1240 = vsub.f32 %v1208, %v1224
  %v1241 = vsub.f32 %v1209, %v1225
  %v1242 = vsub.f32 %v1210, %v1226
  %v1243 = vsub.f32 %v1211, %v1227
  %v1244 = vsub.f32 %v1212, %v1228
  %v1245 = vsub.f32 %v1213, %v1229
  %v1246 = vsub.f32 %v1214, %v1230
  %v1247 = vsub.f32 %v1215, %v1231
  %v1248 = vsub.f32 %v1216, %v1232
  %v1249 = vsub.f32 %v1217, %v1233
  %v1250 = vmul.f32 %v1234, %v450
  %v1251 = vmul.f32 %v1235, %v451
  %v1252 = vmul.f32 %v1236, %v452
  %v1253 = vmul.f32 %v1237, %v453
  %v1254 = vmul.f32 %v1238, %v454
  %v1255 = vmul.f32 %v1239, %v455
  %v1256 = vmul.f32 %v1240, %v456
  %v1257 = vmul.f32 %v1241, %v457
  %v1258 = vmul.f32 %v1242, %v458
  %v1259 = vmul.f32 %v1243, %v459
  %v1260 = vmul.f32 %v1244, %v460
  %v1261 = vmul.f32 %v1245, %v461
  %v1262 = vmul.f32 %v1246, %v462
  %v1263 = vmul.f32 %v1247, %v463
  %v1264 = vmul.f32 %v1248, %v464
  %v1265 = vmul.f32 %v1249, %v465
  %v1266 = vsub.f32 %v1042, %v483
  %v1267 = vsub.f32 %v1043, %v485
  %v1268 = vsub.f32 %v1044, %v487
  %v1269 = vsub.f32 %v1045, %v489
  %v1270 = vsub.f32 %v1046, %v491
  %v1271 = vsub.f32 %v1047, %v493
  %v1272 = vsub.f32 %v1048, %v495
  %v1273 = vsub.f32 %v1049, %v497
  %v1274 = vsub.f32 %v1050, %v499
  %v1275 = vsub.f32 %v1051, %v501
  %v1276 = vsub.f32 %v1052, %v503
  %v1277 = vsub.f32 %v1053, %v505
  %v1278 = vsub.f32 %v1054, %v507
  %v1279 = vsub.f32 %v1055, %v509
  %v1280 = vsub.f32 %v1056, %v511
  %v1281 = vsub.f32 %v1057, %v513
  %v1282 = vmul.f32 %v1266, 14.285714
  %v1283 = vmul.f32 %v1267, 14.285714
  %v1284 = vmul.f32 %v1268, 14.285714
  %v1285 = vmul.f32 %v1269, 14.285714
  %v1286 = vmul.f32 %v1270, 14.285714
  %v1287 = vmul.f32 %v1271, 14.285714
  %v1288 = vmul.f32 %v1272, 14.285714
  %v1289 = vmul.f32 %v1273, 14.285714
  %v1290 = vmul.f32 %v1274, 14.285714
  %v1291 = vmul.f32 %v1275, 14.285714
  %v1292 = vmul.f32 %v1276, 14.285714
  %v1293 = vmul.f32 %v1277, 14.285714
  %v1294 = vmul.f32 %v1278, 14.285714
  %v1295 = vmul.f32 %v1279, 14.285714
  %v1296 = vmul.f32 %v1280, 14.285714
  %v1297 = vmul.f32 %v1281, 14.285714
  %v1298 = vmul.f32 %v1282, 1.442695
  %v1299 = vpow.pop %v1298
  %v1300 = vmul.f32 %v1283, 1.442695
  %v1301 = vpow.pop %v1300
  %v1302 = vmul.f32 %v1284, 1.442695
  %v1303 = vpow.pop %v1302
  %v1304 = vmul.f32 %v1285, 1.442695
  %v1305 = vpow.pop %v1304
  %v1306 = vmul.f32 %v1286, 1.442695
  %v1307 = vpow.pop %v1306
  %v1308 = vmul.f32 %v1287, 1.442695
  %v1309 = vpow.pop %v1308
  %v1310 = vmul.f32 %v1288, 1.442695
  %v1311 = vpow.pop %v1310
  %v1312 = vmul.f32 %v1289, 1.442695
  %v1313 = vpow.pop %v1312
  %v1314 = vmul.f32 %v1290, 1.442695
  %v1315 = vpow.pop %v1314
  %v1316 = vmul.f32 %v1291, 1.442695
  %v1317 = vpow.pop %v1316
  %v1318 = vmul.f32 %v1292, 1.442695
  %v1319 = vpow.pop %v1318
  %v1320 = vmul.f32 %v1293, 1.442695
  %v1321 = vpow.pop %v1320
  %v1322 = vmul.f32 %v1294, 1.442695
  %v1323 = vpow.pop %v1322
  %v1324 = vmul.f32 %v1295, 1.442695
  %v1325 = vpow.pop %v1324
  %v1326 = vmul.f32 %v1296, 1.442695
  %v1327 = vpow.pop %v1326
  %v1328 = vmul.f32 %v1297, 1.442695
  %v1329 = vpow.pop %v1328
  %v1330 = vmul.f32 %v1299, %v1234
  %v1331 = vmul.f32 %v1301, %v1235
  %v1332 = vmul.f32 %v1303, %v1236
  %v1333 = vmul.f32 %v1305, %v1237
  %v1334 = vmul.f32 %v1307, %v1238
  %v1335 = vmul.f32 %v1309, %v1239
  %v1336 = vmul.f32 %v1311, %v1240
  %v1337 = vmul.f32 %v1313, %v1241
  %v1338 = vmul.f32 %v1315, %v1242
  %v1339 = vmul.f32 %v1317, %v1243
  %v1340 = vmul.f32 %v1319, %v1244
  %v1341 = vmul.f32 %v1321, %v1245
  %v1342 = vmul.f32 %v1323, %v1246
  %v1343 = vmul.f32 %v1325, %v1247
  %v1344 = vmul.f32 %v1327, %v1248
  %v1345 = vmul.f32 %v1329, %v1249
  %1346 = vadd.xlane.f32.xlu0 %v1330
  %v1347 = vpop.xlane.xlu0 %1346
  %1348 = vadd.xlane.f32.xlu0 %v1331
  %v1349 = vpop.xlane.xlu0 %1348
  %1350 = vadd.xlane.f32.xlu0 %v1332
  %v1351 = vpop.xlane.xlu0 %1350
  %1352 = vadd.xlane.f32.xlu0 %v1333
  %v1353 = vpop.xlane.xlu0 %1352
  %1354 = vadd.xlane.f32.xlu0 %v1334
  %v1355 = vpop.xlane.xlu0 %1354
  %1356 = vadd.xlane.f32.xlu0 %v1335
  %v1357 = vpop.xlane.xlu0 %1356
  %1358 = vadd.xlane.f32.xlu0 %v1336
  %v1359 = vpop.xlane.xlu0 %1358
  %1360 = vadd.xlane.f32.xlu0 %v1337
  %v1361 = vpop.xlane.xlu0 %1360
  %1362 = vadd.xlane.f32.xlu0 %v1338
  %v1363 = vpop.xlane.xlu0 %1362
  %1364 = vadd.xlane.f32.xlu0 %v1339
  %v1365 = vpop.xlane.xlu0 %1364
  %1366 = vadd.xlane.f32.xlu0 %v1340
  %v1367 = vpop.xlane.xlu0 %1366
  %1368 = vadd.xlane.f32.xlu0 %v1341
  %v1369 = vpop.xlane.xlu0 %1368
  %1370 = vadd.xlane.f32.xlu0 %v1342
  %v1371 = vpop.xlane.xlu0 %1370
  %1372 = vadd.xlane.f32.xlu0 %v1343
  %v1373 = vpop.xlane.xlu0 %1372
  %1374 = vadd.xlane.f32.xlu0 %v1344
  %v1375 = vpop.xlane.xlu0 %1374
  %1376 = vadd.xlane.f32.xlu0 %v1345
  %v1377 = vpop.xlane.xlu0 %1376
  %v1378 = vadd.f32 %v1347, 0.0
  %v1379 = vadd.f32 %v1349, 0.0
  %v1380 = vadd.f32 %v1351, 0.0
  %v1381 = vadd.f32 %v1353, 0.0
  %v1382 = vadd.f32 %v1355, 0.0
  %v1383 = vadd.f32 %v1357, 0.0
  %v1384 = vadd.f32 %v1359, 0.0
  %v1385 = vadd.f32 %v1361, 0.0
  %v1386 = vadd.f32 %v1363, 0.0
  %v1387 = vadd.f32 %v1365, 0.0
  %v1388 = vadd.f32 %v1367, 0.0
  %v1389 = vadd.f32 %v1369, 0.0
  %v1390 = vadd.f32 %v1371, 0.0
  %v1391 = vadd.f32 %v1373, 0.0
  %v1392 = vadd.f32 %v1375, 0.0
  %v1393 = vadd.f32 %v1377, 0.0
  %v1394 = vmul.f32 %v1282, %v1250
  %v1395 = vmul.f32 %v1283, %v1251
  %v1396 = vmul.f32 %v1284, %v1252
  %v1397 = vmul.f32 %v1285, %v1253
  %v1398 = vmul.f32 %v1286, %v1254
  %v1399 = vmul.f32 %v1287, %v1255
  %v1400 = vmul.f32 %v1288, %v1256
  %v1401 = vmul.f32 %v1289, %v1257
  %v1402 = vmul.f32 %v1290, %v1258
  %v1403 = vmul.f32 %v1291, %v1259
  %v1404 = vmul.f32 %v1292, %v1260
  %v1405 = vmul.f32 %v1293, %v1261
  %v1406 = vmul.f32 %v1294, %v1262
  %v1407 = vmul.f32 %v1295, %v1263
  %v1408 = vmul.f32 %v1296, %v1264
  %v1409 = vmul.f32 %v1297, %v1265
  %1410 = vadd.xlane.f32.xlu0 %v1394
  %v1411 = vpop.xlane.xlu0 %1410
  %1412 = vadd.xlane.f32.xlu0 %v1395
  %v1413 = vpop.xlane.xlu0 %1412
  %1414 = vadd.xlane.f32.xlu0 %v1396
  %v1415 = vpop.xlane.xlu0 %1414
  %1416 = vadd.xlane.f32.xlu0 %v1397
  %v1417 = vpop.xlane.xlu0 %1416
  %1418 = vadd.xlane.f32.xlu0 %v1398
  %v1419 = vpop.xlane.xlu0 %1418
  %1420 = vadd.xlane.f32.xlu0 %v1399
  %v1421 = vpop.xlane.xlu0 %1420
  %1422 = vadd.xlane.f32.xlu0 %v1400
  %v1423 = vpop.xlane.xlu0 %1422
  %1424 = vadd.xlane.f32.xlu0 %v1401
  %v1425 = vpop.xlane.xlu0 %1424
  %1426 = vadd.xlane.f32.xlu0 %v1402
  %v1427 = vpop.xlane.xlu0 %1426
  %1428 = vadd.xlane.f32.xlu0 %v1403
  %v1429 = vpop.xlane.xlu0 %1428
  %1430 = vadd.xlane.f32.xlu0 %v1404
  %v1431 = vpop.xlane.xlu0 %1430
  %1432 = vadd.xlane.f32.xlu0 %v1405
  %v1433 = vpop.xlane.xlu0 %1432
  %1434 = vadd.xlane.f32.xlu0 %v1406
  %v1435 = vpop.xlane.xlu0 %1434
  %1436 = vadd.xlane.f32.xlu0 %v1407
  %v1437 = vpop.xlane.xlu0 %1436
  %1438 = vadd.xlane.f32.xlu0 %v1408
  %v1439 = vpop.xlane.xlu0 %1438
  %1440 = vadd.xlane.f32.xlu0 %v1409
  %v1441 = vpop.xlane.xlu0 %1440
  %v1442 = vadd.f32 %v1411, 0.0
  %v1443 = vadd.f32 %v1413, 0.0
  %v1444 = vadd.f32 %v1415, 0.0
  %v1445 = vadd.f32 %v1417, 0.0
  %v1446 = vadd.f32 %v1419, 0.0
  %v1447 = vadd.f32 %v1421, 0.0
  %v1448 = vadd.f32 %v1423, 0.0
  %v1449 = vadd.f32 %v1425, 0.0
  %v1450 = vadd.f32 %v1427, 0.0
  %v1451 = vadd.f32 %v1429, 0.0
  %v1452 = vadd.f32 %v1431, 0.0
  %v1453 = vadd.f32 %v1433, 0.0
  %v1454 = vadd.f32 %v1435, 0.0
  %v1455 = vadd.f32 %v1437, 0.0
  %v1456 = vadd.f32 %v1439, 0.0
  %v1457 = vadd.f32 %v1441, 0.0
  %1458 = vadd.xlane.f32.xlu0 %v1250
  %v1459 = vpop.xlane.xlu0 %1458
  %1460 = vadd.xlane.f32.xlu0 %v1251
  %v1461 = vpop.xlane.xlu0 %1460
  %1462 = vadd.xlane.f32.xlu0 %v1252
  %v1463 = vpop.xlane.xlu0 %1462
  %1464 = vadd.xlane.f32.xlu0 %v1253
  %v1465 = vpop.xlane.xlu0 %1464
  %1466 = vadd.xlane.f32.xlu0 %v1254
  %v1467 = vpop.xlane.xlu0 %1466
  %1468 = vadd.xlane.f32.xlu0 %v1255
  %v1469 = vpop.xlane.xlu0 %1468
  %1470 = vadd.xlane.f32.xlu0 %v1256
  %v1471 = vpop.xlane.xlu0 %1470
  %1472 = vadd.xlane.f32.xlu0 %v1257
  %v1473 = vpop.xlane.xlu0 %1472
  %1474 = vadd.xlane.f32.xlu0 %v1258
  %v1475 = vpop.xlane.xlu0 %1474
  %1476 = vadd.xlane.f32.xlu0 %v1259
  %v1477 = vpop.xlane.xlu0 %1476
  %1478 = vadd.xlane.f32.xlu0 %v1260
  %v1479 = vpop.xlane.xlu0 %1478
  %1480 = vadd.xlane.f32.xlu0 %v1261
  %v1481 = vpop.xlane.xlu0 %1480
  %1482 = vadd.xlane.f32.xlu0 %v1262
  %v1483 = vpop.xlane.xlu0 %1482
  %1484 = vadd.xlane.f32.xlu0 %v1263
  %v1485 = vpop.xlane.xlu0 %1484
  %1486 = vadd.xlane.f32.xlu0 %v1264
  %v1487 = vpop.xlane.xlu0 %1486
  %1488 = vadd.xlane.f32.xlu0 %v1265
  %v1489 = vpop.xlane.xlu0 %1488
  %v1490 = vadd.f32 %v1459, 0.0
  %v1491 = vadd.f32 %v1461, 0.0
  %v1492 = vadd.f32 %v1463, 0.0
  %v1493 = vadd.f32 %v1465, 0.0
  %v1494 = vadd.f32 %v1467, 0.0
  %v1495 = vadd.f32 %v1469, 0.0
  %v1496 = vadd.f32 %v1471, 0.0
  %v1497 = vadd.f32 %v1473, 0.0
  %v1498 = vadd.f32 %v1475, 0.0
  %v1499 = vadd.f32 %v1477, 0.0
  %v1500 = vadd.f32 %v1479, 0.0
  %v1501 = vadd.f32 %v1481, 0.0
  %v1502 = vadd.f32 %v1483, 0.0
  %v1503 = vadd.f32 %v1485, 0.0
  %v1504 = vadd.f32 %v1487, 0.0
  %v1505 = vadd.f32 %v1489, 0.0
  %v1506 = vlog2.pop %v1378
  %v1507 = vmul.f32 %v1506, 0.6931472
  %v1508 = vlog2.pop %v1379
  %v1509 = vmul.f32 %v1508, 0.6931472
  %v1510 = vlog2.pop %v1380
  %v1511 = vmul.f32 %v1510, 0.6931472
  %v1512 = vlog2.pop %v1381
  %v1513 = vmul.f32 %v1512, 0.6931472
  %v1514 = vlog2.pop %v1382
  %v1515 = vmul.f32 %v1514, 0.6931472
  %v1516 = vlog2.pop %v1383
  %v1517 = vmul.f32 %v1516, 0.6931472
  %v1518 = vlog2.pop %v1384
  %v1519 = vmul.f32 %v1518, 0.6931472
  %v1520 = vlog2.pop %v1385
  %v1521 = vmul.f32 %v1520, 0.6931472
  %v1522 = vlog2.pop %v1386
  %v1523 = vmul.f32 %v1522, 0.6931472
  %v1524 = vlog2.pop %v1387
  %v1525 = vmul.f32 %v1524, 0.6931472
  %v1526 = vlog2.pop %v1388
  %v1527 = vmul.f32 %v1526, 0.6931472
  %v1528 = vlog2.pop %v1389
  %v1529 = vmul.f32 %v1528, 0.6931472
  %v1530 = vlog2.pop %v1390
  %v1531 = vmul.f32 %v1530, 0.6931472
  %v1532 = vlog2.pop %v1391
  %v1533 = vmul.f32 %v1532, 0.6931472
  %v1534 = vlog2.pop %v1392
  %v1535 = vmul.f32 %v1534, 0.6931472
  %v1536 = vlog2.pop %v1393
  %v1537 = vmul.f32 %v1536, 0.6931472
  %v1538 = vmul.f32 %v1507, %v1490
  %v1539 = vmul.f32 %v1509, %v1491
  %v1540 = vmul.f32 %v1511, %v1492
  %v1541 = vmul.f32 %v1513, %v1493
  %v1542 = vmul.f32 %v1515, %v1494
  %v1543 = vmul.f32 %v1517, %v1495
  %v1544 = vmul.f32 %v1519, %v1496
  %v1545 = vmul.f32 %v1521, %v1497
  %v1546 = vmul.f32 %v1523, %v1498
  %v1547 = vmul.f32 %v1525, %v1499
  %v1548 = vmul.f32 %v1527, %v1500
  %v1549 = vmul.f32 %v1529, %v1501
  %v1550 = vmul.f32 %v1531, %v1502
  %v1551 = vmul.f32 %v1533, %v1503
  %v1552 = vmul.f32 %v1535, %v1504
  %v1553 = vmul.f32 %v1537, %v1505
  %v1554 = vsub.f32 %v1442, %v1538
  %v1555 = vsub.f32 %v1443, %v1539
  %v1556 = vsub.f32 %v1444, %v1540
  %v1557 = vsub.f32 %v1445, %v1541
  %v1558 = vsub.f32 %v1446, %v1542
  %v1559 = vsub.f32 %v1447, %v1543
  %v1560 = vsub.f32 %v1448, %v1544
  %v1561 = vsub.f32 %v1449, %v1545
  %v1562 = vsub.f32 %v1450, %v1546
  %v1563 = vsub.f32 %v1451, %v1547
  %v1564 = vsub.f32 %v1452, %v1548
  %v1565 = vsub.f32 %v1453, %v1549
  %v1566 = vsub.f32 %v1454, %v1550
  %v1567 = vsub.f32 %v1455, %v1551
  %v1568 = vsub.f32 %v1456, %v1552
  %v1569 = vsub.f32 %v1457, %v1553
  %v1570 = vsub.f32 0.0, %v1554
  %v1571 = vsub.f32 0.0, %v1555
  %v1572 = vsub.f32 0.0, %v1556
  %v1573 = vsub.f32 0.0, %v1557
  %v1574 = vsub.f32 0.0, %v1558
  %v1575 = vsub.f32 0.0, %v1559
  %v1576 = vsub.f32 0.0, %v1560
  %v1577 = vsub.f32 0.0, %v1561
  %v1578 = vsub.f32 0.0, %v1562
  %v1579 = vsub.f32 0.0, %v1563
  %v1580 = vsub.f32 0.0, %v1564
  %v1581 = vsub.f32 0.0, %v1565
  %v1582 = vsub.f32 0.0, %v1566
  %v1583 = vsub.f32 0.0, %v1567
  %v1584 = vsub.f32 0.0, %v1568
  %v1585 = vsub.f32 0.0, %v1569
  %v1586 = vrcp.pop %v818
  %v1587 = vmul.f32 %v1570, %v1586
  %v1588 = vrcp.pop %v819
  %v1589 = vmul.f32 %v1571, %v1588
  %v1590 = vrcp.pop %v820
  %v1591 = vmul.f32 %v1572, %v1590
  %v1592 = vrcp.pop %v821
  %v1593 = vmul.f32 %v1573, %v1592
  %v1594 = vrcp.pop %v822
  %v1595 = vmul.f32 %v1574, %v1594
  %v1596 = vrcp.pop %v823
  %v1597 = vmul.f32 %v1575, %v1596
  %v1598 = vrcp.pop %v824
  %v1599 = vmul.f32 %v1576, %v1598
  %v1600 = vrcp.pop %v825
  %v1601 = vmul.f32 %v1577, %v1600
  %v1602 = vrcp.pop %v826
  %v1603 = vmul.f32 %v1578, %v1602
  %v1604 = vrcp.pop %v827
  %v1605 = vmul.f32 %v1579, %v1604
  %v1606 = vrcp.pop %v828
  %v1607 = vmul.f32 %v1580, %v1606
  %v1608 = vrcp.pop %v829
  %v1609 = vmul.f32 %v1581, %v1608
  %v1610 = vrcp.pop %v830
  %v1611 = vmul.f32 %v1582, %v1610
  %v1612 = vrcp.pop %v831
  %v1613 = vmul.f32 %v1583, %v1612
  %v1614 = vrcp.pop %v832
  %v1615 = vmul.f32 %v1584, %v1614
  %v1616 = vrcp.pop %v833
  %v1617 = vmul.f32 %v1585, %v1616
  %vm1618 = vcmask 7168
  %1619 = vst.msk [vmem:[%s4] sm:$0xff] %vm1618, %v1587
  %1620 = vst.msk [vmem:[%s4 + $0x8] sm:$0xff] %vm1618, %v1589
  %1621 = vst.msk [vmem:[%s4 + $0x10] sm:$0xff] %vm1618, %v1591
  %1622 = vst.msk [vmem:[%s4 + $0x18] sm:$0xff] %vm1618, %v1593
  %1623 = vst.msk [vmem:[%s4 + $0x20] sm:$0xff] %vm1618, %v1595
  %1624 = vst.msk [vmem:[%s4 + $0x28] sm:$0xff] %vm1618, %v1597
  %1625 = vst.msk [vmem:[%s4 + $0x30] sm:$0xff] %vm1618, %v1599
  %1626 = vst.msk [vmem:[%s4 + $0x38] sm:$0xff] %vm1618, %v1601
  %1627 = vst.msk [vmem:[%s4 + $0x40] sm:$0xff] %vm1618, %v1603
  %1628 = vst.msk [vmem:[%s4 + $0x48] sm:$0xff] %vm1618, %v1605
  %1629 = vst.msk [vmem:[%s4 + $0x50] sm:$0xff] %vm1618, %v1607
  %1630 = vst.msk [vmem:[%s4 + $0x58] sm:$0xff] %vm1618, %v1609
  %1631 = vst.msk [vmem:[%s4 + $0x60] sm:$0xff] %vm1618, %v1611
  %1632 = vst.msk [vmem:[%s4 + $0x68] sm:$0xff] %vm1618, %v1613
  %1633 = vst.msk [vmem:[%s4 + $0x70] sm:$0xff] %vm1618, %v1615
  %1634 = vst.msk [vmem:[%s4 + $0x78] sm:$0xff] %vm1618, %v1617
  // Predicated region
  $region18: #{tpu_custom_call.1} parent=0 // pred_check
    _
  $region19: #{tpu_custom_call.1} parent=0 // pred_check_branch
    %1636 = sbr.rel (0) target = $region21
  $region20: #{tpu_custom_call.1} parent=0 // pred_region
    _
  $region21: #{tpu_custom_call.1} parent=0 // pred_fallthru
    _
  // Predicated region
  $region22: #{tpu_custom_call.1} parent=0 // pred_check
    _
  $region23: #{tpu_custom_call.1} parent=0 // pred_check_branch
    %1638 = sbr.rel (0) target = $region25
  $region24: #{tpu_custom_call.1} parent=0 // pred_region
    _
  $region25: #{tpu_custom_call.1} parent=0 // pred_fallthru
    _

</llo_original>
